<compile_context>
chip_gen: v7x
topology: tpu7x:2x2x1
jax: 0.10.0
libtpu: 0.0.40
codegen_flags: <defaults>
</compile_context>

<pallas_src>
import functools

import jax
import jax.numpy as jnp
from jax import lax
from jax.experimental import pallas as pl
from jax.experimental.pallas import tpu as pltpu


def _tile(dim, pref):
    """Pick a tile size: `pref` if it divides `dim`, else the full dimension."""
    return pref if (dim >= pref and dim % pref == 0) else dim


# ----------------------------------------------------------------------------
# Kernel 1: tiled GEMM + fused bias (used for to_qkv and to_out projections)
# ----------------------------------------------------------------------------
def _matmul_bias_kernel(a_ref, b_ref, bias_ref, o_ref, acc_ref):
    @pl.when(pl.program_id(2) == 0)
    def _():
        acc_ref[...] = jnp.zeros_like(acc_ref)

    acc_ref[...] += jnp.dot(a_ref[...], b_ref[...],
                            preferred_element_type=jnp.float32)

    @pl.when(pl.program_id(2) == pl.num_programs(2) - 1)
    def _():
        o_ref[...] = (acc_ref[...] + bias_ref[...]).astype(o_ref.dtype)


def matmul_bias(a, w, bias, *, tm=128, tn=128, tk=256, out_dtype=jnp.float32):
    """a:(M,K) @ w:(K,N) + bias:(1,N) -> (M,N), f32 accumulation on the MXU."""
    M, K = a.shape
    Kw, N = w.shape
    assert K == Kw and bias.shape == (1, N)
    tm, tn, tk = _tile(M, tm), _tile(N, tn), _tile(K, tk)
    grid = (M // tm, N // tn, K // tk)
    return pl.pallas_call(
        _matmul_bias_kernel,
        out_shape=jax.ShapeDtypeStruct((M, N), out_dtype),
        grid_spec=pltpu.PrefetchScalarGridSpec(
            num_scalar_prefetch=0,
            grid=grid,
            in_specs=[
                pl.BlockSpec((tm, tk), lambda i, j, k: (i, k)),
                pl.BlockSpec((tk, tn), lambda i, j, k: (k, j)),
                pl.BlockSpec((1, tn), lambda i, j, k: (0, j)),
            ],
            out_specs=pl.BlockSpec((tm, tn), lambda i, j, k: (i, j)),
            scratch_shapes=[pltpu.VMEM((tm, tn), jnp.float32)],
        ),
        compiler_params=pltpu.CompilerParams(
            dimension_semantics=("parallel", "parallel", "arbitrary")),
    )(a, w, bias)


# ----------------------------------------------------------------------------
# Kernel 2: flash-attention (online softmax) over (batch*heads, seq, dim_head)
# ----------------------------------------------------------------------------
def _flash_attn_kernel(q_ref, k_ref, v_ref, o_ref, m_sc, l_sc, acc_sc, *, scale):
    ki = pl.program_id(2)

    @pl.when(ki == 0)
    def _():
        m_sc[...] = jnp.full_like(m_sc, -jnp.inf)
        l_sc[...] = jnp.zeros_like(l_sc)
        acc_sc[...] = jnp.zeros_like(acc_sc)

    q = q_ref[0]                                             # (tq, D) bf16
    k = k_ref[0]                                             # (tk, D) bf16
    v = v_ref[0]                                             # (tk, D) bf16

    # s[i,j] = scale * <q_i, k_j>   (MXU, f32 accumulation)
    s = lax.dot_general(q, k, (((1,), (1,)), ((), ())),
                        preferred_element_type=jnp.float32) * scale   # (tq, tk)

    m_prev = m_sc[...]
    m_new = jnp.maximum(m_prev, s.max(axis=-1, keepdims=True))
    alpha = jnp.exp(m_prev - m_new)
    p = jnp.exp(s - m_new)
    l_sc[...] = alpha * l_sc[...] + p.sum(axis=-1, keepdims=True)
    acc_sc[...] = alpha * acc_sc[...] + jnp.dot(
        p.astype(v.dtype), v, preferred_element_type=jnp.float32)
    m_sc[...] = m_new

    @pl.when(ki == pl.num_programs(2) - 1)
    def _():
        inv_l = pl.reciprocal(l_sc[...], approx=True)
        o_ref[0] = (acc_sc[...] * inv_l).astype(o_ref.dtype)


def flash_attention(q, k, v, *, scale, tq=128, tkv=128, out_dtype=jnp.float32):
    """q,k,v: (BH, N, D) -> softmax(q k^T * scale) v : (BH, N, D)."""
    BH, Nq, D = q.shape
    _, Nk, _ = k.shape
    tq, tkv = _tile(Nq, tq), _tile(Nk, tkv)
    kern = functools.partial(_flash_attn_kernel, scale=scale)
    return pl.pallas_call(
        kern,
        out_shape=jax.ShapeDtypeStruct((BH, Nq, D), out_dtype),
        grid_spec=pltpu.PrefetchScalarGridSpec(
            num_scalar_prefetch=0,
            grid=(BH, Nq // tq, Nk // tkv),
            in_specs=[
                pl.BlockSpec((1, tq, D), lambda b, qi, ki: (b, qi, 0)),
                pl.BlockSpec((1, tkv, D), lambda b, qi, ki: (b, ki, 0)),
                pl.BlockSpec((1, tkv, D), lambda b, qi, ki: (b, ki, 0)),
            ],
            out_specs=pl.BlockSpec((1, tq, D), lambda b, qi, ki: (b, qi, 0)),
            scratch_shapes=[
                pltpu.VMEM((tq, 1), jnp.float32),   # running max m_i
                pltpu.VMEM((tq, 1), jnp.float32),   # running denom l_i
                pltpu.VMEM((tq, D), jnp.float32),   # output accumulator
            ],
        ),
        compiler_params=pltpu.CompilerParams(
            dimension_semantics=("parallel", "parallel", "arbitrary")),
    )(q, k, v)


# ----------------------------------------------------------------------------
# Full forward (matches Attention.forward semantics)
# ----------------------------------------------------------------------------
def attention_forward(x, params, *, heads=8, dim_head=64,
                      compute_dtype=jnp.bfloat16):
    B, N, dim = x.shape
    inner = heads * dim_head
    scale = dim_head ** (-0.5)
    project_out = not (heads == 1 and dim_head == dim)
    cd = compute_dtype

    # params['w_qkv'] : (dim, 3*inner)  == to_qkv.weight.T  (bias=False)
    # params['w_out'] : (inner, dim)    == to_out[0].weight.T
    # params['b_out'] : (dim,)          == to_out[0].bias
    w_qkv = params["w_qkv"].astype(cd)
    w_out = params["w_out"].astype(cd)
    b_out = params["b_out"].astype(jnp.float32)

    # --- to_qkv projection (no bias) -------------------------------------
    x2 = x.reshape(B * N, dim).astype(cd)
    zero_bias = jnp.zeros((1, 3 * inner), jnp.float32)
    qkv = matmul_bias(x2, w_qkv, zero_bias)                  # (B*N, 3*inner) f32

    # chunk(3) + rearrange 'b n (h d) -> b h n d'
    qkv = qkv.reshape(B, N, 3, heads, dim_head)
    q = jnp.transpose(qkv[:, :, 0], (0, 2, 1, 3)).reshape(B * heads, N, dim_head)
    k = jnp.transpose(qkv[:, :, 1], (0, 2, 1, 3)).reshape(B * heads, N, dim_head)
    v = jnp.transpose(qkv[:, :, 2], (0, 2, 1, 3)).reshape(B * heads, N, dim_head)

    # --- attention core ----------------------------------------------------
    o = flash_attention(q.astype(cd), k.astype(cd), v.astype(cd),
                        scale=scale)                         # (B*H, N, D) f32

    # rearrange 'b h n d -> b n (h d)'
    o = o.reshape(B, heads, N, dim_head)
    o = jnp.transpose(o, (0, 2, 1, 3)).reshape(B * N, inner)

    # --- to_out projection (Linear + Dropout(p=0.0) -> identity) ----------
    if project_out:
        out = matmul_bias(o.astype(cd), w_out, b_out.reshape(1, dim))
    else:
        out = o
    return out.reshape(B, N, dim)


# ----------------------------------------------------------------------------
# Pure-JAX reference (same compute precision) for a sanity check
# ----------------------------------------------------------------------------
def attention_reference(x, params, *, heads=8, dim_head=64,
                        compute_dtype=jnp.bfloat16):
    B, N, dim = x.shape
    inner = heads * dim_head
    scale = dim_head ** (-0.5)
    cd = compute_dtype
    qkv = jnp.dot(x.reshape(B * N, dim).astype(cd), params["w_qkv"].astype(cd),
                  preferred_element_type=jnp.float32)
    qkv = qkv.reshape(B, N, 3, heads, dim_head)
    q = jnp.transpose(qkv[:, :, 0], (0, 2, 1, 3))
    k = jnp.transpose(qkv[:, :, 1], (0, 2, 1, 3))
    v = jnp.transpose(qkv[:, :, 2], (0, 2, 1, 3))
    dots = jnp.einsum("bhid,bhjd->bhij", q.astype(cd), k.astype(cd),
                      preferred_element_type=jnp.float32) * scale
    attn = jax.nn.softmax(dots, axis=-1)
    o = jnp.einsum("bhij,bhjd->bhid", attn.astype(cd), v.astype(cd),
                   preferred_element_type=jnp.float32)
    o = jnp.transpose(o, (0, 2, 1, 3)).reshape(B * N, inner)
    out = jnp.dot(o.astype(cd), params["w_out"].astype(cd),
                  preferred_element_type=jnp.float32) + params["b_out"]
    return out.reshape(B, N, dim)


# ----------------------------------------------------------------------------
# Deterministic synthetic parameters + smoke test
# ----------------------------------------------------------------------------
def init_params(key, dim, heads, dim_head):
    inner = heads * dim_head
    k1, k2, k3 = jax.random.split(key, 3)
    return {
        "w_qkv": jax.random.normal(k1, (dim, 3 * inner), jnp.float32) * dim ** -0.5,
        "w_out": jax.random.normal(k2, (inner, dim), jnp.float32) * inner ** -0.5,
        "b_out": 0.01 * jax.random.normal(k3, (dim,), jnp.float32),
    }


if __name__ == "__main__":
    B, N, DIM = 2, 128, 64          # batch, sequence length, model dim
    HEADS, DIM_HEAD = 8, 64         # module defaults

    key = jax.random.PRNGKey(0)
    kx, kp = jax.random.split(key)
    x = jax.random.normal(kx, (B, N, DIM), jnp.float32)
    params = init_params(kp, DIM, HEADS, DIM_HEAD)

    fwd = jax.jit(functools.partial(attention_forward, heads=HEADS, dim_head=DIM_HEAD))
    out = fwd(x, params)
    out = jax.block_until_ready(out)

    assert out.shape == (B, N, DIM), out.shape
    assert bool(jnp.all(jnp.isfinite(out)))

    ref = attention_reference(x, params, heads=HEADS, dim_head=DIM_HEAD)
    assert bool(jnp.allclose(out, ref, atol=1e-1, rtol=1e-1)), float(
        jnp.max(jnp.abs(out - ref)))

    print("KERNEL_OK")
</pallas_src>

<mosaic_0001>
module attributes {stable_mosaic.version = 11 : i64} {
  func.func @_matmul_bias_kernel(%arg0: i32, %arg1: i32, %arg2: i32, %arg3: memref<128x64xbf16, #tpu.memory_space<vmem>>, %arg4: memref<64x128xbf16, #tpu.memory_space<vmem>>, %arg5: memref<1x128xf32, #tpu.memory_space<vmem>>, %arg6: memref<128x128xf32, #tpu.memory_space<vmem>>, %arg7: memref<128x128xf32, #tpu.memory_space<vmem>>) attributes {dimension_semantics = [#tpu.dimension_semantics<parallel>, #tpu.dimension_semantics<parallel>, #tpu.dimension_semantics<arbitrary>], iteration_bounds = array<i64: 2, 12, 1>, scalar_prefetch = 0 : i64, scratch_operands = 1 : i64, tpu.core_type = #tpu.core_type<tc>, window_params = [{transform_indices = @transform_0, window_bounds = array<i64: 128, 64>}, {transform_indices = @transform_1, window_bounds = array<i64: 64, 128>}, {transform_indices = @transform_2, window_bounds = array<i64: 1, 128>}, {transform_indices = @transform_3, window_bounds = array<i64: 128, 128>}]} {
    %c0_i32 = arith.constant 0 : i32
    %0 = arith.cmpi eq, %arg2, %c0_i32 : i32
    %1 = arith.extui %0 : i1 to i32
    %c0_i32_0 = arith.constant 0 : i32
    %2 = arith.cmpi ne, %1, %c0_i32_0 : i32
    scf.if %2 {
      %cst_10 = arith.constant 0.000000e+00 : f32
      %12 = vector.broadcast %cst_10 : f32 to vector<128x128xf32>
      %c0_11 = arith.constant 0 : index
      %c0_12 = arith.constant 0 : index
      %13 = vector.load %arg7[%c0_11, %c0_12] : memref<128x128xf32, #tpu.memory_space<vmem>>, vector<128x128xf32>
      tpu.vector_store %arg7[%c0_11, %c0_12], %12 {strides = array<i32>} : memref<128x128xf32, #tpu.memory_space<vmem>>, vector<128x128xf32>,
    } else {
    }
    %c0 = arith.constant 0 : index
    %c0_1 = arith.constant 0 : index
    %3 = vector.load %arg7[%c0, %c0_1] : memref<128x128xf32, #tpu.memory_space<vmem>>, vector<128x128xf32>
    %c0_2 = arith.constant 0 : index
    %c0_3 = arith.constant 0 : index
    %4 = vector.load %arg3[%c0_2, %c0_3] : memref<128x64xbf16, #tpu.memory_space<vmem>>, vector<128x64xbf16>
    %c0_4 = arith.constant 0 : index
    %c0_5 = arith.constant 0 : index
    %5 = vector.load %arg4[%c0_4, %c0_5] : memref<64x128xbf16, #tpu.memory_space<vmem>>, vector<64x128xbf16>
    %cst = arith.constant dense<0.000000e+00> : vector<128x128xf32>
    %6 = tpu.matmul %4, %5, %cst {dimension_numbers = #tpu.dot_dimension_numbers<[1], [0], [0], [1], [0, 0, 1, 1], [], []>} : vector<128x64xbf16>, vector<64x128xbf16>, vector<128x128xf32> -> vector<128x128xf32>
    %7 = arith.addf %3, %6 : vector<128x128xf32>
    %c0_6 = arith.constant 0 : index
    %c0_7 = arith.constant 0 : index
    %8 = vector.load %arg7[%c0_6, %c0_7] : memref<128x128xf32, #tpu.memory_space<vmem>>, vector<128x128xf32>
    tpu.vector_store %arg7[%c0_6, %c0_7], %7 {strides = array<i32>} : memref<128x128xf32, #tpu.memory_space<vmem>>, vector<128x128xf32>,
    %c0_i32_8 = arith.constant 0 : i32
    %9 = arith.cmpi eq, %arg2, %c0_i32_8 : i32
    %10 = arith.extui %9 : i1 to i32
    %c0_i32_9 = arith.constant 0 : i32
    %11 = arith.cmpi ne, %10, %c0_i32_9 : i32
    scf.if %11 {
      %c0_10 = arith.constant 0 : index
      %c0_11 = arith.constant 0 : index
      %12 = vector.load %arg7[%c0_10, %c0_11] : memref<128x128xf32, #tpu.memory_space<vmem>>, vector<128x128xf32>
      %c0_12 = arith.constant 0 : index
      %c0_13 = arith.constant 0 : index
      %13 = vector.load %arg5[%c0_12, %c0_13] : memref<1x128xf32, #tpu.memory_space<vmem>>, vector<1x128xf32>
      %14 = vector.broadcast %13 : vector<1x128xf32> to vector<128x128xf32>
      %15 = arith.addf %12, %14 : vector<128x128xf32>
      %c0_14 = arith.constant 0 : index
      %c0_15 = arith.constant 0 : index
      %16 = vector.load %arg6[%c0_14, %c0_15] : memref<128x128xf32, #tpu.memory_space<vmem>>, vector<128x128xf32>
      tpu.vector_store %arg6[%c0_14, %c0_15], %15 {strides = array<i32>} : memref<128x128xf32, #tpu.memory_space<vmem>>, vector<128x128xf32>,
    } else {
    }
    return
  }
  func.func @transform_0(%arg0: i32, %arg1: i32, %arg2: i32) -> (i32, i32) {
    %c0_i32 = arith.constant 0 : i32
    return %arg0, %arg2 : i32, i32
  }
  func.func @transform_1(%arg0: i32, %arg1: i32, %arg2: i32) -> (i32, i32) {
    %c0_i32 = arith.constant 0 : i32
    return %arg2, %arg1 : i32, i32
  }
  func.func @transform_2(%arg0: i32, %arg1: i32, %arg2: i32) -> (i32, i32) {
    %c0_i32 = arith.constant 0 : i32
    %c0_i32_0 = arith.constant 0 : i32
    return %c0_i32, %arg1 : i32, i32
  }
  func.func @transform_3(%arg0: i32, %arg1: i32, %arg2: i32) -> (i32, i32) {
    %c0_i32 = arith.constant 0 : i32
    return %arg0, %arg1 : i32, i32
  }
}

module attributes {stable_mosaic.version = 11 : i64} {
  func.func @_flash_attn_kernel(%arg0: i32, %arg1: i32, %arg2: i32, %arg3: memref<1x128x64xbf16, #tpu.memory_space<vmem>>, %arg4: memref<1x128x64xbf16, #tpu.memory_space<vmem>>, %arg5: memref<1x128x64xbf16, #tpu.memory_space<vmem>>, %arg6: memref<1x128x64xf32, #tpu.memory_space<vmem>>, %arg7: memref<128x1xf32, #tpu.memory_space<vmem>>, %arg8: memref<128x1xf32, #tpu.memory_space<vmem>>, %arg9: memref<128x64xf32, #tpu.memory_space<vmem>>) attributes {dimension_semantics = [#tpu.dimension_semantics<parallel>, #tpu.dimension_semantics<parallel>, #tpu.dimension_semantics<arbitrary>], iteration_bounds = array<i64: 16, 1, 1>, scalar_prefetch = 0 : i64, scratch_operands = 3 : i64, tpu.core_type = #tpu.core_type<tc>, window_params = [{transform_indices = @transform_0, window_bounds = array<i64: 1, 128, 64>}, {transform_indices = @transform_1, window_bounds = array<i64: 1, 128, 64>}, {transform_indices = @transform_2, window_bounds = array<i64: 1, 128, 64>}, {transform_indices = @transform_3, window_bounds = array<i64: 1, 128, 64>}]} {
    %c0_i32 = arith.constant 0 : i32
    %0 = arith.cmpi eq, %arg2, %c0_i32 : i32
    %1 = arith.extui %0 : i1 to i32
    %c0_i32_0 = arith.constant 0 : i32
    %2 = arith.cmpi ne, %1, %c0_i32_0 : i32
    scf.if %2 {
      %cst_27 = arith.constant 0xFF800000 : f32
      %38 = vector.broadcast %cst_27 : f32 to vector<128x1xf32>
      %c0_28 = arith.constant 0 : index
      %c0_29 = arith.constant 0 : index
      %39 = vector.load %arg7[%c0_28, %c0_29] : memref<128x1xf32, #tpu.memory_space<vmem>>, vector<128x1xf32>
      tpu.vector_store %arg7[%c0_28, %c0_29], %38 {strides = array<i32>} : memref<128x1xf32, #tpu.memory_space<vmem>>, vector<128x1xf32>,
      %cst_30 = arith.constant 0.000000e+00 : f32
      %40 = vector.broadcast %cst_30 : f32 to vector<128x1xf32>
      %c0_31 = arith.constant 0 : index
      %c0_32 = arith.constant 0 : index
      %41 = vector.load %arg8[%c0_31, %c0_32] : memref<128x1xf32, #tpu.memory_space<vmem>>, vector<128x1xf32>
      tpu.vector_store %arg8[%c0_31, %c0_32], %40 {strides = array<i32>} : memref<128x1xf32, #tpu.memory_space<vmem>>, vector<128x1xf32>,
      %cst_33 = arith.constant 0.000000e+00 : f32
      %42 = vector.broadcast %cst_33 : f32 to vector<128x64xf32>
      %c0_34 = arith.constant 0 : index
      %c0_35 = arith.constant 0 : index
      %43 = vector.load %arg9[%c0_34, %c0_35] : memref<128x64xf32, #tpu.memory_space<vmem>>, vector<128x64xf32>
      tpu.vector_store %arg9[%c0_34, %c0_35], %42 {strides = array<i32>} : memref<128x64xf32, #tpu.memory_space<vmem>>, vector<128x64xf32>,
    } else {
    }
    %c0 = arith.constant 0 : index
    %c0_1 = arith.constant 0 : index
    %c0_2 = arith.constant 0 : index
    %3 = vector.load %arg3[%c0, %c0_1, %c0_2] : memref<1x128x64xbf16, #tpu.memory_space<vmem>>, vector<1x128x64xbf16>
    %4 = vector.shape_cast %3 : vector<1x128x64xbf16> to vector<128x64xbf16>
    %c0_3 = arith.constant 0 : index
    %c0_4 = arith.constant 0 : index
    %c0_5 = arith.constant 0 : index
    %5 = vector.load %arg4[%c0_3, %c0_4, %c0_5] : memref<1x128x64xbf16, #tpu.memory_space<vmem>>, vector<1x128x64xbf16>
    %6 = vector.shape_cast %5 : vector<1x128x64xbf16> to vector<128x64xbf16>
    %c0_6 = arith.constant 0 : index
    %c0_7 = arith.constant 0 : index
    %c0_8 = arith.constant 0 : index
    %7 = vector.load %arg5[%c0_6, %c0_7, %c0_8] : memref<1x128x64xbf16, #tpu.memory_space<vmem>>, vector<1x128x64xbf16>
    %8 = vector.shape_cast %7 : vector<1x128x64xbf16> to vector<128x64xbf16>
    %cst = arith.constant dense<0.000000e+00> : vector<128x128xf32>
    %9 = tpu.matmul %4, %6, %cst {dimension_numbers = #tpu.dot_dimension_numbers<[1], [1], [0], [0], [0, 0, 1, 0], [], []>} : vector<128x64xbf16>, vector<128x64xbf16>, vector<128x128xf32> -> vector<128x128xf32>
    %cst_9 = arith.constant 1.250000e-01 : f32
    %10 = vector.broadcast %cst_9 : f32 to vector<128x128xf32>
    %11 = arith.mulf %9, %10 : vector<128x128xf32>
    %c0_10 = arith.constant 0 : index
    %c0_11 = arith.constant 0 : index
    %12 = vector.load %arg7[%c0_10, %c0_11] : memref<128x1xf32, #tpu.memory_space<vmem>>, vector<128x1xf32>
    %cst_12 = arith.constant dense<0xFF800000> : vector<128xf32>
    %13 = vector.multi_reduction <maximumf>, %11, %cst_12 [1] : vector<128x128xf32> to vector<128xf32>
    %14 = vector.shape_cast %13 : vector<128xf32> to vector<128x1xf32>
    %15 = arith.maximumf %12, %14 : vector<128x1xf32>
    %16 = arith.subf %12, %15 : vector<128x1xf32>
    %17 = math.exp %16 : vector<128x1xf32>
    %18 = vector.broadcast %15 : vector<128x1xf32> to vector<128x128xf32>
    %19 = arith.subf %11, %18 : vector<128x128xf32>
    %20 = math.exp %19 : vector<128x128xf32>
    %c0_13 = arith.constant 0 : index
    %c0_14 = arith.constant 0 : index
    %21 = vector.load %arg8[%c0_13, %c0_14] : memref<128x1xf32, #tpu.memory_space<vmem>>, vector<128x1xf32>
    %22 = arith.mulf %17, %21 : vector<128x1xf32>
    %cst_15 = arith.constant dense<0.000000e+00> : vector<128xf32>
    %23 = vector.multi_reduction <add>, %20, %cst_15 [1] : vector<128x128xf32> to vector<128xf32>
    %24 = vector.shape_cast %23 : vector<128xf32> to vector<128x1xf32>
    %25 = arith.addf %22, %24 : vector<128x1xf32>
    %c0_16 = arith.constant 0 : index
    %c0_17 = arith.constant 0 : index
    %26 = vector.load %arg8[%c0_16, %c0_17] : memref<128x1xf32, #tpu.memory_space<vmem>>, vector<128x1xf32>
    tpu.vector_store %arg8[%c0_16, %c0_17], %25 {strides = array<i32>} : memref<128x1xf32, #tpu.memory_space<vmem>>, vector<128x1xf32>,
    %c0_18 = arith.constant 0 : index
    %c0_19 = arith.constant 0 : index
    %27 = vector.load %arg9[%c0_18, %c0_19] : memref<128x64xf32, #tpu.memory_space<vmem>>, vector<128x64xf32>
    %28 = vector.broadcast %17 : vector<128x1xf32> to vector<128x64xf32>
    %29 = arith.mulf %28, %27 : vector<128x64xf32>
    %30 = arith.truncf %20 : vector<128x128xf32> to vector<128x128xbf16>
    %cst_20 = arith.constant dense<0.000000e+00> : vector<128x64xf32>
    %31 = tpu.matmul %30, %8, %cst_20 {dimension_numbers = #tpu.dot_dimension_numbers<[1], [0], [0], [1], [0, 0, 1, 1], [], []>} : vector<128x128xbf16>, vector<128x64xbf16>, vector<128x64xf32> -> vector<128x64xf32>
    %32 = arith.addf %29, %31 : vector<128x64xf32>
    %c0_21 = arith.constant 0 : index
    %c0_22 = arith.constant 0 : index
    %33 = vector.load %arg9[%c0_21, %c0_22] : memref<128x64xf32, #tpu.memory_space<vmem>>, vector<128x64xf32>
    tpu.vector_store %arg9[%c0_21, %c0_22], %32 {strides = array<i32>} : memref<128x64xf32, #tpu.memory_space<vmem>>, vector<128x64xf32>,
    %c0_23 = arith.constant 0 : index
    %c0_24 = arith.constant 0 : index
    %34 = vector.load %arg7[%c0_23, %c0_24] : memref<128x1xf32, #tpu.memory_space<vmem>>, vector<128x1xf32>
    tpu.vector_store %arg7[%c0_23, %c0_24], %15 {strides = array<i32>} : memref<128x1xf32, #tpu.memory_space<vmem>>, vector<128x1xf32>,
    %c0_i32_25 = arith.constant 0 : i32
    %35 = arith.cmpi eq, %arg2, %c0_i32_25 : i32
    %36 = arith.extui %35 : i1 to i32
    %c0_i32_26 = arith.constant 0 : i32
    %37 = arith.cmpi ne, %36, %c0_i32_26 : i32
    scf.if %37 {
      %c0_27 = arith.constant 0 : index
      %c0_28 = arith.constant 0 : index
      %38 = vector.load %arg8[%c0_27, %c0_28] : memref<128x1xf32, #tpu.memory_space<vmem>>, vector<128x1xf32>
      %39 = tpu.reciprocal %38 {approx = true} : vector<128x1xf32> -> vector<128x1xf32>
      %c0_29 = arith.constant 0 : index
      %c0_30 = arith.constant 0 : index
      %40 = vector.load %arg9[%c0_29, %c0_30] : memref<128x64xf32, #tpu.memory_space<vmem>>, vector<128x64xf32>
      %41 = vector.broadcast %39 : vector<128x1xf32> to vector<128x64xf32>
      %42 = arith.mulf %40, %41 : vector<128x64xf32>
      %c0_31 = arith.constant 0 : index
      %c0_32 = arith.constant 0 : index
      %c0_33 = arith.constant 0 : index
      %43 = vector.load %arg6[%c0_31, %c0_32, %c0_33] : memref<1x128x64xf32, #tpu.memory_space<vmem>>, vector<1x128x64xf32>
      %44 = vector.shape_cast %43 : vector<1x128x64xf32> to vector<128x64xf32>
      %45 = vector.shape_cast %42 : vector<128x64xf32> to vector<1x128x64xf32>
      tpu.vector_store %arg6[%c0_31, %c0_32, %c0_33], %45 {strides = array<i32>} : memref<1x128x64xf32, #tpu.memory_space<vmem>>, vector<1x128x64xf32>,
    } else {
    }
    return
  }
  func.func @transform_0(%arg0: i32, %arg1: i32, %arg2: i32) -> (i32, i32, i32) {
    %c0_i32 = arith.constant 0 : i32
    %c0_i32_0 = arith.constant 0 : i32
    return %arg0, %arg1, %c0_i32 : i32, i32, i32
  }
  func.func @transform_1(%arg0: i32, %arg1: i32, %arg2: i32) -> (i32, i32, i32) {
    %c0_i32 = arith.constant 0 : i32
    %c0_i32_0 = arith.constant 0 : i32
    return %arg0, %arg2, %c0_i32 : i32, i32, i32
  }
  func.func @transform_2(%arg0: i32, %arg1: i32, %arg2: i32) -> (i32, i32, i32) {
    %c0_i32 = arith.constant 0 : i32
    %c0_i32_0 = arith.constant 0 : i32
    return %arg0, %arg2, %c0_i32 : i32, i32, i32
  }
  func.func @transform_3(%arg0: i32, %arg1: i32, %arg2: i32) -> (i32, i32, i32) {
    %c0_i32 = arith.constant 0 : i32
    %c0_i32_0 = arith.constant 0 : i32
    return %arg0, %arg1, %c0_i32 : i32, i32, i32
  }
}

module attributes {stable_mosaic.version = 11 : i64} {
  func.func @_matmul_bias_kernel(%arg0: i32, %arg1: i32, %arg2: i32, %arg3: memref<128x256xbf16, #tpu.memory_space<vmem>>, %arg4: memref<256x64xbf16, #tpu.memory_space<vmem>>, %arg5: memref<1x64xf32, #tpu.memory_space<vmem>>, %arg6: memref<128x64xf32, #tpu.memory_space<vmem>>, %arg7: memref<128x64xf32, #tpu.memory_space<vmem>>) attributes {dimension_semantics = [#tpu.dimension_semantics<parallel>, #tpu.dimension_semantics<parallel>, #tpu.dimension_semantics<arbitrary>], iteration_bounds = array<i64: 2, 1, 2>, scalar_prefetch = 0 : i64, scratch_operands = 1 : i64, tpu.core_type = #tpu.core_type<tc>, window_params = [{transform_indices = @transform_0, window_bounds = array<i64: 128, 256>}, {transform_indices = @transform_1, window_bounds = array<i64: 256, 64>}, {transform_indices = @transform_2, window_bounds = array<i64: 1, 64>}, {transform_indices = @transform_3, window_bounds = array<i64: 128, 64>}]} {
    %c0_i32 = arith.constant 0 : i32
    %0 = arith.cmpi eq, %arg2, %c0_i32 : i32
    %1 = arith.extui %0 : i1 to i32
    %c0_i32_0 = arith.constant 0 : i32
    %2 = arith.cmpi ne, %1, %c0_i32_0 : i32
    scf.if %2 {
      %cst_9 = arith.constant 0.000000e+00 : f32
      %12 = vector.broadcast %cst_9 : f32 to vector<128x64xf32>
      %c0_10 = arith.constant 0 : index
      %c0_11 = arith.constant 0 : index
      %13 = vector.load %arg7[%c0_10, %c0_11] : memref<128x64xf32, #tpu.memory_space<vmem>>, vector<128x64xf32>
      tpu.vector_store %arg7[%c0_10, %c0_11], %12 {strides = array<i32>} : memref<128x64xf32, #tpu.memory_space<vmem>>, vector<128x64xf32>,
    } else {
    }
    %c0 = arith.constant 0 : index
    %c0_1 = arith.constant 0 : index
    %3 = vector.load %arg7[%c0, %c0_1] : memref<128x64xf32, #tpu.memory_space<vmem>>, vector<128x64xf32>
    %c0_2 = arith.constant 0 : index
    %c0_3 = arith.constant 0 : index
    %4 = vector.load %arg3[%c0_2, %c0_3] : memref<128x256xbf16, #tpu.memory_space<vmem>>, vector<128x256xbf16>
    %c0_4 = arith.constant 0 : index
    %c0_5 = arith.constant 0 : index
    %5 = vector.load %arg4[%c0_4, %c0_5] : memref<256x64xbf16, #tpu.memory_space<vmem>>, vector<256x64xbf16>
    %cst = arith.constant dense<0.000000e+00> : vector<128x64xf32>
    %6 = tpu.matmul %4, %5, %cst {dimension_numbers = #tpu.dot_dimension_numbers<[1], [0], [0], [1], [0, 0, 1, 1], [], []>} : vector<128x256xbf16>, vector<256x64xbf16>, vector<128x64xf32> -> vector<128x64xf32>
    %7 = arith.addf %3, %6 : vector<128x64xf32>
    %c0_6 = arith.constant 0 : index
    %c0_7 = arith.constant 0 : index
    %8 = vector.load %arg7[%c0_6, %c0_7] : memref<128x64xf32, #tpu.memory_space<vmem>>, vector<128x64xf32>
    tpu.vector_store %arg7[%c0_6, %c0_7], %7 {strides = array<i32>} : memref<128x64xf32, #tpu.memory_space<vmem>>, vector<128x64xf32>,
    %c1_i32 = arith.constant 1 : i32
    %9 = arith.cmpi eq, %arg2, %c1_i32 : i32
    %10 = arith.extui %9 : i1 to i32
    %c0_i32_8 = arith.constant 0 : i32
    %11 = arith.cmpi ne, %10, %c0_i32_8 : i32
    scf.if %11 {
      %c0_9 = arith.constant 0 : index
      %c0_10 = arith.constant 0 : index
      %12 = vector.load %arg7[%c0_9, %c0_10] : memref<128x64xf32, #tpu.memory_space<vmem>>, vector<128x64xf32>
      %c0_11 = arith.constant 0 : index
      %c0_12 = arith.constant 0 : index
      %13 = vector.load %arg5[%c0_11, %c0_12] : memref<1x64xf32, #tpu.memory_space<vmem>>, vector<1x64xf32>
      %14 = vector.broadcast %13 : vector<1x64xf32> to vector<128x64xf32>
      %15 = arith.addf %12, %14 : vector<128x64xf32>
      %c0_13 = arith.constant 0 : index
      %c0_14 = arith.constant 0 : index
      %16 = vector.load %arg6[%c0_13, %c0_14] : memref<128x64xf32, #tpu.memory_space<vmem>>, vector<128x64xf32>
      tpu.vector_store %arg6[%c0_13, %c0_14], %15 {strides = array<i32>} : memref<128x64xf32, #tpu.memory_space<vmem>>, vector<128x64xf32>,
    } else {
    }
    return
  }
  func.func @transform_0(%arg0: i32, %arg1: i32, %arg2: i32) -> (i32, i32) {
    %c0_i32 = arith.constant 0 : i32
    return %arg0, %arg2 : i32, i32
  }
  func.func @transform_1(%arg0: i32, %arg1: i32, %arg2: i32) -> (i32, i32) {
    %c0_i32 = arith.constant 0 : i32
    return %arg2, %arg1 : i32, i32
  }
  func.func @transform_2(%arg0: i32, %arg1: i32, %arg2: i32) -> (i32, i32) {
    %c0_i32 = arith.constant 0 : i32
    %c0_i32_0 = arith.constant 0 : i32
    return %c0_i32, %arg1 : i32, i32
  }
  func.func @transform_3(%arg0: i32, %arg1: i32, %arg2: i32) -> (i32, i32) {
    %c0_i32 = arith.constant 0 : i32
    return %arg0, %arg1 : i32, i32
  }
}

</mosaic_0001>

<llo_original>
// kernel: attention_forward.3
$region0: #{attention_forward.3}
  #allocation0 [shape = 'u32[]', space=smem, size = 0x4, offset = 0x4, fixed_abs, tag = 'smem constant byte address 0x4 - core index']
  #allocation1 [shape = 'u32[144,128]{1,0:T(1,128)}', space=vmem, size = 0x12000, scoped, tag = 'internal scratch']
  #allocation2 [shape = 'f32[128,128]{1,0:T(8,128)}', space=vmem, size = 0x10000, scoped, tag = 'scratch operand']
  %s0 = inlined_call_operand.vmem [shape: bf16[256,64], index: 0, kind: input, shape index: {}]
  %s1 = inlined_call_operand.vmem [shape: bf16[64,1536], index: 1, kind: input, shape index: {}]
  %s2 = inlined_call_operand.vmem [shape: f32[1,1536], index: 2, kind: input, shape index: {}]
  %s3 = inlined_call_operand.vmem [shape: f32[256,1536], index: 3, kind: output, shape index: {}]
  %s4 = sld [smem:[#allocation0]]
  $region128: #{attention_forward.3} parent=0
    _
  %s6 = ssub.s32 1, %s4
  %s7 = scalar_select 0, %s6, %s4
  $region1: #{attention_forward.3} parent=0
    #allocation3 [shape = 'u8[32768]{0}', space=vmem, size = 0x8000, scoped, tag = 'input window, operand 1']
    #allocation4 [shape = 'u8[131072]{0}', space=vmem, size = 0x20000, scoped, tag = 'output window, operand 0']
    loop: start=0, step=1, limit=26
    $region2: #{attention_forward.3} parent=1 // loop_pre_header
      _
    $region3: #{attention_forward.3} parent=1 // loop_header
      %s9 = sphi 0, %s13
      %p10 = scmp.ge.s32.totalorder %s9, 26
      %s16 = sphi 0, %s35
      %s17 = sphi 0, %s31
      %s18 = sphi 0, %s27
      %s19 = sphi 0, %s16
      %s20 = sphi 0, %s17
      %s21 = sphi 0, %s18
      %s22 = sphi 0, %s19
      %s23 = sphi 0, %s20
      %s24 = sphi 0, %s21
      %s40 = sphi 0, %s42
      %s43 = sphi 0, %s40
      %s44 = sphi 0, %s43
      %s60 = sphi 0, %s44
      %s68 = sphi 0, %s70
      %s71 = sphi 0, %s68
      %s72 = sphi 0, %s71
      %s88 = sphi 0, %s72
      %s94 = sphi 0, %s96
      %s97 = sphi 0, %s94
      %s98 = sphi 0, %s97
      %s114 = sphi 0, %s98
      %s122 = sphi 0, %s124
      %s125 = sphi 0, %s122
      %s126 = sphi 0, %s125
      %s142 = sphi 0, %s126
    $region4: #{attention_forward.3} parent=1 // loop_header_branch
      %12 = sbr.rel (%p10) target = $region8
    $region5: #{attention_forward.3} parent=1 // loop_body
      %s14 = ssub.s32 %s9, 1
      %s15 = ssub.s32 %s9, 2
      %s25 = sadd.s32 1, %s18
      %p26 = scmp.ge.s32.totalorder %s25, 1
      %s27 = scalar_select %p26, 0, %s25
      %s28 = sadd.s32 1, %s17
      %s29 = scalar_select %p26, %s28, %s17
      %p30 = scmp.ge.s32.totalorder %s29, 12
      %s31 = scalar_select %p30, 0, %s29
      %s32 = sadd.s32 1, %s16
      %s33 = scalar_select %p30, %s32, %s16
      %p34 = scmp.ge.s32.totalorder %s33, 2
      %s35 = scalar_select %p34, 0, %s33
      %s36 = ssub.s32 %s16, %s35
      %s37 = ssub.s32 %s18, %s27
      %s38 = sor.u32 %s36, %s37
      %p39 = scmp.eq.s32.totalorder %s38, 0
      %s41 = sadd.s32 %s40, 1
      %s42 = scalar_select %p39, %s40, %s41
      %p45 = pneg %p39
      %p46 = scmp.eq.s32.totalorder %s9, 23
      %p47 = por %p45, %p46
      %p48 = scmp.ne.s32.totalorder %s40, %s43
      %p49 = scmp.eq.s32.totalorder %s9, 0
      %p50 = por %p48, %p49
      %p51 = scmp.ne.s32.totalorder %s40, %s43
      %p52 = scmp.eq.s32.totalorder %s14, 23
      %p53 = por %p51, %p52
      %p54 = scmp.ne.s32.totalorder %s43, %s44
      %p55 = scmp.eq.s32.totalorder %s14, 0
      %p56 = por %p54, %p55
      %p57 = scmp.ne.s32.totalorder %s43, %s44
      %p58 = scmp.eq.s32.totalorder %s15, 23
      %p59 = por %p57, %p58
      %p61 = scmp.ne.s32.totalorder %s44, %s60
      %p62 = scmp.eq.s32.totalorder %s15, 0
      %p63 = por %p61, %p62
      %s64 = ssub.s32 %s18, %s27
      %s65 = ssub.s32 %s17, %s31
      %s66 = sor.u32 %s64, %s65
      %p67 = scmp.eq.s32.totalorder %s66, 0
      %s69 = sadd.s32 %s68, 1
      %s70 = scalar_select %p67, %s68, %s69
      %p73 = pneg %p67
      %p74 = scmp.eq.s32.totalorder %s9, 23
      %p75 = por %p73, %p74
      %p76 = scmp.ne.s32.totalorder %s68, %s71
      %p77 = scmp.eq.s32.totalorder %s9, 0
      %p78 = por %p76, %p77
      %p79 = scmp.ne.s32.totalorder %s68, %s71
      %p80 = scmp.eq.s32.totalorder %s14, 23
      %p81 = por %p79, %p80
      %p82 = scmp.ne.s32.totalorder %s71, %s72
      %p83 = scmp.eq.s32.totalorder %s14, 0
      %p84 = por %p82, %p83
      %p85 = scmp.ne.s32.totalorder %s71, %s72
      %p86 = scmp.eq.s32.totalorder %s15, 23
      %p87 = por %p85, %p86
      %p89 = scmp.ne.s32.totalorder %s72, %s88
      %p90 = scmp.eq.s32.totalorder %s15, 0
      %p91 = por %p89, %p90
      %s92 = ssub.s32 %s17, %s31
      %p93 = scmp.eq.s32.totalorder %s92, 0
      %s95 = sadd.s32 %s94, 1
      %s96 = scalar_select %p93, %s94, %s95
      %p99 = pneg %p93
      %p100 = scmp.eq.s32.totalorder %s9, 23
      %p101 = por %p99, %p100
      %p102 = scmp.ne.s32.totalorder %s94, %s97
      %p103 = scmp.eq.s32.totalorder %s9, 0
      %p104 = por %p102, %p103
      %p105 = scmp.ne.s32.totalorder %s94, %s97
      %p106 = scmp.eq.s32.totalorder %s14, 23
      %p107 = por %p105, %p106
      %p108 = scmp.ne.s32.totalorder %s97, %s98
      %p109 = scmp.eq.s32.totalorder %s14, 0
      %p110 = por %p108, %p109
      %p111 = scmp.ne.s32.totalorder %s97, %s98
      %p112 = scmp.eq.s32.totalorder %s15, 23
      %p113 = por %p111, %p112
      %p115 = scmp.ne.s32.totalorder %s98, %s114
      %p116 = scmp.eq.s32.totalorder %s15, 0
      %p117 = por %p115, %p116
      %s118 = ssub.s32 %s16, %s35
      %s119 = ssub.s32 %s17, %s31
      %s120 = sor.u32 %s118, %s119
      %p121 = scmp.eq.s32.totalorder %s120, 0
      %s123 = sadd.s32 %s122, 1
      %s124 = scalar_select %p121, %s122, %s123
      %p127 = pneg %p121
      %p128 = scmp.eq.s32.totalorder %s9, 23
      %p129 = por %p127, %p128
      %p130 = scmp.ne.s32.totalorder %s122, %s125
      %p131 = scmp.eq.s32.totalorder %s9, 0
      %p132 = por %p130, %p131
      %p133 = scmp.ne.s32.totalorder %s122, %s125
      %p134 = scmp.eq.s32.totalorder %s14, 23
      %p135 = por %p133, %p134
      %p136 = scmp.ne.s32.totalorder %s125, %s126
      %p137 = scmp.eq.s32.totalorder %s14, 0
      %p138 = por %p136, %p137
      %p139 = scmp.ne.s32.totalorder %s125, %s126
      %p140 = scmp.eq.s32.totalorder %s15, 23
      %p141 = por %p139, %p140
      %p143 = scmp.ne.s32.totalorder %s126, %s142
      %p144 = scmp.eq.s32.totalorder %s15, 0
      %p145 = por %p143, %p144
      %p146 = scmp.le.s32.totalorder 1, %s9
      %p147 = scmp.lt.s32.totalorder %s9, 25
      %p148 = pnand %p146, %p147
      %p149 = pneg %p148
      // Predicated region
      $region9: #{attention_forward.3} parent=5 // pred_check
        _
      $region10: #{attention_forward.3} parent=5 // pred_check_branch
        %151 = sbr.rel (%p148) target = $region12
      $region11: #{attention_forward.3} parent=5 // pred_region
        %s152 = ssub.s32 %s9, 1
      $region12: #{attention_forward.3} parent=5 // pred_fallthru
        _
      %p153 = scmp.lt.s32.totalorder %s9, 24
      // Predicated region
      $region13: #{attention_forward.3} parent=5 // pred_check
        %p154 = pneg %p153
      $region14: #{attention_forward.3} parent=5 // pred_check_branch
        %156 = sbr.rel (%p154) target = $region16
      $region15: #{attention_forward.3} parent=5 // pred_region
        // Predicated region
        $region17: #{attention_forward.3} parent=15 // pred_check
          %p157 = pneg %p50
        $region18: #{attention_forward.3} parent=15 // pred_check_branch
          %159 = sbr.rel (%p157) target = $region20
        $region19: #{attention_forward.3} parent=15 // pred_region
          %s160 = smul.u32 16, %s16
          %p161 = scmp.lt.s32.totalorder %s160, 31
          %s162 = scalar_select %p161, %s160, 31
          %p163 = scmp.lt.s32.totalorder %s18, 0
          %s164 = scalar_select %p163, %s18, 0
          %s165 = sadd.s32 %s164, %s162
          %s166 = smul.addr %s165, 4
          %s167 = scalar_lea.vmem %s0, %s166
          %s168 = smul.u32 16, %s16
        $region20: #{attention_forward.3} parent=15 // pred_fallthru
          _
        // Predicated region
        $region21: #{attention_forward.3} parent=15 // pred_check
          %p169 = pneg %p78
        $region22: #{attention_forward.3} parent=15 // pred_check_branch
          %171 = sbr.rel (%p169) target = $region24
        $region23: #{attention_forward.3} parent=15 // pred_region
          %s172 = sand.u32 %s68, 1
          %s173 = sand.u32 %s68, 1
          %s174 = smul.addr %s173, 32
          %s175 = scalar_lea.vmem [#allocation3], %s174
          %s176 = smul.u32 8, %s18
          %s177 = smul.addr %s176, 12
          %s178 = sadd.s32 %s17, %s177
          %s179 = smul.addr %s178, 4
          %s180 = scalar_lea.vmem %s1, %s179
          // Predicated region
          $region25: #{attention_forward.3} parent=23 // pred_check
            _
          $region26: #{attention_forward.3} parent=23 // pred_check_branch
            %182 = sbr.rel (0) target = $region28
          $region27: #{attention_forward.3} parent=23 // pred_region
            // Predicated region
            $region29: #{attention_forward.3} parent=27 // pred_check
              _
            $region30: #{attention_forward.3} parent=27 // pred_check_branch
              %184 = sbr.rel target = $region32
            $region31: #{attention_forward.3} parent=27 // pred_region
              // Predicated region
              $region44: #{attention_forward.3} parent=31 // pred_check
                _
              $region45: #{attention_forward.3} parent=31 // pred_check_branch
                %213 = sbr.rel (0) target = $region47
              $region46: #{attention_forward.3} parent=31 // pred_region
                loop: start=0, step=1, limit=1
                $region48: #{attention_forward.3} parent=46 // loop_pre_header
                  _
                $region49: #{attention_forward.3} parent=46 // loop_header
                  %s215 = sphi 0, %s219
                  %p216 = scmp.ge.s32.totalorder %s215, 1
                  %s220 = sphi %s180, %s180
                  %s221 = sphi %s175, %s175
                $region50: #{attention_forward.3} parent=46 // loop_header_branch
                  %218 = sbr.rel (%p216) target = $region54
                $region51: #{attention_forward.3} parent=46 // loop_body
                  _
                $region52: #{attention_forward.3} parent=46 // loop_footer
                  %s219 = sadd.s32 1, %s215
                $region53: #{attention_forward.3} parent=46 // loop_footer_branch
                  %214 = sbr.rel target = $region49
                $region54: #{attention_forward.3} parent=46 // loop_exit
                  _
                loop: start=0, step=1, limit=1
                $region55: #{attention_forward.3} parent=46 // loop_pre_header
                  _
                $region56: #{attention_forward.3} parent=46 // loop_header
                  %s224 = sphi 0, %s228
                  %p225 = scmp.ge.s32.totalorder %s224, 1
                  %s229 = sphi %s180, %s180
                  %s230 = sphi %s175, %s175
                $region57: #{attention_forward.3} parent=46 // loop_header_branch
                  %227 = sbr.rel (%p225) target = $region61
                $region58: #{attention_forward.3} parent=46 // loop_body
                  %v231 = vld [vmem:[%s229] sm:$0xf]
                  %232 = vst [vmem:[%s230] sm:$0xf] %v231
                  %v233 = vld [vmem:[%s229 + $0x30] sm:$0xf]
                  %234 = vst [vmem:[%s230 + $0x4] sm:$0xf] %v233
                  %v235 = vld [vmem:[%s229 + $0x60] sm:$0xf]
                  %236 = vst [vmem:[%s230 + $0x8] sm:$0xf] %v235
                  %v237 = vld [vmem:[%s229 + $0x90] sm:$0xf]
                  %238 = vst [vmem:[%s230 + $0xc] sm:$0xf] %v237
                  %v239 = vld [vmem:[%s229 + $0xc0] sm:$0xf]
                  %240 = vst [vmem:[%s230 + $0x10] sm:$0xf] %v239
                  %v241 = vld [vmem:[%s229 + $0xf0] sm:$0xf]
                  %242 = vst [vmem:[%s230 + $0x14] sm:$0xf] %v241
                  %v243 = vld [vmem:[%s229 + $0x120] sm:$0xf]
                  %244 = vst [vmem:[%s230 + $0x18] sm:$0xf] %v243
                  %v245 = vld [vmem:[%s229 + $0x150] sm:$0xf]
                  %246 = vst [vmem:[%s230 + $0x1c] sm:$0xf] %v245
                $region59: #{attention_forward.3} parent=46 // loop_footer
                  %s228 = sadd.s32 1, %s224
                $region60: #{attention_forward.3} parent=46 // loop_footer_branch
                  %223 = sbr.rel target = $region56
                $region61: #{attention_forward.3} parent=46 // loop_exit
                  _
              $region47: #{attention_forward.3} parent=31 // pred_fallthru
                _
            $region32: #{attention_forward.3} parent=27 // pred_fallthru
              _
            // Predicated region
            $region33: #{attention_forward.3} parent=27 // pred_check
              _
            $region34: #{attention_forward.3} parent=27 // pred_check_branch
              %186 = sbr.rel (0) target = $region36
            $region35: #{attention_forward.3} parent=27 // pred_region
              loop: start=0, step=1, limit=1
              $region37: #{attention_forward.3} parent=35 // loop_pre_header
                _
              $region38: #{attention_forward.3} parent=35 // loop_header
                %s189 = sphi 0, %s193
                %p190 = scmp.ge.s32.totalorder %s189, 1
                %s194 = sphi %s180, %s180
                %s195 = sphi %s175, %s175
              $region39: #{attention_forward.3} parent=35 // loop_header_branch
                %192 = sbr.rel (%p190) target = $region43
              $region40: #{attention_forward.3} parent=35 // loop_body
                %v196 = vld [vmem:[%s194] sm:$0xf]
                %197 = vst [vmem:[%s195] sm:$0xf] %v196
                %v198 = vld [vmem:[%s194 + $0x30] sm:$0xf]
                %199 = vst [vmem:[%s195 + $0x4] sm:$0xf] %v198
                %v200 = vld [vmem:[%s194 + $0x60] sm:$0xf]
                %201 = vst [vmem:[%s195 + $0x8] sm:$0xf] %v200
                %v202 = vld [vmem:[%s194 + $0x90] sm:$0xf]
                %203 = vst [vmem:[%s195 + $0xc] sm:$0xf] %v202
                %v204 = vld [vmem:[%s194 + $0xc0] sm:$0xf]
                %205 = vst [vmem:[%s195 + $0x10] sm:$0xf] %v204
                %v206 = vld [vmem:[%s194 + $0xf0] sm:$0xf]
                %207 = vst [vmem:[%s195 + $0x14] sm:$0xf] %v206
                %v208 = vld [vmem:[%s194 + $0x120] sm:$0xf]
                %209 = vst [vmem:[%s195 + $0x18] sm:$0xf] %v208
                %v210 = vld [vmem:[%s194 + $0x150] sm:$0xf]
                %211 = vst [vmem:[%s195 + $0x1c] sm:$0xf] %v210
              $region41: #{attention_forward.3} parent=35 // loop_footer
                %s193 = sadd.s32 1, %s189
              $region42: #{attention_forward.3} parent=35 // loop_footer_branch
                %188 = sbr.rel target = $region38
              $region43: #{attention_forward.3} parent=35 // loop_exit
                _
            $region36: #{attention_forward.3} parent=27 // pred_fallthru
              _
          $region28: #{attention_forward.3} parent=23 // pred_fallthru
            _
          %247 = vnop
        $region24: #{attention_forward.3} parent=15 // pred_fallthru
          _
        // Predicated region
        $region62: #{attention_forward.3} parent=15 // pred_check
          %p248 = pneg %p104
        $region63: #{attention_forward.3} parent=15 // pred_check_branch
          %250 = sbr.rel (%p248) target = $region65
        $region64: #{attention_forward.3} parent=15 // pred_region
          %p251 = scmp.lt.s32.totalorder %s17, 11
          %s252 = scalar_select %p251, %s17, 11
          %s253 = scalar_lea.vmem %s2, %s252
        $region65: #{attention_forward.3} parent=15 // pred_fallthru
          _
      $region16: #{attention_forward.3} parent=5 // pred_fallthru
        _
      %p254 = scmp.le.s32.totalorder 1, %s9
      %p255 = scmp.lt.s32.totalorder %s9, 25
      %p256 = pnand %p254, %p255
      %p257 = pneg %p256
      // Predicated region
      $region66: #{attention_forward.3} parent=5 // pred_check
        _
      $region67: #{attention_forward.3} parent=5 // pred_check_branch
        %259 = sbr.rel (%p256) target = $region69
      $region68: #{attention_forward.3} parent=5 // pred_region
        %s260 = ssub.s32 %s9, 1
        %s261 = sand.u32 %s71, 1
        %s262 = sand.u32 %s71, 1
        %s263 = smul.addr %s262, 32
        %s264 = scalar_lea.vmem [#allocation3], %s263
        // Predicated region
        $region70: #{attention_forward.3} parent=68 // pred_check
          %p265 = pneg %p84
        $region71: #{attention_forward.3} parent=68 // pred_check_branch
          %267 = sbr.rel (%p265) target = $region73
        $region72: #{attention_forward.3} parent=68 // pred_region
          _
        $region73: #{attention_forward.3} parent=68 // pred_fallthru
          _
        %s268 = smul.u32 16, %s19
        %p269 = scmp.lt.s32.totalorder %s268, 31
        %s270 = scalar_select %p269, %s268, 31
        %p271 = scmp.lt.s32.totalorder %s21, 0
        %s272 = scalar_select %p271, %s21, 0
        %s273 = sadd.s32 %s272, %s270
        %s274 = smul.addr %s273, 4
        %s275 = scalar_lea.vmem %s0, %s274
        %p276 = pneg %p56
        %p277 = pneg %p53
        %s278 = sand.u32 %s71, 1
        %s279 = sand.u32 %s71, 1
        %s280 = smul.addr %s279, 32
        %s281 = scalar_lea.vmem [#allocation3], %s280
        %p282 = pneg %p84
        %p283 = pneg %p81
        %p284 = scmp.lt.s32.totalorder %s20, 11
        %s285 = scalar_select %p284, %s20, 11
        %s286 = scalar_lea.vmem %s2, %s285
        %p287 = pneg %p110
        %p288 = pneg %p107
        %p289 = pneg %p138
        %p290 = pneg %p135
        %s291 = sand.u32 %s125, 1
        %s292 = sand.u32 %s125, 1
        %s293 = smul.addr %s292, 128
        %s294 = scalar_lea.vmem [#allocation4], %s293
        %s295 = smul.u32 16, %s19
        %p296 = scmp.lt.s32.totalorder %s295, 31
        %s297 = scalar_select %p296, %s295, 31
        %p298 = scmp.lt.s32.totalorder %s21, 0
        %s299 = scalar_select %p298, %s21, 0
        %s300 = sadd.s32 %s299, %s297
        %s301 = smul.addr %s300, 4
        %s302 = scalar_lea.vmem %s0, %s301
        %s303 = smul.u32 16, %s19
        %s304 = smul.u32 8, %s21
        %p305 = scmp.lt.s32.totalorder %s20, 11
        %s306 = scalar_select %p305, %s20, 11
        %s307 = scalar_lea.vmem %s2, %s306
        %s308 = smul.u32 16, %s19
        %p310 = scmp.eq.s32.totalorder %s21, 0
        // Predicated region
        $region74: #{attention_forward.3} parent=68 // pred_check
          %p311 = pneg %p310
        $region75: #{attention_forward.3} parent=68 // pred_check_branch
          %313 = sbr.rel (%p311) target = $region77
        $region76: #{attention_forward.3} parent=68 // pred_region
          %314 = vst [vmem:[#allocation2] sm:$0xff] 0.0
          %315 = vst [vmem:[#allocation2 + $0x8] sm:$0xff] 0.0
          %316 = vst [vmem:[#allocation2 + $0x10] sm:$0xff] 0.0
          %317 = vst [vmem:[#allocation2 + $0x18] sm:$0xff] 0.0
          %318 = vst [vmem:[#allocation2 + $0x20] sm:$0xff] 0.0
          %319 = vst [vmem:[#allocation2 + $0x28] sm:$0xff] 0.0
          %320 = vst [vmem:[#allocation2 + $0x30] sm:$0xff] 0.0
          %321 = vst [vmem:[#allocation2 + $0x38] sm:$0xff] 0.0
          %322 = vst [vmem:[#allocation2 + $0x40] sm:$0xff] 0.0
          %323 = vst [vmem:[#allocation2 + $0x48] sm:$0xff] 0.0
          %324 = vst [vmem:[#allocation2 + $0x50] sm:$0xff] 0.0
          %325 = vst [vmem:[#allocation2 + $0x58] sm:$0xff] 0.0
          %326 = vst [vmem:[#allocation2 + $0x60] sm:$0xff] 0.0
          %327 = vst [vmem:[#allocation2 + $0x68] sm:$0xff] 0.0
          %328 = vst [vmem:[#allocation2 + $0x70] sm:$0xff] 0.0
          %329 = vst [vmem:[#allocation2 + $0x78] sm:$0xff] 0.0
        $region77: #{attention_forward.3} parent=68 // pred_fallthru
          _
        %v330 = vld [vmem:[#allocation2] sm:$0xff]
        %v331 = vld [vmem:[#allocation2 + $0x8] sm:$0xff]
        %v332 = vld [vmem:[#allocation2 + $0x10] sm:$0xff]
        %v333 = vld [vmem:[#allocation2 + $0x18] sm:$0xff]
        %v334 = vld [vmem:[#allocation2 + $0x20] sm:$0xff]
        %v335 = vld [vmem:[#allocation2 + $0x28] sm:$0xff]
        %v336 = vld [vmem:[#allocation2 + $0x30] sm:$0xff]
        %v337 = vld [vmem:[#allocation2 + $0x38] sm:$0xff]
        %v338 = vld [vmem:[#allocation2 + $0x40] sm:$0xff]
        %v339 = vld [vmem:[#allocation2 + $0x48] sm:$0xff]
        %v340 = vld [vmem:[#allocation2 + $0x50] sm:$0xff]
        %v341 = vld [vmem:[#allocation2 + $0x58] sm:$0xff]
        %v342 = vld [vmem:[#allocation2 + $0x60] sm:$0xff]
        %v343 = vld [vmem:[#allocation2 + $0x68] sm:$0xff]
        %v344 = vld [vmem:[#allocation2 + $0x70] sm:$0xff]
        %v345 = vld [vmem:[#allocation2 + $0x78] sm:$0xff]
        %v346 = vld [vmem:[%s302] sm:$0xf]
        %v347 = vld [vmem:[%s302 + $0x4] sm:$0xf]
        %v348 = vld [vmem:[%s302 + $0x8] sm:$0xf]
        %v349 = vld [vmem:[%s302 + $0xc] sm:$0xf]
        %v350 = vld [vmem:[%s302 + $0x10] sm:$0xf]
        %v351 = vld [vmem:[%s302 + $0x14] sm:$0xf]
        %v352 = vld [vmem:[%s302 + $0x18] sm:$0xf]
        %v353 = vld [vmem:[%s302 + $0x1c] sm:$0xf]
        %v354 = vld [vmem:[%s302 + $0x20] sm:$0xf]
        %v355 = vld [vmem:[%s302 + $0x24] sm:$0xf]
        %v356 = vld [vmem:[%s302 + $0x28] sm:$0xf]
        %v357 = vld [vmem:[%s302 + $0x2c] sm:$0xf]
        %v358 = vld [vmem:[%s302 + $0x30] sm:$0xf]
        %v359 = vld [vmem:[%s302 + $0x34] sm:$0xf]
        %v360 = vld [vmem:[%s302 + $0x38] sm:$0xf]
        %v361 = vld [vmem:[%s302 + $0x3c] sm:$0xf]
        %v362 = vld [vmem:[%s264] sm:$0xf]
        %v363 = vld [vmem:[%s264 + $0x4] sm:$0xf]
        %v364 = vld [vmem:[%s264 + $0x8] sm:$0xf]
        %v365 = vld [vmem:[%s264 + $0xc] sm:$0xf]
        %v366 = vld [vmem:[%s264 + $0x10] sm:$0xf]
        %v367 = vld [vmem:[%s264 + $0x14] sm:$0xf]
        %v368 = vld [vmem:[%s264 + $0x18] sm:$0xf]
        %v369 = vld [vmem:[%s264 + $0x1c] sm:$0xf]
        %v386 = vunpack.c.l.b16 %v346
        %v387 = vunpack.c.l.b16 %v347
        %v388 = vunpack.c.l.b16 %v348
        %v389 = vunpack.c.l.b16 %v349
        %v390 = vunpack.c.l.b16 %v350
        %v391 = vunpack.c.l.b16 %v351
        %v392 = vunpack.c.l.b16 %v352
        %v393 = vunpack.c.l.b16 %v353
        %v394 = vunpack.c.l.b16 %v354
        %v395 = vunpack.c.l.b16 %v355
        %v396 = vunpack.c.l.b16 %v356
        %v397 = vunpack.c.l.b16 %v357
        %v398 = vunpack.c.l.b16 %v358
        %v399 = vunpack.c.l.b16 %v359
        %v400 = vunpack.c.l.b16 %v360
        %v401 = vunpack.c.l.b16 %v361
        %v402 = vpack.c.b16 %v387, %v386
        %v403 = vpack.c.b16 %v389, %v388
        %v404 = vpack.c.b16 %v391, %v390
        %v405 = vpack.c.b16 %v393, %v392
        %v406 = vpack.c.b16 %v395, %v394
        %v407 = vpack.c.b16 %v397, %v396
        %v408 = vpack.c.b16 %v399, %v398
        %v409 = vpack.c.b16 %v401, %v400
        %v418 = vunpack.c.l.b16 %v362
        %v419 = vunpack.c.l.b16 %v363
        %v420 = vunpack.c.l.b16 %v364
        %v421 = vunpack.c.l.b16 %v365
        %v422 = vunpack.c.l.b16 %v366
        %v423 = vunpack.c.l.b16 %v367
        %v424 = vunpack.c.l.b16 %v368
        %v425 = vunpack.c.l.b16 %v369
        %v426 = vpack.c.b16 %v419, %v418
        %v427 = vpack.c.b16 %v421, %v420
        %v428 = vpack.c.b16 %v423, %v422
        %v429 = vpack.c.b16 %v425, %v424
        %vm434 = vcmask 523264
        %v436 = vsel %vm434, %v402, 0
        %v439 = vsel %vm434, %v403, 0
        %v442 = vsel %vm434, %v404, 0
        %v445 = vsel %vm434, %v405, 0
        %v448 = vsel %vm434, %v406, 0
        %v451 = vsel %vm434, %v407, 0
        %v454 = vsel %vm434, %v408, 0
        %v457 = vsel %vm434, %v409, 0
        %459 = vmatprep.subr.bf16.mxu0 0
        %460 = vmatpush1.bf16.msra.mxu0 %v426
        %461 = vmatprep.subr.bf16.mxu0 0
        %462 = vmatpush1.bf16.msra.mxu0 %v427
        %463 = vmatprep.subr.bf16.mxu0 0
        %464 = vmatpush1.bf16.msra.mxu0 %v428
        %465 = vmatprep.subr.bf16.mxu0 0
        %466 = vmatpush1.bf16.msra.mxu0 %v429
        %467 = vmatprep.subr.bf16.mxu0 0
        %468 = vmatpush1.bf16.msra.mxu0 0
        %469 = vmatprep.subr.bf16.mxu0 0
        %470 = vmatpush1.bf16.msra.mxu0 0
        %471 = vmatprep.subr.bf16.mxu0 0
        %472 = vmatpush1.bf16.msra.mxu0 0
        %473 = vmatprep.subr.bf16.mxu0 0
        %474 = vmatpush1.bf16.msra.mxu0 0
        %475 = vmatprep.subr.bf16.mxu0 0
        %476 = vmatpush1.bf16.msra.mxu0 0
        %477 = vmatprep.subr.bf16.mxu0 0
        %478 = vmatpush1.bf16.msra.mxu0 0
        %479 = vmatprep.subr.bf16.mxu0 0
        %480 = vmatpush1.bf16.msra.mxu0 0
        %481 = vmatprep.subr.bf16.mxu0 0
        %482 = vmatpush1.bf16.msra.mxu0 0
        %483 = vmatprep.subr.bf16.mxu0 0
        %484 = vmatpush1.bf16.msra.mxu0 0
        %485 = vmatprep.subr.bf16.mxu0 0
        %486 = vmatpush1.bf16.msra.mxu0 0
        %487 = vmatprep.subr.bf16.mxu0 0
        %488 = vmatpush1.bf16.msra.mxu0 0
        %489 = vmatprep.subr.bf16.mxu0 0
        %490 = vmatpush1.bf16.msra.mxu0 0
        %491 = vmatprep.mubr.bf16.mxu0 0
        %492 = vmatmul.mubr.bf16.gmra.mrb[0].mxu0 %v436
        %v493 = vpop.f32.mrb[0].mxu0
        %v494 = vadd.f32 0.0, %v493
        %v495 = vpop.f32.mrb[0].mxu0
        %v496 = vpop.f32.mrb[0].mxu0
        %v497 = vadd.f32 0.0, %v496
        %v498 = vpop.f32.mrb[0].mxu0
        %499 = vmatprep.mubr.bf16.mxu0 0
        %500 = vmatmul.mubr.bf16.gmra.mrb[0].mxu0 %v439
        %v501 = vpop.f32.mrb[0].mxu0
        %v502 = vadd.f32 0.0, %v501
        %v503 = vpop.f32.mrb[0].mxu0
        %v504 = vpop.f32.mrb[0].mxu0
        %v505 = vadd.f32 0.0, %v504
        %v506 = vpop.f32.mrb[0].mxu0
        %507 = vmatprep.mubr.bf16.mxu0 0
        %508 = vmatmul.mubr.bf16.gmra.mrb[0].mxu0 %v442
        %v509 = vpop.f32.mrb[0].mxu0
        %v510 = vadd.f32 0.0, %v509
        %v511 = vpop.f32.mrb[0].mxu0
        %v512 = vpop.f32.mrb[0].mxu0
        %v513 = vadd.f32 0.0, %v512
        %v514 = vpop.f32.mrb[0].mxu0
        %515 = vmatprep.mubr.bf16.mxu0 0
        %516 = vmatmul.mubr.bf16.gmra.mrb[0].mxu0 %v445
        %v517 = vpop.f32.mrb[0].mxu0
        %v518 = vadd.f32 0.0, %v517
        %v519 = vpop.f32.mrb[0].mxu0
        %v520 = vpop.f32.mrb[0].mxu0
        %v521 = vadd.f32 0.0, %v520
        %v522 = vpop.f32.mrb[0].mxu0
        %523 = vmatprep.mubr.bf16.mxu0 0
        %524 = vmatmul.mubr.bf16.gmra.mrb[0].mxu0 %v448
        %v525 = vpop.f32.mrb[0].mxu0
        %v526 = vadd.f32 0.0, %v525
        %v527 = vpop.f32.mrb[0].mxu0
        %v528 = vpop.f32.mrb[0].mxu0
        %v529 = vadd.f32 0.0, %v528
        %v530 = vpop.f32.mrb[0].mxu0
        %531 = vmatprep.mubr.bf16.mxu0 0
        %532 = vmatmul.mubr.bf16.gmra.mrb[0].mxu0 %v451
        %v533 = vpop.f32.mrb[0].mxu0
        %v534 = vadd.f32 0.0, %v533
        %v535 = vpop.f32.mrb[0].mxu0
        %v536 = vpop.f32.mrb[0].mxu0
        %v537 = vadd.f32 0.0, %v536
        %v538 = vpop.f32.mrb[0].mxu0
        %539 = vmatprep.mubr.bf16.mxu0 0
        %540 = vmatmul.mubr.bf16.gmra.mrb[0].mxu0 %v454
        %v541 = vpop.f32.mrb[0].mxu0
        %v542 = vadd.f32 0.0, %v541
        %v543 = vpop.f32.mrb[0].mxu0
        %v544 = vpop.f32.mrb[0].mxu0
        %v545 = vadd.f32 0.0, %v544
        %v546 = vpop.f32.mrb[0].mxu0
        %547 = vmatprep.mubr.bf16.mxu0 0
        %548 = vmatmul.mubr.bf16.gmra.mrb[0].mxu0 %v457
        %v549 = vpop.f32.mrb[0].mxu0
        %v550 = vadd.f32 0.0, %v549
        %v551 = vpop.f32.mrb[0].mxu0
        %v552 = vpop.f32.mrb[0].mxu0
        %v553 = vadd.f32 0.0, %v552
        %v554 = vpop.f32.mrb[0].mxu0
        %555 = vdwg.mxu0
        %v556 = vadd.f32 %v330, %v494
        %v557 = vadd.f32 %v331, %v497
        %v558 = vadd.f32 %v332, %v502
        %v559 = vadd.f32 %v333, %v505
        %v560 = vadd.f32 %v334, %v510
        %v561 = vadd.f32 %v335, %v513
        %v562 = vadd.f32 %v336, %v518
        %v563 = vadd.f32 %v337, %v521
        %v564 = vadd.f32 %v338, %v526
        %v565 = vadd.f32 %v339, %v529
        %v566 = vadd.f32 %v340, %v534
        %v567 = vadd.f32 %v341, %v537
        %v568 = vadd.f32 %v342, %v542
        %v569 = vadd.f32 %v343, %v545
        %v570 = vadd.f32 %v344, %v550
        %v571 = vadd.f32 %v345, %v553
        %572 = vst [vmem:[#allocation2] sm:$0xff] %v556
        %573 = vst [vmem:[#allocation2 + $0x8] sm:$0xff] %v557
        %574 = vst [vmem:[#allocation2 + $0x10] sm:$0xff] %v558
        %575 = vst [vmem:[#allocation2 + $0x18] sm:$0xff] %v559
        %576 = vst [vmem:[#allocation2 + $0x20] sm:$0xff] %v560
        %577 = vst [vmem:[#allocation2 + $0x28] sm:$0xff] %v561
        %578 = vst [vmem:[#allocation2 + $0x30] sm:$0xff] %v562
        %579 = vst [vmem:[#allocation2 + $0x38] sm:$0xff] %v563
        %580 = vst [vmem:[#allocation2 + $0x40] sm:$0xff] %v564
        %581 = vst [vmem:[#allocation2 + $0x48] sm:$0xff] %v565
        %582 = vst [vmem:[#allocation2 + $0x50] sm:$0xff] %v566
        %583 = vst [vmem:[#allocation2 + $0x58] sm:$0xff] %v567
        %584 = vst [vmem:[#allocation2 + $0x60] sm:$0xff] %v568
        %585 = vst [vmem:[#allocation2 + $0x68] sm:$0xff] %v569
        %586 = vst [vmem:[#allocation2 + $0x70] sm:$0xff] %v570
        %587 = vst [vmem:[#allocation2 + $0x78] sm:$0xff] %v571
        // Predicated region
        $region78: #{attention_forward.3} parent=68 // pred_check
          %p588 = pneg %p310
        $region79: #{attention_forward.3} parent=68 // pred_check_branch
          %590 = sbr.rel (%p588) target = $region81
        $region80: #{attention_forward.3} parent=68 // pred_region
          %v591 = vld [vmem:[#allocation2] sm:$0xff]
          %v592 = vld [vmem:[#allocation2 + $0x8] sm:$0xff]
          %v593 = vld [vmem:[#allocation2 + $0x10] sm:$0xff]
          %v594 = vld [vmem:[#allocation2 + $0x18] sm:$0xff]
          %v595 = vld [vmem:[#allocation2 + $0x20] sm:$0xff]
          %v596 = vld [vmem:[#allocation2 + $0x28] sm:$0xff]
          %v597 = vld [vmem:[#allocation2 + $0x30] sm:$0xff]
          %v598 = vld [vmem:[#allocation2 + $0x38] sm:$0xff]
          %v599 = vld [vmem:[#allocation2 + $0x40] sm:$0xff]
          %v600 = vld [vmem:[#allocation2 + $0x48] sm:$0xff]
          %v601 = vld [vmem:[#allocation2 + $0x50] sm:$0xff]
          %v602 = vld [vmem:[#allocation2 + $0x58] sm:$0xff]
          %v603 = vld [vmem:[#allocation2 + $0x60] sm:$0xff]
          %v604 = vld [vmem:[#allocation2 + $0x68] sm:$0xff]
          %v605 = vld [vmem:[#allocation2 + $0x70] sm:$0xff]
          %v606 = vld [vmem:[#allocation2 + $0x78] sm:$0xff]
          %v607 = vld [vmem:[%s307] sm:$0x1]
          %v609 = vlaneseq
          %v610 = vshrl.u32 %v609, 7
          %v611 = vsub.s32 0, %v610
          %v612 = vrot.slane %v607, %v611
          %v614 = vadd.f32 %v591, %v612
          %v615 = vadd.f32 %v592, %v612
          %v616 = vadd.f32 %v593, %v612
          %v617 = vadd.f32 %v594, %v612
          %v618 = vadd.f32 %v595, %v612
          %v619 = vadd.f32 %v596, %v612
          %v620 = vadd.f32 %v597, %v612
          %v621 = vadd.f32 %v598, %v612
          %v622 = vadd.f32 %v599, %v612
          %v623 = vadd.f32 %v600, %v612
          %v624 = vadd.f32 %v601, %v612
          %v625 = vadd.f32 %v602, %v612
          %v626 = vadd.f32 %v603, %v612
          %v627 = vadd.f32 %v604, %v612
          %v628 = vadd.f32 %v605, %v612
          %v629 = vadd.f32 %v606, %v612
          %630 = vst [vmem:[%s294] sm:$0xff] %v614
          %631 = vst [vmem:[%s294 + $0x8] sm:$0xff] %v615
          %632 = vst [vmem:[%s294 + $0x10] sm:$0xff] %v616
          %633 = vst [vmem:[%s294 + $0x18] sm:$0xff] %v617
          %634 = vst [vmem:[%s294 + $0x20] sm:$0xff] %v618
          %635 = vst [vmem:[%s294 + $0x28] sm:$0xff] %v619
          %636 = vst [vmem:[%s294 + $0x30] sm:$0xff] %v620
          %637 = vst [vmem:[%s294 + $0x38] sm:$0xff] %v621
          %638 = vst [vmem:[%s294 + $0x40] sm:$0xff] %v622
          %639 = vst [vmem:[%s294 + $0x48] sm:$0xff] %v623
          %640 = vst [vmem:[%s294 + $0x50] sm:$0xff] %v624
          %641 = vst [vmem:[%s294 + $0x58] sm:$0xff] %v625
          %642 = vst [vmem:[%s294 + $0x60] sm:$0xff] %v626
          %643 = vst [vmem:[%s294 + $0x68] sm:$0xff] %v627
          %644 = vst [vmem:[%s294 + $0x70] sm:$0xff] %v628
          %645 = vst [vmem:[%s294 + $0x78] sm:$0xff] %v629
        $region81: #{attention_forward.3} parent=68 // pred_fallthru
          _
        %s646 = sand.u32 %s125, 1
        %s647 = sand.u32 %s125, 1
        %s648 = smul.addr %s647, 128
        %s649 = scalar_lea.vmem [#allocation4], %s648
        // Predicated region
        $region82: #{attention_forward.3} parent=68 // pred_check
          %p650 = pneg %p135
        $region83: #{attention_forward.3} parent=68 // pred_check_branch
          %652 = sbr.rel (%p650) target = $region85
        $region84: #{attention_forward.3} parent=68 // pred_region
          %s653 = smul.u32 16, %s19
          %s654 = smul.addr %s653, 12
          %s655 = sadd.s32 %s20, %s654
          %s656 = smul.addr %s655, 8
          %s657 = scalar_lea.vmem %s3, %s656
          // Predicated region
          $region86: #{attention_forward.3} parent=84 // pred_check
            _
          $region87: #{attention_forward.3} parent=84 // pred_check_branch
            %659 = sbr.rel (0) target = $region89
          $region88: #{attention_forward.3} parent=84 // pred_region
            // Predicated region
            $region90: #{attention_forward.3} parent=88 // pred_check
              _
            $region91: #{attention_forward.3} parent=88 // pred_check_branch
              %661 = sbr.rel (0) target = $region93
            $region92: #{attention_forward.3} parent=88 // pred_region
              // Predicated region
              $region105: #{attention_forward.3} parent=92 // pred_check
                _
              $region106: #{attention_forward.3} parent=92 // pred_check_branch
                %706 = sbr.rel (0) target = $region108
              $region107: #{attention_forward.3} parent=92 // pred_region
                loop: start=0, step=1, limit=1
                $region109: #{attention_forward.3} parent=107 // loop_pre_header
                  _
                $region110: #{attention_forward.3} parent=107 // loop_header
                  %s708 = sphi 0, %s712
                  %p709 = scmp.ge.s32.totalorder %s708, 1
                  %s713 = sphi %s649, %s649
                  %s714 = sphi %s657, %s657
                $region111: #{attention_forward.3} parent=107 // loop_header_branch
                  %711 = sbr.rel (%p709) target = $region115
                $region112: #{attention_forward.3} parent=107 // loop_body
                  %v715 = vld [vmem:[%s713] sm:$0xff]
                  %716 = vst [vmem:[%s714] sm:$0xff] %v715
                  %v717 = vld [vmem:[%s713 + $0x8] sm:$0xff]
                  %718 = vst [vmem:[%s714 + $0x60] sm:$0xff] %v717
                  %v719 = vld [vmem:[%s713 + $0x10] sm:$0xff]
                  %720 = vst [vmem:[%s714 + $0xc0] sm:$0xff] %v719
                  %v721 = vld [vmem:[%s713 + $0x18] sm:$0xff]
                  %722 = vst [vmem:[%s714 + $0x120] sm:$0xff] %v721
                  %v723 = vld [vmem:[%s713 + $0x20] sm:$0xff]
                  %724 = vst [vmem:[%s714 + $0x180] sm:$0xff] %v723
                  %v725 = vld [vmem:[%s713 + $0x28] sm:$0xff]
                  %726 = vst [vmem:[%s714 + $0x1e0] sm:$0xff] %v725
                  %v727 = vld [vmem:[%s713 + $0x30] sm:$0xff]
                  %728 = vst [vmem:[%s714 + $0x240] sm:$0xff] %v727
                  %v729 = vld [vmem:[%s713 + $0x38] sm:$0xff]
                  %730 = vst [vmem:[%s714 + $0x2a0] sm:$0xff] %v729
                  %v731 = vld [vmem:[%s713 + $0x40] sm:$0xff]
                  %732 = vst [vmem:[%s714 + $0x300] sm:$0xff] %v731
                  %v733 = vld [vmem:[%s713 + $0x48] sm:$0xff]
                  %734 = vst [vmem:[%s714 + $0x360] sm:$0xff] %v733
                  %v735 = vld [vmem:[%s713 + $0x50] sm:$0xff]
                  %736 = vst [vmem:[%s714 + $0x3c0] sm:$0xff] %v735
                  %v737 = vld [vmem:[%s713 + $0x58] sm:$0xff]
                  %738 = vst [vmem:[%s714 + $0x420] sm:$0xff] %v737
                  %v739 = vld [vmem:[%s713 + $0x60] sm:$0xff]
                  %740 = vst [vmem:[%s714 + $0x480] sm:$0xff] %v739
                  %v741 = vld [vmem:[%s713 + $0x68] sm:$0xff]
                  %742 = vst [vmem:[%s714 + $0x4e0] sm:$0xff] %v741
                  %v743 = vld [vmem:[%s713 + $0x70] sm:$0xff]
                  %744 = vst [vmem:[%s714 + $0x540] sm:$0xff] %v743
                  %v745 = vld [vmem:[%s713 + $0x78] sm:$0xff]
                  %746 = vst [vmem:[%s714 + $0x5a0] sm:$0xff] %v745
                $region113: #{attention_forward.3} parent=107 // loop_footer
                  %s712 = sadd.s32 1, %s708
                $region114: #{attention_forward.3} parent=107 // loop_footer_branch
                  %707 = sbr.rel target = $region110
                $region115: #{attention_forward.3} parent=107 // loop_exit
                  _
              $region108: #{attention_forward.3} parent=92 // pred_fallthru
                _
              // Predicated region
              $region116: #{attention_forward.3} parent=92 // pred_check
                _
              $region117: #{attention_forward.3} parent=92 // pred_check_branch
                %748 = sbr.rel target = $region119
              $region118: #{attention_forward.3} parent=92 // pred_region
                _
              $region119: #{attention_forward.3} parent=92 // pred_fallthru
                _
            $region93: #{attention_forward.3} parent=88 // pred_fallthru
              _
            // Predicated region
            $region94: #{attention_forward.3} parent=88 // pred_check
              _
            $region95: #{attention_forward.3} parent=88 // pred_check_branch
              %663 = sbr.rel target = $region97
            $region96: #{attention_forward.3} parent=88 // pred_region
              loop: start=0, step=1, limit=1
              $region98: #{attention_forward.3} parent=96 // loop_pre_header
                _
              $region99: #{attention_forward.3} parent=96 // loop_header
                %s666 = sphi 0, %s670
                %p667 = scmp.ge.s32.totalorder %s666, 1
                %s671 = sphi %s649, %s649
                %s672 = sphi %s657, %s657
              $region100: #{attention_forward.3} parent=96 // loop_header_branch
                %669 = sbr.rel (%p667) target = $region104
              $region101: #{attention_forward.3} parent=96 // loop_body
                %v673 = vld [vmem:[%s671] sm:$0xff]
                %674 = vst [vmem:[%s672] sm:$0xff] %v673
                %v675 = vld [vmem:[%s671 + $0x8] sm:$0xff]
                %676 = vst [vmem:[%s672 + $0x60] sm:$0xff] %v675
                %v677 = vld [vmem:[%s671 + $0x10] sm:$0xff]
                %678 = vst [vmem:[%s672 + $0xc0] sm:$0xff] %v677
                %v679 = vld [vmem:[%s671 + $0x18] sm:$0xff]
                %680 = vst [vmem:[%s672 + $0x120] sm:$0xff] %v679
                %v681 = vld [vmem:[%s671 + $0x20] sm:$0xff]
                %682 = vst [vmem:[%s672 + $0x180] sm:$0xff] %v681
                %v683 = vld [vmem:[%s671 + $0x28] sm:$0xff]
                %684 = vst [vmem:[%s672 + $0x1e0] sm:$0xff] %v683
                %v685 = vld [vmem:[%s671 + $0x30] sm:$0xff]
                %686 = vst [vmem:[%s672 + $0x240] sm:$0xff] %v685
                %v687 = vld [vmem:[%s671 + $0x38] sm:$0xff]
                %688 = vst [vmem:[%s672 + $0x2a0] sm:$0xff] %v687
                %v689 = vld [vmem:[%s671 + $0x40] sm:$0xff]
                %690 = vst [vmem:[%s672 + $0x300] sm:$0xff] %v689
                %v691 = vld [vmem:[%s671 + $0x48] sm:$0xff]
                %692 = vst [vmem:[%s672 + $0x360] sm:$0xff] %v691
                %v693 = vld [vmem:[%s671 + $0x50] sm:$0xff]
                %694 = vst [vmem:[%s672 + $0x3c0] sm:$0xff] %v693
                %v695 = vld [vmem:[%s671 + $0x58] sm:$0xff]
                %696 = vst [vmem:[%s672 + $0x420] sm:$0xff] %v695
                %v697 = vld [vmem:[%s671 + $0x60] sm:$0xff]
                %698 = vst [vmem:[%s672 + $0x480] sm:$0xff] %v697
                %v699 = vld [vmem:[%s671 + $0x68] sm:$0xff]
                %700 = vst [vmem:[%s672 + $0x4e0] sm:$0xff] %v699
                %v701 = vld [vmem:[%s671 + $0x70] sm:$0xff]
                %702 = vst [vmem:[%s672 + $0x540] sm:$0xff] %v701
                %v703 = vld [vmem:[%s671 + $0x78] sm:$0xff]
                %704 = vst [vmem:[%s672 + $0x5a0] sm:$0xff] %v703
              $region102: #{attention_forward.3} parent=96 // loop_footer
                %s670 = sadd.s32 1, %s666
              $region103: #{attention_forward.3} parent=96 // loop_footer_branch
                %665 = sbr.rel target = $region99
              $region104: #{attention_forward.3} parent=96 // loop_exit
                _
            $region97: #{attention_forward.3} parent=88 // pred_fallthru
              _
          $region89: #{attention_forward.3} parent=84 // pred_fallthru
            _
          %749 = vnop
        $region85: #{attention_forward.3} parent=68 // pred_fallthru
          _
      $region69: #{attention_forward.3} parent=5 // pred_fallthru
        _
      %p750 = scmp.le.s32.totalorder 2, %s9
      // Predicated region
      $region120: #{attention_forward.3} parent=5 // pred_check
        %p751 = pneg %p750
      $region121: #{attention_forward.3} parent=5 // pred_check_branch
        %753 = sbr.rel (%p751) target = $region123
      $region122: #{attention_forward.3} parent=5 // pred_region
        %s754 = ssub.s32 %s9, 2
        // Predicated region
        $region124: #{attention_forward.3} parent=122 // pred_check
          %p755 = pneg %p141
        $region125: #{attention_forward.3} parent=122 // pred_check_branch
          %757 = sbr.rel (%p755) target = $region127
        $region126: #{attention_forward.3} parent=122 // pred_region
          %s758 = sand.u32 %s126, 1
          %s759 = sand.u32 %s126, 1
          %s760 = smul.addr %s759, 128
          %s761 = scalar_lea.vmem [#allocation4], %s760
        $region127: #{attention_forward.3} parent=122 // pred_fallthru
          _
      $region123: #{attention_forward.3} parent=5 // pred_fallthru
        _
    $region6: #{attention_forward.3} parent=1 // loop_footer
      %s13 = sadd.s32 1, %s9
    $region7: #{attention_forward.3} parent=1 // loop_footer_branch
      %8 = sbr.rel target = $region3
    $region8: #{attention_forward.3} parent=1 // loop_exit
      _

// kernel: attention_forward.4
$region0: #{attention_forward.4}
  #allocation0 [shape = 'u32[]', space=smem, size = 0x4, offset = 0x4, fixed_abs, tag = 'smem constant byte address 0x4 - core index']
  #allocation1 [shape = 'u32[144,128]{1,0:T(1,128)}', space=vmem, size = 0x12000, scoped, tag = 'internal scratch']
  #allocation2 [shape = 'f32[128,1]{1,0:T(8,128)}', space=vmem, size = 0x10000, scoped, tag = 'scratch operand']
  #allocation3 [shape = 'f32[128,1]{1,0:T(8,128)}', space=vmem, size = 0x10000, scoped, tag = 'scratch operand']
  #allocation4 [shape = 'f32[128,64]{1,0:T(8,128)}', space=vmem, size = 0x10000, scoped, tag = 'scratch operand']
  %s0 = inlined_call_operand.vmem [shape: bf16[16,128,64], index: 0, kind: input, shape index: {}]
  %s1 = inlined_call_operand.vmem [shape: bf16[16,128,64], index: 1, kind: input, shape index: {}]
  %s2 = inlined_call_operand.vmem [shape: bf16[16,128,64], index: 2, kind: input, shape index: {}]
  %s3 = inlined_call_operand.vmem [shape: f32[16,128,64], index: 3, kind: output, shape index: {}]
  %s4 = sld [smem:[#allocation0]]
  $region53: #{attention_forward.4} parent=0
    _
  %s6 = ssub.s32 1, %s4
  %s7 = scalar_select 0, %s6, %s4
  loop: start=0, step=1, limit=18
  $region2: #{attention_forward.4} parent=0 // loop_pre_header
    _
  $region3: #{attention_forward.4} parent=0 // loop_header
    %s9 = sphi 0, %s13
    %p10 = scmp.ge.s32.totalorder %s9, 18
    %s16 = sphi 0, %s35
    %s17 = sphi 0, %s31
    %s18 = sphi 0, %s27
    %s19 = sphi 0, %s16
    %s20 = sphi 0, %s17
    %s21 = sphi 0, %s18
    %s22 = sphi 0, %s19
    %s23 = sphi 0, %s20
    %s24 = sphi 0, %s21
    %s40 = sphi 0, %s42
    %s43 = sphi 0, %s40
    %s44 = sphi 0, %s43
    %s60 = sphi 0, %s44
    %s68 = sphi 0, %s70
    %s71 = sphi 0, %s68
    %s72 = sphi 0, %s71
    %s88 = sphi 0, %s72
    %s96 = sphi 0, %s98
    %s99 = sphi 0, %s96
    %s100 = sphi 0, %s99
    %s116 = sphi 0, %s100
    %s124 = sphi 0, %s126
    %s127 = sphi 0, %s124
    %s128 = sphi 0, %s127
    %s144 = sphi 0, %s128
  $region4: #{attention_forward.4} parent=0 // loop_header_branch
    %12 = sbr.rel (%p10) target = $region8
  $region5: #{attention_forward.4} parent=0 // loop_body
    %s14 = ssub.s32 %s9, 1
    %s15 = ssub.s32 %s9, 2
    %s25 = sadd.s32 1, %s18
    %p26 = scmp.ge.s32.totalorder %s25, 1
    %s27 = scalar_select %p26, 0, %s25
    %s28 = sadd.s32 1, %s17
    %s29 = scalar_select %p26, %s28, %s17
    %p30 = scmp.ge.s32.totalorder %s29, 1
    %s31 = scalar_select %p30, 0, %s29
    %s32 = sadd.s32 1, %s16
    %s33 = scalar_select %p30, %s32, %s16
    %p34 = scmp.ge.s32.totalorder %s33, 16
    %s35 = scalar_select %p34, 0, %s33
    %s36 = ssub.s32 %s16, %s35
    %s37 = ssub.s32 %s17, %s31
    %s38 = sor.u32 %s36, %s37
    %p39 = scmp.eq.s32.totalorder %s38, 0
    %s41 = sadd.s32 %s40, 1
    %s42 = scalar_select %p39, %s40, %s41
    %p45 = pneg %p39
    %p46 = scmp.eq.s32.totalorder %s9, 15
    %p47 = por %p45, %p46
    %p48 = scmp.ne.s32.totalorder %s40, %s43
    %p49 = scmp.eq.s32.totalorder %s9, 0
    %p50 = por %p48, %p49
    %p51 = scmp.ne.s32.totalorder %s40, %s43
    %p52 = scmp.eq.s32.totalorder %s14, 15
    %p53 = por %p51, %p52
    %p54 = scmp.ne.s32.totalorder %s43, %s44
    %p55 = scmp.eq.s32.totalorder %s14, 0
    %p56 = por %p54, %p55
    %p57 = scmp.ne.s32.totalorder %s43, %s44
    %p58 = scmp.eq.s32.totalorder %s15, 15
    %p59 = por %p57, %p58
    %p61 = scmp.ne.s32.totalorder %s44, %s60
    %p62 = scmp.eq.s32.totalorder %s15, 0
    %p63 = por %p61, %p62
    %s64 = ssub.s32 %s16, %s35
    %s65 = ssub.s32 %s18, %s27
    %s66 = sor.u32 %s64, %s65
    %p67 = scmp.eq.s32.totalorder %s66, 0
    %s69 = sadd.s32 %s68, 1
    %s70 = scalar_select %p67, %s68, %s69
    %p73 = pneg %p67
    %p74 = scmp.eq.s32.totalorder %s9, 15
    %p75 = por %p73, %p74
    %p76 = scmp.ne.s32.totalorder %s68, %s71
    %p77 = scmp.eq.s32.totalorder %s9, 0
    %p78 = por %p76, %p77
    %p79 = scmp.ne.s32.totalorder %s68, %s71
    %p80 = scmp.eq.s32.totalorder %s14, 15
    %p81 = por %p79, %p80
    %p82 = scmp.ne.s32.totalorder %s71, %s72
    %p83 = scmp.eq.s32.totalorder %s14, 0
    %p84 = por %p82, %p83
    %p85 = scmp.ne.s32.totalorder %s71, %s72
    %p86 = scmp.eq.s32.totalorder %s15, 15
    %p87 = por %p85, %p86
    %p89 = scmp.ne.s32.totalorder %s72, %s88
    %p90 = scmp.eq.s32.totalorder %s15, 0
    %p91 = por %p89, %p90
    %s92 = ssub.s32 %s16, %s35
    %s93 = ssub.s32 %s18, %s27
    %s94 = sor.u32 %s92, %s93
    %p95 = scmp.eq.s32.totalorder %s94, 0
    %s97 = sadd.s32 %s96, 1
    %s98 = scalar_select %p95, %s96, %s97
    %p101 = pneg %p95
    %p102 = scmp.eq.s32.totalorder %s9, 15
    %p103 = por %p101, %p102
    %p104 = scmp.ne.s32.totalorder %s96, %s99
    %p105 = scmp.eq.s32.totalorder %s9, 0
    %p106 = por %p104, %p105
    %p107 = scmp.ne.s32.totalorder %s96, %s99
    %p108 = scmp.eq.s32.totalorder %s14, 15
    %p109 = por %p107, %p108
    %p110 = scmp.ne.s32.totalorder %s99, %s100
    %p111 = scmp.eq.s32.totalorder %s14, 0
    %p112 = por %p110, %p111
    %p113 = scmp.ne.s32.totalorder %s99, %s100
    %p114 = scmp.eq.s32.totalorder %s15, 15
    %p115 = por %p113, %p114
    %p117 = scmp.ne.s32.totalorder %s100, %s116
    %p118 = scmp.eq.s32.totalorder %s15, 0
    %p119 = por %p117, %p118
    %s120 = ssub.s32 %s16, %s35
    %s121 = ssub.s32 %s17, %s31
    %s122 = sor.u32 %s120, %s121
    %p123 = scmp.eq.s32.totalorder %s122, 0
    %s125 = sadd.s32 %s124, 1
    %s126 = scalar_select %p123, %s124, %s125
    %p129 = pneg %p123
    %p130 = scmp.eq.s32.totalorder %s9, 15
    %p131 = por %p129, %p130
    %p132 = scmp.ne.s32.totalorder %s124, %s127
    %p133 = scmp.eq.s32.totalorder %s9, 0
    %p134 = por %p132, %p133
    %p135 = scmp.ne.s32.totalorder %s124, %s127
    %p136 = scmp.eq.s32.totalorder %s14, 15
    %p137 = por %p135, %p136
    %p138 = scmp.ne.s32.totalorder %s127, %s128
    %p139 = scmp.eq.s32.totalorder %s14, 0
    %p140 = por %p138, %p139
    %p141 = scmp.ne.s32.totalorder %s127, %s128
    %p142 = scmp.eq.s32.totalorder %s15, 15
    %p143 = por %p141, %p142
    %p145 = scmp.ne.s32.totalorder %s128, %s144
    %p146 = scmp.eq.s32.totalorder %s15, 0
    %p147 = por %p145, %p146
    %p148 = scmp.le.s32.totalorder 1, %s9
    %p149 = scmp.lt.s32.totalorder %s9, 17
    %p150 = pnand %p148, %p149
    %p151 = pneg %p150
    // Predicated region
    $region9: #{attention_forward.4} parent=5 // pred_check
      _
    $region10: #{attention_forward.4} parent=5 // pred_check_branch
      %153 = sbr.rel (%p150) target = $region12
    $region11: #{attention_forward.4} parent=5 // pred_region
      %s154 = ssub.s32 %s9, 1
    $region12: #{attention_forward.4} parent=5 // pred_fallthru
      _
    %p155 = scmp.lt.s32.totalorder %s9, 16
    // Predicated region
    $region13: #{attention_forward.4} parent=5 // pred_check
      %p156 = pneg %p155
    $region14: #{attention_forward.4} parent=5 // pred_check_branch
      %158 = sbr.rel (%p156) target = $region16
    $region15: #{attention_forward.4} parent=5 // pred_region
      // Predicated region
      $region17: #{attention_forward.4} parent=15 // pred_check
        %p159 = pneg %p50
      $region18: #{attention_forward.4} parent=15 // pred_check_branch
        %161 = sbr.rel (%p159) target = $region20
      $region19: #{attention_forward.4} parent=15 // pred_region
        %s162 = smul.u32 16, %s17
        %p163 = scmp.lt.s32.totalorder %s16, 15
        %s164 = scalar_select %p163, %s16, 15
        %p165 = scmp.lt.s32.totalorder %s162, 15
        %s166 = scalar_select %p165, %s162, 15
        %s167 = smul.addr %s164, 16
        %s168 = sadd.s32 %s166, %s167
        %s169 = smul.addr %s168, 4
        %s170 = scalar_lea.vmem %s0, %s169
        %s171 = smul.u32 16, %s17
      $region20: #{attention_forward.4} parent=15 // pred_fallthru
        _
      // Predicated region
      $region21: #{attention_forward.4} parent=15 // pred_check
        %p172 = pneg %p78
      $region22: #{attention_forward.4} parent=15 // pred_check_branch
        %174 = sbr.rel (%p172) target = $region24
      $region23: #{attention_forward.4} parent=15 // pred_region
        %s175 = smul.u32 16, %s18
        %p176 = scmp.lt.s32.totalorder %s16, 15
        %s177 = scalar_select %p176, %s16, 15
        %p178 = scmp.lt.s32.totalorder %s175, 15
        %s179 = scalar_select %p178, %s175, 15
        %s180 = smul.addr %s177, 16
        %s181 = sadd.s32 %s179, %s180
        %s182 = smul.addr %s181, 4
        %s183 = scalar_lea.vmem %s1, %s182
        %s184 = smul.u32 16, %s18
      $region24: #{attention_forward.4} parent=15 // pred_fallthru
        _
      // Predicated region
      $region25: #{attention_forward.4} parent=15 // pred_check
        %p185 = pneg %p106
      $region26: #{attention_forward.4} parent=15 // pred_check_branch
        %187 = sbr.rel (%p185) target = $region28
      $region27: #{attention_forward.4} parent=15 // pred_region
        %s188 = smul.u32 16, %s18
        %p189 = scmp.lt.s32.totalorder %s16, 15
        %s190 = scalar_select %p189, %s16, 15
        %p191 = scmp.lt.s32.totalorder %s188, 15
        %s192 = scalar_select %p191, %s188, 15
        %s193 = smul.addr %s190, 16
        %s194 = sadd.s32 %s192, %s193
        %s195 = smul.addr %s194, 4
        %s196 = scalar_lea.vmem %s2, %s195
        %s197 = smul.u32 16, %s18
      $region28: #{attention_forward.4} parent=15 // pred_fallthru
        _
    $region16: #{attention_forward.4} parent=5 // pred_fallthru
      _
    %p198 = scmp.le.s32.totalorder 1, %s9
    %p199 = scmp.lt.s32.totalorder %s9, 17
    %p200 = pnand %p198, %p199
    %p201 = pneg %p200
    // Predicated region
    $region29: #{attention_forward.4} parent=5 // pred_check
      _
    $region30: #{attention_forward.4} parent=5 // pred_check_branch
      %203 = sbr.rel (%p200) target = $region32
    $region31: #{attention_forward.4} parent=5 // pred_region
      %s204 = ssub.s32 %s9, 1
      %s205 = smul.u32 16, %s20
      %p206 = scmp.lt.s32.totalorder %s19, 15
      %s207 = scalar_select %p206, %s19, 15
      %p208 = scmp.lt.s32.totalorder %s205, 15
      %s209 = scalar_select %p208, %s205, 15
      %s210 = smul.addr %s207, 16
      %s211 = sadd.s32 %s209, %s210
      %s212 = smul.addr %s211, 4
      %s213 = scalar_lea.vmem %s0, %s212
      %p214 = pneg %p56
      %p215 = pneg %p53
      %s216 = smul.u32 16, %s21
      %p217 = scmp.lt.s32.totalorder %s19, 15
      %s218 = scalar_select %p217, %s19, 15
      %p219 = scmp.lt.s32.totalorder %s216, 15
      %s220 = scalar_select %p219, %s216, 15
      %s221 = smul.addr %s218, 16
      %s222 = sadd.s32 %s220, %s221
      %s223 = smul.addr %s222, 4
      %s224 = scalar_lea.vmem %s1, %s223
      %p225 = pneg %p84
      %p226 = pneg %p81
      %s227 = smul.u32 16, %s21
      %p228 = scmp.lt.s32.totalorder %s19, 15
      %s229 = scalar_select %p228, %s19, 15
      %p230 = scmp.lt.s32.totalorder %s227, 15
      %s231 = scalar_select %p230, %s227, 15
      %s232 = smul.addr %s229, 16
      %s233 = sadd.s32 %s231, %s232
      %s234 = smul.addr %s233, 4
      %s235 = scalar_lea.vmem %s2, %s234
      %p236 = pneg %p112
      %p237 = pneg %p109
      %p238 = pneg %p140
      %p239 = pneg %p137
      %s240 = smul.u32 16, %s20
      %p241 = scmp.lt.s32.totalorder %s19, 15
      %s242 = scalar_select %p241, %s19, 15
      %p243 = scmp.lt.s32.totalorder %s240, 15
      %s244 = scalar_select %p243, %s240, 15
      %s245 = smul.addr %s242, 16
      %s246 = sadd.s32 %s244, %s245
      %s247 = smul.addr %s246, 8
      %s248 = scalar_lea.vmem %s3, %s247
      %s249 = smul.u32 16, %s20
      %p250 = scmp.lt.s32.totalorder %s19, 15
      %s251 = scalar_select %p250, %s19, 15
      %p252 = scmp.lt.s32.totalorder %s249, 15
      %s253 = scalar_select %p252, %s249, 15
      %s254 = smul.addr %s251, 16
      %s255 = sadd.s32 %s253, %s254
      %s256 = smul.addr %s255, 4
      %s257 = scalar_lea.vmem %s0, %s256
      %s258 = smul.u32 16, %s20
      %s259 = smul.u32 16, %s21
      %p260 = scmp.lt.s32.totalorder %s19, 15
      %s261 = scalar_select %p260, %s19, 15
      %p262 = scmp.lt.s32.totalorder %s259, 15
      %s263 = scalar_select %p262, %s259, 15
      %s264 = smul.addr %s261, 16
      %s265 = sadd.s32 %s263, %s264
      %s266 = smul.addr %s265, 4
      %s267 = scalar_lea.vmem %s1, %s266
      %s268 = smul.u32 16, %s21
      %s269 = smul.u32 16, %s21
      %p270 = scmp.lt.s32.totalorder %s19, 15
      %s271 = scalar_select %p270, %s19, 15
      %p272 = scmp.lt.s32.totalorder %s269, 15
      %s273 = scalar_select %p272, %s269, 15
      %s274 = smul.addr %s271, 16
      %s275 = sadd.s32 %s273, %s274
      %s276 = smul.addr %s275, 4
      %s277 = scalar_lea.vmem %s2, %s276
      %s278 = smul.u32 16, %s21
      %s279 = smul.u32 16, %s20
      %p280 = scmp.lt.s32.totalorder %s19, 15
      %s281 = scalar_select %p280, %s19, 15
      %p282 = scmp.lt.s32.totalorder %s279, 15
      %s283 = scalar_select %p282, %s279, 15
      %s284 = smul.addr %s281, 16
      %s285 = sadd.s32 %s283, %s284
      %s286 = smul.addr %s285, 8
      %s287 = scalar_lea.vmem %s3, %s286
      %s288 = smul.u32 16, %s20
      %p290 = scmp.eq.s32.totalorder %s21, 0
      // Predicated region
      $region33: #{attention_forward.4} parent=31 // pred_check
        %p291 = pneg %p290
      $region34: #{attention_forward.4} parent=31 // pred_check_branch
        %293 = sbr.rel (%p291) target = $region36
      $region35: #{attention_forward.4} parent=31 // pred_region
        %vm294 = vcmask 7168
        %295 = vst.msk [vmem:[#allocation2] sm:$0xff] %vm294, -inf
        %296 = vst.msk [vmem:[#allocation2 + $0x8] sm:$0xff] %vm294, -inf
        %297 = vst.msk [vmem:[#allocation2 + $0x10] sm:$0xff] %vm294, -inf
        %298 = vst.msk [vmem:[#allocation2 + $0x18] sm:$0xff] %vm294, -inf
        %299 = vst.msk [vmem:[#allocation2 + $0x20] sm:$0xff] %vm294, -inf
        %300 = vst.msk [vmem:[#allocation2 + $0x28] sm:$0xff] %vm294, -inf
        %301 = vst.msk [vmem:[#allocation2 + $0x30] sm:$0xff] %vm294, -inf
        %302 = vst.msk [vmem:[#allocation2 + $0x38] sm:$0xff] %vm294, -inf
        %303 = vst.msk [vmem:[#allocation2 + $0x40] sm:$0xff] %vm294, -inf
        %304 = vst.msk [vmem:[#allocation2 + $0x48] sm:$0xff] %vm294, -inf
        %305 = vst.msk [vmem:[#allocation2 + $0x50] sm:$0xff] %vm294, -inf
        %306 = vst.msk [vmem:[#allocation2 + $0x58] sm:$0xff] %vm294, -inf
        %307 = vst.msk [vmem:[#allocation2 + $0x60] sm:$0xff] %vm294, -inf
        %308 = vst.msk [vmem:[#allocation2 + $0x68] sm:$0xff] %vm294, -inf
        %309 = vst.msk [vmem:[#allocation2 + $0x70] sm:$0xff] %vm294, -inf
        %310 = vst.msk [vmem:[#allocation2 + $0x78] sm:$0xff] %vm294, -inf
        %311 = vst.msk [vmem:[#allocation3] sm:$0xff] %vm294, 0.0
        %312 = vst.msk [vmem:[#allocation3 + $0x8] sm:$0xff] %vm294, 0.0
        %313 = vst.msk [vmem:[#allocation3 + $0x10] sm:$0xff] %vm294, 0.0
        %314 = vst.msk [vmem:[#allocation3 + $0x18] sm:$0xff] %vm294, 0.0
        %315 = vst.msk [vmem:[#allocation3 + $0x20] sm:$0xff] %vm294, 0.0
        %316 = vst.msk [vmem:[#allocation3 + $0x28] sm:$0xff] %vm294, 0.0
        %317 = vst.msk [vmem:[#allocation3 + $0x30] sm:$0xff] %vm294, 0.0
        %318 = vst.msk [vmem:[#allocation3 + $0x38] sm:$0xff] %vm294, 0.0
        %319 = vst.msk [vmem:[#allocation3 + $0x40] sm:$0xff] %vm294, 0.0
        %320 = vst.msk [vmem:[#allocation3 + $0x48] sm:$0xff] %vm294, 0.0
        %321 = vst.msk [vmem:[#allocation3 + $0x50] sm:$0xff] %vm294, 0.0
        %322 = vst.msk [vmem:[#allocation3 + $0x58] sm:$0xff] %vm294, 0.0
        %323 = vst.msk [vmem:[#allocation3 + $0x60] sm:$0xff] %vm294, 0.0
        %324 = vst.msk [vmem:[#allocation3 + $0x68] sm:$0xff] %vm294, 0.0
        %325 = vst.msk [vmem:[#allocation3 + $0x70] sm:$0xff] %vm294, 0.0
        %326 = vst.msk [vmem:[#allocation3 + $0x78] sm:$0xff] %vm294, 0.0
        %vm327 = vcmask 523264
        %328 = vst.msk [vmem:[#allocation4] sm:$0xff] %vm327, 0.0
        %329 = vst.msk [vmem:[#allocation4 + $0x8] sm:$0xff] %vm327, 0.0
        %330 = vst.msk [vmem:[#allocation4 + $0x10] sm:$0xff] %vm327, 0.0
        %331 = vst.msk [vmem:[#allocation4 + $0x18] sm:$0xff] %vm327, 0.0
        %332 = vst.msk [vmem:[#allocation4 + $0x20] sm:$0xff] %vm327, 0.0
        %333 = vst.msk [vmem:[#allocation4 + $0x28] sm:$0xff] %vm327, 0.0
        %334 = vst.msk [vmem:[#allocation4 + $0x30] sm:$0xff] %vm327, 0.0
        %335 = vst.msk [vmem:[#allocation4 + $0x38] sm:$0xff] %vm327, 0.0
        %336 = vst.msk [vmem:[#allocation4 + $0x40] sm:$0xff] %vm327, 0.0
        %337 = vst.msk [vmem:[#allocation4 + $0x48] sm:$0xff] %vm327, 0.0
        %338 = vst.msk [vmem:[#allocation4 + $0x50] sm:$0xff] %vm327, 0.0
        %339 = vst.msk [vmem:[#allocation4 + $0x58] sm:$0xff] %vm327, 0.0
        %340 = vst.msk [vmem:[#allocation4 + $0x60] sm:$0xff] %vm327, 0.0
        %341 = vst.msk [vmem:[#allocation4 + $0x68] sm:$0xff] %vm327, 0.0
        %342 = vst.msk [vmem:[#allocation4 + $0x70] sm:$0xff] %vm327, 0.0
        %343 = vst.msk [vmem:[#allocation4 + $0x78] sm:$0xff] %vm327, 0.0
      $region36: #{attention_forward.4} parent=31 // pred_fallthru
        _
      %v344 = vld [vmem:[%s257] sm:$0xf]
      %v345 = vld [vmem:[%s257 + $0x4] sm:$0xf]
      %v346 = vld [vmem:[%s257 + $0x8] sm:$0xf]
      %v347 = vld [vmem:[%s257 + $0xc] sm:$0xf]
      %v348 = vld [vmem:[%s257 + $0x10] sm:$0xf]
      %v349 = vld [vmem:[%s257 + $0x14] sm:$0xf]
      %v350 = vld [vmem:[%s257 + $0x18] sm:$0xf]
      %v351 = vld [vmem:[%s257 + $0x1c] sm:$0xf]
      %v352 = vld [vmem:[%s257 + $0x20] sm:$0xf]
      %v353 = vld [vmem:[%s257 + $0x24] sm:$0xf]
      %v354 = vld [vmem:[%s257 + $0x28] sm:$0xf]
      %v355 = vld [vmem:[%s257 + $0x2c] sm:$0xf]
      %v356 = vld [vmem:[%s257 + $0x30] sm:$0xf]
      %v357 = vld [vmem:[%s257 + $0x34] sm:$0xf]
      %v358 = vld [vmem:[%s257 + $0x38] sm:$0xf]
      %v359 = vld [vmem:[%s257 + $0x3c] sm:$0xf]
      %v360 = vld [vmem:[%s267] sm:$0xf]
      %v361 = vld [vmem:[%s267 + $0x4] sm:$0xf]
      %v362 = vld [vmem:[%s267 + $0x8] sm:$0xf]
      %v363 = vld [vmem:[%s267 + $0xc] sm:$0xf]
      %v364 = vld [vmem:[%s267 + $0x10] sm:$0xf]
      %v365 = vld [vmem:[%s267 + $0x14] sm:$0xf]
      %v366 = vld [vmem:[%s267 + $0x18] sm:$0xf]
      %v367 = vld [vmem:[%s267 + $0x1c] sm:$0xf]
      %v368 = vld [vmem:[%s267 + $0x20] sm:$0xf]
      %v369 = vld [vmem:[%s267 + $0x24] sm:$0xf]
      %v370 = vld [vmem:[%s267 + $0x28] sm:$0xf]
      %v371 = vld [vmem:[%s267 + $0x2c] sm:$0xf]
      %v372 = vld [vmem:[%s267 + $0x30] sm:$0xf]
      %v373 = vld [vmem:[%s267 + $0x34] sm:$0xf]
      %v374 = vld [vmem:[%s267 + $0x38] sm:$0xf]
      %v375 = vld [vmem:[%s267 + $0x3c] sm:$0xf]
      %v376 = vld [vmem:[%s277] sm:$0xf]
      %v377 = vld [vmem:[%s277 + $0x4] sm:$0xf]
      %v378 = vld [vmem:[%s277 + $0x8] sm:$0xf]
      %v379 = vld [vmem:[%s277 + $0xc] sm:$0xf]
      %v380 = vld [vmem:[%s277 + $0x10] sm:$0xf]
      %v381 = vld [vmem:[%s277 + $0x14] sm:$0xf]
      %v382 = vld [vmem:[%s277 + $0x18] sm:$0xf]
      %v383 = vld [vmem:[%s277 + $0x1c] sm:$0xf]
      %v384 = vld [vmem:[%s277 + $0x20] sm:$0xf]
      %v385 = vld [vmem:[%s277 + $0x24] sm:$0xf]
      %v386 = vld [vmem:[%s277 + $0x28] sm:$0xf]
      %v387 = vld [vmem:[%s277 + $0x2c] sm:$0xf]
      %v388 = vld [vmem:[%s277 + $0x30] sm:$0xf]
      %v389 = vld [vmem:[%s277 + $0x34] sm:$0xf]
      %v390 = vld [vmem:[%s277 + $0x38] sm:$0xf]
      %v391 = vld [vmem:[%s277 + $0x3c] sm:$0xf]
      %v408 = vunpack.c.l.b16 %v344
      %v409 = vunpack.c.l.b16 %v345
      %v410 = vunpack.c.l.b16 %v346
      %v411 = vunpack.c.l.b16 %v347
      %v412 = vunpack.c.l.b16 %v348
      %v413 = vunpack.c.l.b16 %v349
      %v414 = vunpack.c.l.b16 %v350
      %v415 = vunpack.c.l.b16 %v351
      %v416 = vunpack.c.l.b16 %v352
      %v417 = vunpack.c.l.b16 %v353
      %v418 = vunpack.c.l.b16 %v354
      %v419 = vunpack.c.l.b16 %v355
      %v420 = vunpack.c.l.b16 %v356
      %v421 = vunpack.c.l.b16 %v357
      %v422 = vunpack.c.l.b16 %v358
      %v423 = vunpack.c.l.b16 %v359
      %v424 = vpack.c.b16 %v409, %v408
      %v425 = vpack.c.b16 %v411, %v410
      %v426 = vpack.c.b16 %v413, %v412
      %v427 = vpack.c.b16 %v415, %v414
      %v428 = vpack.c.b16 %v417, %v416
      %v429 = vpack.c.b16 %v419, %v418
      %v430 = vpack.c.b16 %v421, %v420
      %v431 = vpack.c.b16 %v423, %v422
      %v448 = vunpack.c.l.b16 %v360
      %v449 = vunpack.c.l.b16 %v361
      %v450 = vunpack.c.l.b16 %v362
      %v451 = vunpack.c.l.b16 %v363
      %v452 = vunpack.c.l.b16 %v364
      %v453 = vunpack.c.l.b16 %v365
      %v454 = vunpack.c.l.b16 %v366
      %v455 = vunpack.c.l.b16 %v367
      %v456 = vunpack.c.l.b16 %v368
      %v457 = vunpack.c.l.b16 %v369
      %v458 = vunpack.c.l.b16 %v370
      %v459 = vunpack.c.l.b16 %v371
      %v460 = vunpack.c.l.b16 %v372
      %v461 = vunpack.c.l.b16 %v373
      %v462 = vunpack.c.l.b16 %v374
      %v463 = vunpack.c.l.b16 %v375
      %v464 = vpack.c.b16 %v449, %v448
      %v465 = vpack.c.b16 %v451, %v450
      %v466 = vpack.c.b16 %v453, %v452
      %v467 = vpack.c.b16 %v455, %v454
      %v468 = vpack.c.b16 %v457, %v456
      %v469 = vpack.c.b16 %v459, %v458
      %v470 = vpack.c.b16 %v461, %v460
      %v471 = vpack.c.b16 %v463, %v462
      %vm472 = vcmask 523264
      %v474 = vsel %vm472, %v424, 0
      %v477 = vsel %vm472, %v425, 0
      %v480 = vsel %vm472, %v426, 0
      %v483 = vsel %vm472, %v427, 0
      %v486 = vsel %vm472, %v428, 0
      %v489 = vsel %vm472, %v429, 0
      %v492 = vsel %vm472, %v430, 0
      %v495 = vsel %vm472, %v431, 0
      %v498 = vsel %vm472, %v464, 0
      %v501 = vsel %vm472, %v465, 0
      %v504 = vsel %vm472, %v466, 0
      %v507 = vsel %vm472, %v467, 0
      %v510 = vsel %vm472, %v468, 0
      %v513 = vsel %vm472, %v469, 0
      %v516 = vsel %vm472, %v470, 0
      %v519 = vsel %vm472, %v471, 0
      %521 = vmatprep.subr.bf16.mxu0 0
      %522 = vmatpush1.bf16.xpose.msra.mxu0 %v498
      %523 = vmatprep.subr.bf16.mxu0 0
      %524 = vmatpush1.bf16.xpose.msra.mxu0 %v501
      %525 = vmatprep.subr.bf16.mxu0 0
      %526 = vmatpush1.bf16.xpose.msra.mxu0 %v504
      %527 = vmatprep.subr.bf16.mxu0 0
      %528 = vmatpush1.bf16.xpose.msra.mxu0 %v507
      %529 = vmatprep.subr.bf16.mxu0 0
      %530 = vmatpush1.bf16.xpose.msra.mxu0 %v510
      %531 = vmatprep.subr.bf16.mxu0 0
      %532 = vmatpush1.bf16.xpose.msra.mxu0 %v513
      %533 = vmatprep.subr.bf16.mxu0 0
      %534 = vmatpush1.bf16.xpose.msra.mxu0 %v516
      %535 = vmatprep.subr.bf16.mxu0 0
      %536 = vmatpush1.bf16.xpose.msra.mxu0 %v519
      %537 = vmatprep.subr.bf16.mxu0 0
      %538 = vmatpush1.bf16.xpose.msra.mxu0 0
      %539 = vmatprep.subr.bf16.mxu0 0
      %540 = vmatpush1.bf16.xpose.msra.mxu0 0
      %541 = vmatprep.subr.bf16.mxu0 0
      %542 = vmatpush1.bf16.xpose.msra.mxu0 0
      %543 = vmatprep.subr.bf16.mxu0 0
      %544 = vmatpush1.bf16.xpose.msra.mxu0 0
      %545 = vmatprep.subr.bf16.mxu0 0
      %546 = vmatpush1.bf16.xpose.msra.mxu0 0
      %547 = vmatprep.subr.bf16.mxu0 0
      %548 = vmatpush1.bf16.xpose.msra.mxu0 0
      %549 = vmatprep.subr.bf16.mxu0 0
      %550 = vmatpush1.bf16.xpose.msra.mxu0 0
      %551 = vmatprep.subr.bf16.mxu0 0
      %552 = vmatpush1.bf16.xpose.msra.mxu0 0
      %553 = vmatprep.mubr.bf16.mxu0 0
      %554 = vmatmul.mubr.bf16.gmra.mrb[0].mxu0 %v474
      %v555 = vpop.f32.mrb[0].mxu0
      %v556 = vadd.f32 0.0, %v555
      %v557 = vpop.f32.mrb[0].mxu0
      %v558 = vpop.f32.mrb[0].mxu0
      %v559 = vadd.f32 0.0, %v558
      %v560 = vpop.f32.mrb[0].mxu0
      %561 = vmatprep.mubr.bf16.mxu0 0
      %562 = vmatmul.mubr.bf16.gmra.mrb[0].mxu0 %v477
      %v563 = vpop.f32.mrb[0].mxu0
      %v564 = vadd.f32 0.0, %v563
      %v565 = vpop.f32.mrb[0].mxu0
      %v566 = vpop.f32.mrb[0].mxu0
      %v567 = vadd.f32 0.0, %v566
      %v568 = vpop.f32.mrb[0].mxu0
      %569 = vmatprep.mubr.bf16.mxu0 0
      %570 = vmatmul.mubr.bf16.gmra.mrb[0].mxu0 %v480
      %v571 = vpop.f32.mrb[0].mxu0
      %v572 = vadd.f32 0.0, %v571
      %v573 = vpop.f32.mrb[0].mxu0
      %v574 = vpop.f32.mrb[0].mxu0
      %v575 = vadd.f32 0.0, %v574
      %v576 = vpop.f32.mrb[0].mxu0
      %577 = vmatprep.mubr.bf16.mxu0 0
      %578 = vmatmul.mubr.bf16.gmra.mrb[0].mxu0 %v483
      %v579 = vpop.f32.mrb[0].mxu0
      %v580 = vadd.f32 0.0, %v579
      %v581 = vpop.f32.mrb[0].mxu0
      %v582 = vpop.f32.mrb[0].mxu0
      %v583 = vadd.f32 0.0, %v582
      %v584 = vpop.f32.mrb[0].mxu0
      %585 = vmatprep.mubr.bf16.mxu0 0
      %586 = vmatmul.mubr.bf16.gmra.mrb[0].mxu0 %v486
      %v587 = vpop.f32.mrb[0].mxu0
      %v588 = vadd.f32 0.0, %v587
      %v589 = vpop.f32.mrb[0].mxu0
      %v590 = vpop.f32.mrb[0].mxu0
      %v591 = vadd.f32 0.0, %v590
      %v592 = vpop.f32.mrb[0].mxu0
      %593 = vmatprep.mubr.bf16.mxu0 0
      %594 = vmatmul.mubr.bf16.gmra.mrb[0].mxu0 %v489
      %v595 = vpop.f32.mrb[0].mxu0
      %v596 = vadd.f32 0.0, %v595
      %v597 = vpop.f32.mrb[0].mxu0
      %v598 = vpop.f32.mrb[0].mxu0
      %v599 = vadd.f32 0.0, %v598
      %v600 = vpop.f32.mrb[0].mxu0
      %601 = vmatprep.mubr.bf16.mxu0 0
      %602 = vmatmul.mubr.bf16.gmra.mrb[0].mxu0 %v492
      %v603 = vpop.f32.mrb[0].mxu0
      %v604 = vadd.f32 0.0, %v603
      %v605 = vpop.f32.mrb[0].mxu0
      %v606 = vpop.f32.mrb[0].mxu0
      %v607 = vadd.f32 0.0, %v606
      %v608 = vpop.f32.mrb[0].mxu0
      %609 = vmatprep.mubr.bf16.mxu0 0
      %610 = vmatmul.mubr.bf16.gmra.mrb[0].mxu0 %v495
      %v611 = vpop.f32.mrb[0].mxu0
      %v612 = vadd.f32 0.0, %v611
      %v613 = vpop.f32.mrb[0].mxu0
      %v614 = vpop.f32.mrb[0].mxu0
      %v615 = vadd.f32 0.0, %v614
      %v616 = vpop.f32.mrb[0].mxu0
      %617 = vdwg.mxu0
      %v618 = vmul.f32 %v556, 0.125
      %v619 = vmul.f32 %v559, 0.125
      %v620 = vmul.f32 %v564, 0.125
      %v621 = vmul.f32 %v567, 0.125
      %v622 = vmul.f32 %v572, 0.125
      %v623 = vmul.f32 %v575, 0.125
      %v624 = vmul.f32 %v580, 0.125
      %v625 = vmul.f32 %v583, 0.125
      %v626 = vmul.f32 %v588, 0.125
      %v627 = vmul.f32 %v591, 0.125
      %v628 = vmul.f32 %v596, 0.125
      %v629 = vmul.f32 %v599, 0.125
      %v630 = vmul.f32 %v604, 0.125
      %v631 = vmul.f32 %v607, 0.125
      %v632 = vmul.f32 %v612, 0.125
      %v633 = vmul.f32 %v615, 0.125
      %v634 = vld [vmem:[#allocation2] sm:$0xff]
      %v635 = vld [vmem:[#allocation2 + $0x8] sm:$0xff]
      %v636 = vld [vmem:[#allocation2 + $0x10] sm:$0xff]
      %v637 = vld [vmem:[#allocation2 + $0x18] sm:$0xff]
      %v638 = vld [vmem:[#allocation2 + $0x20] sm:$0xff]
      %v639 = vld [vmem:[#allocation2 + $0x28] sm:$0xff]
      %v640 = vld [vmem:[#allocation2 + $0x30] sm:$0xff]
      %v641 = vld [vmem:[#allocation2 + $0x38] sm:$0xff]
      %v642 = vld [vmem:[#allocation2 + $0x40] sm:$0xff]
      %v643 = vld [vmem:[#allocation2 + $0x48] sm:$0xff]
      %v644 = vld [vmem:[#allocation2 + $0x50] sm:$0xff]
      %v645 = vld [vmem:[#allocation2 + $0x58] sm:$0xff]
      %v646 = vld [vmem:[#allocation2 + $0x60] sm:$0xff]
      %v647 = vld [vmem:[#allocation2 + $0x68] sm:$0xff]
      %v648 = vld [vmem:[#allocation2 + $0x70] sm:$0xff]
      %v649 = vld [vmem:[#allocation2 + $0x78] sm:$0xff]
      %650 = vmax.xlane.f32.xlu0 %v618
      %v651 = vpop.xlane.xlu0 %650
      %652 = vmax.xlane.f32.xlu0 %v619
      %v653 = vpop.xlane.xlu0 %652
      %654 = vmax.xlane.f32.xlu0 %v620
      %v655 = vpop.xlane.xlu0 %654
      %656 = vmax.xlane.f32.xlu0 %v621
      %v657 = vpop.xlane.xlu0 %656
      %658 = vmax.xlane.f32.xlu0 %v622
      %v659 = vpop.xlane.xlu0 %658
      %660 = vmax.xlane.f32.xlu0 %v623
      %v661 = vpop.xlane.xlu0 %660
      %662 = vmax.xlane.f32.xlu0 %v624
      %v663 = vpop.xlane.xlu0 %662
      %664 = vmax.xlane.f32.xlu0 %v625
      %v665 = vpop.xlane.xlu0 %664
      %666 = vmax.xlane.f32.xlu0 %v626
      %v667 = vpop.xlane.xlu0 %666
      %668 = vmax.xlane.f32.xlu0 %v627
      %v669 = vpop.xlane.xlu0 %668
      %670 = vmax.xlane.f32.xlu0 %v628
      %v671 = vpop.xlane.xlu0 %670
      %672 = vmax.xlane.f32.xlu0 %v629
      %v673 = vpop.xlane.xlu0 %672
      %674 = vmax.xlane.f32.xlu0 %v630
      %v675 = vpop.xlane.xlu0 %674
      %676 = vmax.xlane.f32.xlu0 %v631
      %v677 = vpop.xlane.xlu0 %676
      %678 = vmax.xlane.f32.xlu0 %v632
      %v679 = vpop.xlane.xlu0 %678
      %680 = vmax.xlane.f32.xlu0 %v633
      %v681 = vpop.xlane.xlu0 %680
      %v682 = vmax.f32 %v634, %v651
      %v683 = vmax.f32 %v635, %v653
      %v684 = vmax.f32 %v636, %v655
      %v685 = vmax.f32 %v637, %v657
      %v686 = vmax.f32 %v638, %v659
      %v687 = vmax.f32 %v639, %v661
      %v688 = vmax.f32 %v640, %v663
      %v689 = vmax.f32 %v641, %v665
      %v690 = vmax.f32 %v642, %v667
      %v691 = vmax.f32 %v643, %v669
      %v692 = vmax.f32 %v644, %v671
      %v693 = vmax.f32 %v645, %v673
      %v694 = vmax.f32 %v646, %v675
      %v695 = vmax.f32 %v647, %v677
      %v696 = vmax.f32 %v648, %v679
      %v697 = vmax.f32 %v649, %v681
      %v698 = vsub.f32 %v634, %v682
      %v699 = vsub.f32 %v635, %v683
      %v700 = vsub.f32 %v636, %v684
      %v701 = vsub.f32 %v637, %v685
      %v702 = vsub.f32 %v638, %v686
      %v703 = vsub.f32 %v639, %v687
      %v704 = vsub.f32 %v640, %v688
      %v705 = vsub.f32 %v641, %v689
      %v706 = vsub.f32 %v642, %v690
      %v707 = vsub.f32 %v643, %v691
      %v708 = vsub.f32 %v644, %v692
      %v709 = vsub.f32 %v645, %v693
      %v710 = vsub.f32 %v646, %v694
      %v711 = vsub.f32 %v647, %v695
      %v712 = vsub.f32 %v648, %v696
      %v713 = vsub.f32 %v649, %v697
      %v714 = vmul.f32 %v698, 1.442695
      %v715 = vpow.pop %v714
      %v716 = vmul.f32 %v699, 1.442695
      %v717 = vpow.pop %v716
      %v718 = vmul.f32 %v700, 1.442695
      %v719 = vpow.pop %v718
      %v720 = vmul.f32 %v701, 1.442695
      %v721 = vpow.pop %v720
      %v722 = vmul.f32 %v702, 1.442695
      %v723 = vpow.pop %v722
      %v724 = vmul.f32 %v703, 1.442695
      %v725 = vpow.pop %v724
      %v726 = vmul.f32 %v704, 1.442695
      %v727 = vpow.pop %v726
      %v728 = vmul.f32 %v705, 1.442695
      %v729 = vpow.pop %v728
      %v730 = vmul.f32 %v706, 1.442695
      %v731 = vpow.pop %v730
      %v732 = vmul.f32 %v707, 1.442695
      %v733 = vpow.pop %v732
      %v734 = vmul.f32 %v708, 1.442695
      %v735 = vpow.pop %v734
      %v736 = vmul.f32 %v709, 1.442695
      %v737 = vpow.pop %v736
      %v738 = vmul.f32 %v710, 1.442695
      %v739 = vpow.pop %v738
      %v740 = vmul.f32 %v711, 1.442695
      %v741 = vpow.pop %v740
      %v742 = vmul.f32 %v712, 1.442695
      %v743 = vpow.pop %v742
      %v744 = vmul.f32 %v713, 1.442695
      %v745 = vpow.pop %v744
      %747 = vset.pattern.permute.xlu0 0
      %748 = vperm.xlu0 %747, %v682
      %v749 = vpop.permute.xlu0 %748
      %752 = vset.pattern.permute.xlu0 0
      %753 = vperm.xlu0 %752, %v683
      %v754 = vpop.permute.xlu0 %753
      %757 = vset.pattern.permute.xlu0 0
      %758 = vperm.xlu0 %757, %v684
      %v759 = vpop.permute.xlu0 %758
      %762 = vset.pattern.permute.xlu0 0
      %763 = vperm.xlu0 %762, %v685
      %v764 = vpop.permute.xlu0 %763
      %767 = vset.pattern.permute.xlu0 0
      %768 = vperm.xlu0 %767, %v686
      %v769 = vpop.permute.xlu0 %768
      %772 = vset.pattern.permute.xlu0 0
      %773 = vperm.xlu0 %772, %v687
      %v774 = vpop.permute.xlu0 %773
      %777 = vset.pattern.permute.xlu0 0
      %778 = vperm.xlu0 %777, %v688
      %v779 = vpop.permute.xlu0 %778
      %782 = vset.pattern.permute.xlu0 0
      %783 = vperm.xlu0 %782, %v689
      %v784 = vpop.permute.xlu0 %783
      %787 = vset.pattern.permute.xlu0 0
      %788 = vperm.xlu0 %787, %v690
      %v789 = vpop.permute.xlu0 %788
      %792 = vset.pattern.permute.xlu0 0
      %793 = vperm.xlu0 %792, %v691
      %v794 = vpop.permute.xlu0 %793
      %797 = vset.pattern.permute.xlu0 0
      %798 = vperm.xlu0 %797, %v692
      %v799 = vpop.permute.xlu0 %798
      %802 = vset.pattern.permute.xlu0 0
      %803 = vperm.xlu0 %802, %v693
      %v804 = vpop.permute.xlu0 %803
      %807 = vset.pattern.permute.xlu0 0
      %808 = vperm.xlu0 %807, %v694
      %v809 = vpop.permute.xlu0 %808
      %812 = vset.pattern.permute.xlu0 0
      %813 = vperm.xlu0 %812, %v695
      %v814 = vpop.permute.xlu0 %813
      %817 = vset.pattern.permute.xlu0 0
      %818 = vperm.xlu0 %817, %v696
      %v819 = vpop.permute.xlu0 %818
      %822 = vset.pattern.permute.xlu0 0
      %823 = vperm.xlu0 %822, %v697
      %v824 = vpop.permute.xlu0 %823
      %v826 = vsub.f32 %v618, %v749
      %v827 = vsub.f32 %v619, %v754
      %v828 = vsub.f32 %v620, %v759
      %v829 = vsub.f32 %v621, %v764
      %v830 = vsub.f32 %v622, %v769
      %v831 = vsub.f32 %v623, %v774
      %v832 = vsub.f32 %v624, %v779
      %v833 = vsub.f32 %v625, %v784
      %v834 = vsub.f32 %v626, %v789
      %v835 = vsub.f32 %v627, %v794
      %v836 = vsub.f32 %v628, %v799
      %v837 = vsub.f32 %v629, %v804
      %v838 = vsub.f32 %v630, %v809
      %v839 = vsub.f32 %v631, %v814
      %v840 = vsub.f32 %v632, %v819
      %v841 = vsub.f32 %v633, %v824
      %v842 = vmul.f32 %v826, 1.442695
      %v843 = vpow.pop %v842
      %v844 = vmul.f32 %v827, 1.442695
      %v845 = vpow.pop %v844
      %v846 = vmul.f32 %v828, 1.442695
      %v847 = vpow.pop %v846
      %v848 = vmul.f32 %v829, 1.442695
      %v849 = vpow.pop %v848
      %v850 = vmul.f32 %v830, 1.442695
      %v851 = vpow.pop %v850
      %v852 = vmul.f32 %v831, 1.442695
      %v853 = vpow.pop %v852
      %v854 = vmul.f32 %v832, 1.442695
      %v855 = vpow.pop %v854
      %v856 = vmul.f32 %v833, 1.442695
      %v857 = vpow.pop %v856
      %v858 = vmul.f32 %v834, 1.442695
      %v859 = vpow.pop %v858
      %v860 = vmul.f32 %v835, 1.442695
      %v861 = vpow.pop %v860
      %v862 = vmul.f32 %v836, 1.442695
      %v863 = vpow.pop %v862
      %v864 = vmul.f32 %v837, 1.442695
      %v865 = vpow.pop %v864
      %v866 = vmul.f32 %v838, 1.442695
      %v867 = vpow.pop %v866
      %v868 = vmul.f32 %v839, 1.442695
      %v869 = vpow.pop %v868
      %v870 = vmul.f32 %v840, 1.442695
      %v871 = vpow.pop %v870
      %v872 = vmul.f32 %v841, 1.442695
      %v873 = vpow.pop %v872
      %v874 = vld [vmem:[#allocation3] sm:$0xff]
      %v875 = vld [vmem:[#allocation3 + $0x8] sm:$0xff]
      %v876 = vld [vmem:[#allocation3 + $0x10] sm:$0xff]
      %v877 = vld [vmem:[#allocation3 + $0x18] sm:$0xff]
      %v878 = vld [vmem:[#allocation3 + $0x20] sm:$0xff]
      %v879 = vld [vmem:[#allocation3 + $0x28] sm:$0xff]
      %v880 = vld [vmem:[#allocation3 + $0x30] sm:$0xff]
      %v881 = vld [vmem:[#allocation3 + $0x38] sm:$0xff]
      %v882 = vld [vmem:[#allocation3 + $0x40] sm:$0xff]
      %v883 = vld [vmem:[#allocation3 + $0x48] sm:$0xff]
      %v884 = vld [vmem:[#allocation3 + $0x50] sm:$0xff]
      %v885 = vld [vmem:[#allocation3 + $0x58] sm:$0xff]
      %v886 = vld [vmem:[#allocation3 + $0x60] sm:$0xff]
      %v887 = vld [vmem:[#allocation3 + $0x68] sm:$0xff]
      %v888 = vld [vmem:[#allocation3 + $0x70] sm:$0xff]
      %v889 = vld [vmem:[#allocation3 + $0x78] sm:$0xff]
      %v890 = vmul.f32 %v715, %v874
      %v891 = vmul.f32 %v717, %v875
      %v892 = vmul.f32 %v719, %v876
      %v893 = vmul.f32 %v721, %v877
      %v894 = vmul.f32 %v723, %v878
      %v895 = vmul.f32 %v725, %v879
      %v896 = vmul.f32 %v727, %v880
      %v897 = vmul.f32 %v729, %v881
      %v898 = vmul.f32 %v731, %v882
      %v899 = vmul.f32 %v733, %v883
      %v900 = vmul.f32 %v735, %v884
      %v901 = vmul.f32 %v737, %v885
      %v902 = vmul.f32 %v739, %v886
      %v903 = vmul.f32 %v741, %v887
      %v904 = vmul.f32 %v743, %v888
      %v905 = vmul.f32 %v745, %v889
      %906 = vadd.xlane.f32.xlu0 %v843
      %v907 = vpop.xlane.xlu0 %906
      %908 = vadd.xlane.f32.xlu0 %v845
      %v909 = vpop.xlane.xlu0 %908
      %910 = vadd.xlane.f32.xlu0 %v847
      %v911 = vpop.xlane.xlu0 %910
      %912 = vadd.xlane.f32.xlu0 %v849
      %v913 = vpop.xlane.xlu0 %912
      %914 = vadd.xlane.f32.xlu0 %v851
      %v915 = vpop.xlane.xlu0 %914
      %916 = vadd.xlane.f32.xlu0 %v853
      %v917 = vpop.xlane.xlu0 %916
      %918 = vadd.xlane.f32.xlu0 %v855
      %v919 = vpop.xlane.xlu0 %918
      %920 = vadd.xlane.f32.xlu0 %v857
      %v921 = vpop.xlane.xlu0 %920
      %922 = vadd.xlane.f32.xlu0 %v859
      %v923 = vpop.xlane.xlu0 %922
      %924 = vadd.xlane.f32.xlu0 %v861
      %v925 = vpop.xlane.xlu0 %924
      %926 = vadd.xlane.f32.xlu0 %v863
      %v927 = vpop.xlane.xlu0 %926
      %928 = vadd.xlane.f32.xlu0 %v865
      %v929 = vpop.xlane.xlu0 %928
      %930 = vadd.xlane.f32.xlu0 %v867
      %v931 = vpop.xlane.xlu0 %930
      %932 = vadd.xlane.f32.xlu0 %v869
      %v933 = vpop.xlane.xlu0 %932
      %934 = vadd.xlane.f32.xlu0 %v871
      %v935 = vpop.xlane.xlu0 %934
      %936 = vadd.xlane.f32.xlu0 %v873
      %v937 = vpop.xlane.xlu0 %936
      %v938 = vadd.f32 %v890, %v907
      %v939 = vadd.f32 %v891, %v909
      %v940 = vadd.f32 %v892, %v911
      %v941 = vadd.f32 %v893, %v913
      %v942 = vadd.f32 %v894, %v915
      %v943 = vadd.f32 %v895, %v917
      %v944 = vadd.f32 %v896, %v919
      %v945 = vadd.f32 %v897, %v921
      %v946 = vadd.f32 %v898, %v923
      %v947 = vadd.f32 %v899, %v925
      %v948 = vadd.f32 %v900, %v927
      %v949 = vadd.f32 %v901, %v929
      %v950 = vadd.f32 %v902, %v931
      %v951 = vadd.f32 %v903, %v933
      %v952 = vadd.f32 %v904, %v935
      %v953 = vadd.f32 %v905, %v937
      %vm954 = vcmask 7168
      %955 = vst.msk [vmem:[#allocation3] sm:$0xff] %vm954, %v938
      %956 = vst.msk [vmem:[#allocation3 + $0x8] sm:$0xff] %vm954, %v939
      %957 = vst.msk [vmem:[#allocation3 + $0x10] sm:$0xff] %vm954, %v940
      %958 = vst.msk [vmem:[#allocation3 + $0x18] sm:$0xff] %vm954, %v941
      %959 = vst.msk [vmem:[#allocation3 + $0x20] sm:$0xff] %vm954, %v942
      %960 = vst.msk [vmem:[#allocation3 + $0x28] sm:$0xff] %vm954, %v943
      %961 = vst.msk [vmem:[#allocation3 + $0x30] sm:$0xff] %vm954, %v944
      %962 = vst.msk [vmem:[#allocation3 + $0x38] sm:$0xff] %vm954, %v945
      %963 = vst.msk [vmem:[#allocation3 + $0x40] sm:$0xff] %vm954, %v946
      %964 = vst.msk [vmem:[#allocation3 + $0x48] sm:$0xff] %vm954, %v947
      %965 = vst.msk [vmem:[#allocation3 + $0x50] sm:$0xff] %vm954, %v948
      %966 = vst.msk [vmem:[#allocation3 + $0x58] sm:$0xff] %vm954, %v949
      %967 = vst.msk [vmem:[#allocation3 + $0x60] sm:$0xff] %vm954, %v950
      %968 = vst.msk [vmem:[#allocation3 + $0x68] sm:$0xff] %vm954, %v951
      %969 = vst.msk [vmem:[#allocation3 + $0x70] sm:$0xff] %vm954, %v952
      %970 = vst.msk [vmem:[#allocation3 + $0x78] sm:$0xff] %vm954, %v953
      %v971 = vld [vmem:[#allocation4] sm:$0xff]
      %v972 = vld [vmem:[#allocation4 + $0x8] sm:$0xff]
      %v973 = vld [vmem:[#allocation4 + $0x10] sm:$0xff]
      %v974 = vld [vmem:[#allocation4 + $0x18] sm:$0xff]
      %v975 = vld [vmem:[#allocation4 + $0x20] sm:$0xff]
      %v976 = vld [vmem:[#allocation4 + $0x28] sm:$0xff]
      %v977 = vld [vmem:[#allocation4 + $0x30] sm:$0xff]
      %v978 = vld [vmem:[#allocation4 + $0x38] sm:$0xff]
      %v979 = vld [vmem:[#allocation4 + $0x40] sm:$0xff]
      %v980 = vld [vmem:[#allocation4 + $0x48] sm:$0xff]
      %v981 = vld [vmem:[#allocation4 + $0x50] sm:$0xff]
      %v982 = vld [vmem:[#allocation4 + $0x58] sm:$0xff]
      %v983 = vld [vmem:[#allocation4 + $0x60] sm:$0xff]
      %v984 = vld [vmem:[#allocation4 + $0x68] sm:$0xff]
      %v985 = vld [vmem:[#allocation4 + $0x70] sm:$0xff]
      %v986 = vld [vmem:[#allocation4 + $0x78] sm:$0xff]
      %988 = vset.pattern.permute.xlu0 0
      %989 = vperm.xlu0 %988, %v715
      %v990 = vpop.permute.xlu0 %989
      %993 = vset.pattern.permute.xlu0 0
      %994 = vperm.xlu0 %993, %v717
      %v995 = vpop.permute.xlu0 %994
      %998 = vset.pattern.permute.xlu0 0
      %999 = vperm.xlu0 %998, %v719
      %v1000 = vpop.permute.xlu0 %999
      %1003 = vset.pattern.permute.xlu0 0
      %1004 = vperm.xlu0 %1003, %v721
      %v1005 = vpop.permute.xlu0 %1004
      %1008 = vset.pattern.permute.xlu0 0
      %1009 = vperm.xlu0 %1008, %v723
      %v1010 = vpop.permute.xlu0 %1009
      %1013 = vset.pattern.permute.xlu0 0
      %1014 = vperm.xlu0 %1013, %v725
      %v1015 = vpop.permute.xlu0 %1014
      %1018 = vset.pattern.permute.xlu0 0
      %1019 = vperm.xlu0 %1018, %v727
      %v1020 = vpop.permute.xlu0 %1019
      %1023 = vset.pattern.permute.xlu0 0
      %1024 = vperm.xlu0 %1023, %v729
      %v1025 = vpop.permute.xlu0 %1024
      %1028 = vset.pattern.permute.xlu0 0
      %1029 = vperm.xlu0 %1028, %v731
      %v1030 = vpop.permute.xlu0 %1029
      %1033 = vset.pattern.permute.xlu0 0
      %1034 = vperm.xlu0 %1033, %v733
      %v1035 = vpop.permute.xlu0 %1034
      %1038 = vset.pattern.permute.xlu0 0
      %1039 = vperm.xlu0 %1038, %v735
      %v1040 = vpop.permute.xlu0 %1039
      %1043 = vset.pattern.permute.xlu0 0
      %1044 = vperm.xlu0 %1043, %v737
      %v1045 = vpop.permute.xlu0 %1044
      %1048 = vset.pattern.permute.xlu0 0
      %1049 = vperm.xlu0 %1048, %v739
      %v1050 = vpop.permute.xlu0 %1049
      %1053 = vset.pattern.permute.xlu0 0
      %1054 = vperm.xlu0 %1053, %v741
      %v1055 = vpop.permute.xlu0 %1054
      %1058 = vset.pattern.permute.xlu0 0
      %1059 = vperm.xlu0 %1058, %v743
      %v1060 = vpop.permute.xlu0 %1059
      %1063 = vset.pattern.permute.xlu0 0
      %1064 = vperm.xlu0 %1063, %v745
      %v1065 = vpop.permute.xlu0 %1064
      %v1067 = vmul.f32 %v990, %v971
      %v1068 = vmul.f32 %v995, %v972
      %v1069 = vmul.f32 %v1000, %v973
      %v1070 = vmul.f32 %v1005, %v974
      %v1071 = vmul.f32 %v1010, %v975
      %v1072 = vmul.f32 %v1015, %v976
      %v1073 = vmul.f32 %v1020, %v977
      %v1074 = vmul.f32 %v1025, %v978
      %v1075 = vmul.f32 %v1030, %v979
      %v1076 = vmul.f32 %v1035, %v980
      %v1077 = vmul.f32 %v1040, %v981
      %v1078 = vmul.f32 %v1045, %v982
      %v1079 = vmul.f32 %v1050, %v983
      %v1080 = vmul.f32 %v1055, %v984
      %v1081 = vmul.f32 %v1060, %v985
      %v1082 = vmul.f32 %v1065, %v986
      %v1083 = vpack.c.bf16 %v845, %v843
      %v1084 = vpack.c.bf16 %v849, %v847
      %v1085 = vpack.c.bf16 %v853, %v851
      %v1086 = vpack.c.bf16 %v857, %v855
      %v1087 = vpack.c.bf16 %v861, %v859
      %v1088 = vpack.c.bf16 %v865, %v863
      %v1089 = vpack.c.bf16 %v869, %v867
      %v1090 = vpack.c.bf16 %v873, %v871
      %v1107 = vunpack.c.l.b16 %v376
      %v1108 = vunpack.c.l.b16 %v377
      %v1109 = vunpack.c.l.b16 %v378
      %v1110 = vunpack.c.l.b16 %v379
      %v1111 = vunpack.c.l.b16 %v380
      %v1112 = vunpack.c.l.b16 %v381
      %v1113 = vunpack.c.l.b16 %v382
      %v1114 = vunpack.c.l.b16 %v383
      %v1115 = vunpack.c.l.b16 %v384
      %v1116 = vunpack.c.l.b16 %v385
      %v1117 = vunpack.c.l.b16 %v386
      %v1118 = vunpack.c.l.b16 %v387
      %v1119 = vunpack.c.l.b16 %v388
      %v1120 = vunpack.c.l.b16 %v389
      %v1121 = vunpack.c.l.b16 %v390
      %v1122 = vunpack.c.l.b16 %v391
      %v1123 = vpack.c.b16 %v1108, %v1107
      %v1124 = vpack.c.b16 %v1110, %v1109
      %v1125 = vpack.c.b16 %v1112, %v1111
      %v1126 = vpack.c.b16 %v1114, %v1113
      %v1127 = vpack.c.b16 %v1116, %v1115
      %v1128 = vpack.c.b16 %v1118, %v1117
      %v1129 = vpack.c.b16 %v1120, %v1119
      %v1130 = vpack.c.b16 %v1122, %v1121
      %1139 = vmatprep.subr.bf16.mxu0 0
      %1140 = vmatpush1.bf16.msra.mxu0 %v1123
      %1141 = vmatprep.subr.bf16.mxu0 0
      %1142 = vmatpush1.bf16.msra.mxu0 %v1124
      %1143 = vmatprep.subr.bf16.mxu0 0
      %1144 = vmatpush1.bf16.msra.mxu0 %v1125
      %1145 = vmatprep.subr.bf16.mxu0 0
      %1146 = vmatpush1.bf16.msra.mxu0 %v1126
      %1147 = vmatprep.subr.bf16.mxu0 0
      %1148 = vmatpush1.bf16.msra.mxu0 %v1127
      %1149 = vmatprep.subr.bf16.mxu0 0
      %1150 = vmatpush1.bf16.msra.mxu0 %v1128
      %1151 = vmatprep.subr.bf16.mxu0 0
      %1152 = vmatpush1.bf16.msra.mxu0 %v1129
      %1153 = vmatprep.subr.bf16.mxu0 0
      %1154 = vmatpush1.bf16.msra.mxu0 %v1130
      %1155 = vmatprep.subr.bf16.mxu0 0
      %1156 = vmatpush1.bf16.msra.mxu0 0
      %1157 = vmatprep.subr.bf16.mxu0 0
      %1158 = vmatpush1.bf16.msra.mxu0 0
      %1159 = vmatprep.subr.bf16.mxu0 0
      %1160 = vmatpush1.bf16.msra.mxu0 0
      %1161 = vmatprep.subr.bf16.mxu0 0
      %1162 = vmatpush1.bf16.msra.mxu0 0
      %1163 = vmatprep.subr.bf16.mxu0 0
      %1164 = vmatpush1.bf16.msra.mxu0 0
      %1165 = vmatprep.subr.bf16.mxu0 0
      %1166 = vmatpush1.bf16.msra.mxu0 0
      %1167 = vmatprep.subr.bf16.mxu0 0
      %1168 = vmatpush1.bf16.msra.mxu0 0
      %1169 = vmatprep.subr.bf16.mxu0 0
      %1170 = vmatpush1.bf16.msra.mxu0 0
      %1171 = vmatprep.mubr.bf16.mxu0 0
      %1172 = vmatmul.mubr.bf16.gmra.mrb[0].mxu0 %v1083
      %v1173 = vpop.f32.mrb[0].mxu0
      %v1174 = vadd.f32 0.0, %v1173
      %v1175 = vpop.f32.mrb[0].mxu0
      %v1176 = vpop.f32.mrb[0].mxu0
      %v1177 = vadd.f32 0.0, %v1176
      %v1178 = vpop.f32.mrb[0].mxu0
      %1179 = vmatprep.mubr.bf16.mxu0 0
      %1180 = vmatmul.mubr.bf16.gmra.mrb[0].mxu0 %v1084
      %v1181 = vpop.f32.mrb[0].mxu0
      %v1182 = vadd.f32 0.0, %v1181
      %v1183 = vpop.f32.mrb[0].mxu0
      %v1184 = vpop.f32.mrb[0].mxu0
      %v1185 = vadd.f32 0.0, %v1184
      %v1186 = vpop.f32.mrb[0].mxu0
      %1187 = vmatprep.mubr.bf16.mxu0 0
      %1188 = vmatmul.mubr.bf16.gmra.mrb[0].mxu0 %v1085
      %v1189 = vpop.f32.mrb[0].mxu0
      %v1190 = vadd.f32 0.0, %v1189
      %v1191 = vpop.f32.mrb[0].mxu0
      %v1192 = vpop.f32.mrb[0].mxu0
      %v1193 = vadd.f32 0.0, %v1192
      %v1194 = vpop.f32.mrb[0].mxu0
      %1195 = vmatprep.mubr.bf16.mxu0 0
      %1196 = vmatmul.mubr.bf16.gmra.mrb[0].mxu0 %v1086
      %v1197 = vpop.f32.mrb[0].mxu0
      %v1198 = vadd.f32 0.0, %v1197
      %v1199 = vpop.f32.mrb[0].mxu0
      %v1200 = vpop.f32.mrb[0].mxu0
      %v1201 = vadd.f32 0.0, %v1200
      %v1202 = vpop.f32.mrb[0].mxu0
      %1203 = vmatprep.mubr.bf16.mxu0 0
      %1204 = vmatmul.mubr.bf16.gmra.mrb[0].mxu0 %v1087
      %v1205 = vpop.f32.mrb[0].mxu0
      %v1206 = vadd.f32 0.0, %v1205
      %v1207 = vpop.f32.mrb[0].mxu0
      %v1208 = vpop.f32.mrb[0].mxu0
      %v1209 = vadd.f32 0.0, %v1208
      %v1210 = vpop.f32.mrb[0].mxu0
      %1211 = vmatprep.mubr.bf16.mxu0 0
      %1212 = vmatmul.mubr.bf16.gmra.mrb[0].mxu0 %v1088
      %v1213 = vpop.f32.mrb[0].mxu0
      %v1214 = vadd.f32 0.0, %v1213
      %v1215 = vpop.f32.mrb[0].mxu0
      %v1216 = vpop.f32.mrb[0].mxu0
      %v1217 = vadd.f32 0.0, %v1216
      %v1218 = vpop.f32.mrb[0].mxu0
      %1219 = vmatprep.mubr.bf16.mxu0 0
      %1220 = vmatmul.mubr.bf16.gmra.mrb[0].mxu0 %v1089
      %v1221 = vpop.f32.mrb[0].mxu0
      %v1222 = vadd.f32 0.0, %v1221
      %v1223 = vpop.f32.mrb[0].mxu0
      %v1224 = vpop.f32.mrb[0].mxu0
      %v1225 = vadd.f32 0.0, %v1224
      %v1226 = vpop.f32.mrb[0].mxu0
      %1227 = vmatprep.mubr.bf16.mxu0 0
      %1228 = vmatmul.mubr.bf16.gmra.mrb[0].mxu0 %v1090
      %v1229 = vpop.f32.mrb[0].mxu0
      %v1230 = vadd.f32 0.0, %v1229
      %v1231 = vpop.f32.mrb[0].mxu0
      %v1232 = vpop.f32.mrb[0].mxu0
      %v1233 = vadd.f32 0.0, %v1232
      %v1234 = vpop.f32.mrb[0].mxu0
      %1235 = vdwg.mxu0
      %v1236 = vadd.f32 %v1067, %v1174
      %v1237 = vadd.f32 %v1068, %v1177
      %v1238 = vadd.f32 %v1069, %v1182
      %v1239 = vadd.f32 %v1070, %v1185
      %v1240 = vadd.f32 %v1071, %v1190
      %v1241 = vadd.f32 %v1072, %v1193
      %v1242 = vadd.f32 %v1073, %v1198
      %v1243 = vadd.f32 %v1074, %v1201
      %v1244 = vadd.f32 %v1075, %v1206
      %v1245 = vadd.f32 %v1076, %v1209
      %v1246 = vadd.f32 %v1077, %v1214
      %v1247 = vadd.f32 %v1078, %v1217
      %v1248 = vadd.f32 %v1079, %v1222
      %v1249 = vadd.f32 %v1080, %v1225
      %v1250 = vadd.f32 %v1081, %v1230
      %v1251 = vadd.f32 %v1082, %v1233
      %1252 = vst.msk [vmem:[#allocation4] sm:$0xff] %vm472, %v1236
      %1253 = vst.msk [vmem:[#allocation4 + $0x8] sm:$0xff] %vm472, %v1237
      %1254 = vst.msk [vmem:[#allocation4 + $0x10] sm:$0xff] %vm472, %v1238
      %1255 = vst.msk [vmem:[#allocation4 + $0x18] sm:$0xff] %vm472, %v1239
      %1256 = vst.msk [vmem:[#allocation4 + $0x20] sm:$0xff] %vm472, %v1240
      %1257 = vst.msk [vmem:[#allocation4 + $0x28] sm:$0xff] %vm472, %v1241
      %1258 = vst.msk [vmem:[#allocation4 + $0x30] sm:$0xff] %vm472, %v1242
      %1259 = vst.msk [vmem:[#allocation4 + $0x38] sm:$0xff] %vm472, %v1243
      %1260 = vst.msk [vmem:[#allocation4 + $0x40] sm:$0xff] %vm472, %v1244
      %1261 = vst.msk [vmem:[#allocation4 + $0x48] sm:$0xff] %vm472, %v1245
      %1262 = vst.msk [vmem:[#allocation4 + $0x50] sm:$0xff] %vm472, %v1246
      %1263 = vst.msk [vmem:[#allocation4 + $0x58] sm:$0xff] %vm472, %v1247
      %1264 = vst.msk [vmem:[#allocation4 + $0x60] sm:$0xff] %vm472, %v1248
      %1265 = vst.msk [vmem:[#allocation4 + $0x68] sm:$0xff] %vm472, %v1249
      %1266 = vst.msk [vmem:[#allocation4 + $0x70] sm:$0xff] %vm472, %v1250
      %1267 = vst.msk [vmem:[#allocation4 + $0x78] sm:$0xff] %vm472, %v1251
      %1268 = vst.msk [vmem:[#allocation2] sm:$0xff] %vm954, %v682
      %1269 = vst.msk [vmem:[#allocation2 + $0x8] sm:$0xff] %vm954, %v683
      %1270 = vst.msk [vmem:[#allocation2 + $0x10] sm:$0xff] %vm954, %v684
      %1271 = vst.msk [vmem:[#allocation2 + $0x18] sm:$0xff] %vm954, %v685
      %1272 = vst.msk [vmem:[#allocation2 + $0x20] sm:$0xff] %vm954, %v686
      %1273 = vst.msk [vmem:[#allocation2 + $0x28] sm:$0xff] %vm954, %v687
      %1274 = vst.msk [vmem:[#allocation2 + $0x30] sm:$0xff] %vm954, %v688
      %1275 = vst.msk [vmem:[#allocation2 + $0x38] sm:$0xff] %vm954, %v689
      %1276 = vst.msk [vmem:[#allocation2 + $0x40] sm:$0xff] %vm954, %v690
      %1277 = vst.msk [vmem:[#allocation2 + $0x48] sm:$0xff] %vm954, %v691
      %1278 = vst.msk [vmem:[#allocation2 + $0x50] sm:$0xff] %vm954, %v692
      %1279 = vst.msk [vmem:[#allocation2 + $0x58] sm:$0xff] %vm954, %v693
      %1280 = vst.msk [vmem:[#allocation2 + $0x60] sm:$0xff] %vm954, %v694
      %1281 = vst.msk [vmem:[#allocation2 + $0x68] sm:$0xff] %vm954, %v695
      %1282 = vst.msk [vmem:[#allocation2 + $0x70] sm:$0xff] %vm954, %v696
      %1283 = vst.msk [vmem:[#allocation2 + $0x78] sm:$0xff] %vm954, %v697
      // Predicated region
      $region37: #{attention_forward.4} parent=31 // pred_check
        %p1284 = pneg %p290
      $region38: #{attention_forward.4} parent=31 // pred_check_branch
        %1286 = sbr.rel (%p1284) target = $region40
      $region39: #{attention_forward.4} parent=31 // pred_region
        %v1287 = vld [vmem:[#allocation3] sm:$0xff]
        %v1288 = vld [vmem:[#allocation3 + $0x8] sm:$0xff]
        %v1289 = vld [vmem:[#allocation3 + $0x10] sm:$0xff]
        %v1290 = vld [vmem:[#allocation3 + $0x18] sm:$0xff]
        %v1291 = vld [vmem:[#allocation3 + $0x20] sm:$0xff]
        %v1292 = vld [vmem:[#allocation3 + $0x28] sm:$0xff]
        %v1293 = vld [vmem:[#allocation3 + $0x30] sm:$0xff]
        %v1294 = vld [vmem:[#allocation3 + $0x38] sm:$0xff]
        %v1295 = vld [vmem:[#allocation3 + $0x40] sm:$0xff]
        %v1296 = vld [vmem:[#allocation3 + $0x48] sm:$0xff]
        %v1297 = vld [vmem:[#allocation3 + $0x50] sm:$0xff]
        %v1298 = vld [vmem:[#allocation3 + $0x58] sm:$0xff]
        %v1299 = vld [vmem:[#allocation3 + $0x60] sm:$0xff]
        %v1300 = vld [vmem:[#allocation3 + $0x68] sm:$0xff]
        %v1301 = vld [vmem:[#allocation3 + $0x70] sm:$0xff]
        %v1302 = vld [vmem:[#allocation3 + $0x78] sm:$0xff]
        %v1303 = vrcp.pop %v1287
        %v1304 = vrcp.pop %v1288
        %v1305 = vrcp.pop %v1289
        %v1306 = vrcp.pop %v1290
        %v1307 = vrcp.pop %v1291
        %v1308 = vrcp.pop %v1292
        %v1309 = vrcp.pop %v1293
        %v1310 = vrcp.pop %v1294
        %v1311 = vrcp.pop %v1295
        %v1312 = vrcp.pop %v1296
        %v1313 = vrcp.pop %v1297
        %v1314 = vrcp.pop %v1298
        %v1315 = vrcp.pop %v1299
        %v1316 = vrcp.pop %v1300
        %v1317 = vrcp.pop %v1301
        %v1318 = vrcp.pop %v1302
        %v1319 = vld [vmem:[#allocation4] sm:$0xff]
        %v1320 = vld [vmem:[#allocation4 + $0x8] sm:$0xff]
        %v1321 = vld [vmem:[#allocation4 + $0x10] sm:$0xff]
        %v1322 = vld [vmem:[#allocation4 + $0x18] sm:$0xff]
        %v1323 = vld [vmem:[#allocation4 + $0x20] sm:$0xff]
        %v1324 = vld [vmem:[#allocation4 + $0x28] sm:$0xff]
        %v1325 = vld [vmem:[#allocation4 + $0x30] sm:$0xff]
        %v1326 = vld [vmem:[#allocation4 + $0x38] sm:$0xff]
        %v1327 = vld [vmem:[#allocation4 + $0x40] sm:$0xff]
        %v1328 = vld [vmem:[#allocation4 + $0x48] sm:$0xff]
        %v1329 = vld [vmem:[#allocation4 + $0x50] sm:$0xff]
        %v1330 = vld [vmem:[#allocation4 + $0x58] sm:$0xff]
        %v1331 = vld [vmem:[#allocation4 + $0x60] sm:$0xff]
        %v1332 = vld [vmem:[#allocation4 + $0x68] sm:$0xff]
        %v1333 = vld [vmem:[#allocation4 + $0x70] sm:$0xff]
        %v1334 = vld [vmem:[#allocation4 + $0x78] sm:$0xff]
        %1336 = vset.pattern.permute.xlu0 0
        %1337 = vperm.xlu0 %1336, %v1303
        %v1338 = vpop.permute.xlu0 %1337
        %1341 = vset.pattern.permute.xlu0 0
        %1342 = vperm.xlu0 %1341, %v1304
        %v1343 = vpop.permute.xlu0 %1342
        %1346 = vset.pattern.permute.xlu0 0
        %1347 = vperm.xlu0 %1346, %v1305
        %v1348 = vpop.permute.xlu0 %1347
        %1351 = vset.pattern.permute.xlu0 0
        %1352 = vperm.xlu0 %1351, %v1306
        %v1353 = vpop.permute.xlu0 %1352
        %1356 = vset.pattern.permute.xlu0 0
        %1357 = vperm.xlu0 %1356, %v1307
        %v1358 = vpop.permute.xlu0 %1357
        %1361 = vset.pattern.permute.xlu0 0
        %1362 = vperm.xlu0 %1361, %v1308
        %v1363 = vpop.permute.xlu0 %1362
        %1366 = vset.pattern.permute.xlu0 0
        %1367 = vperm.xlu0 %1366, %v1309
        %v1368 = vpop.permute.xlu0 %1367
        %1371 = vset.pattern.permute.xlu0 0
        %1372 = vperm.xlu0 %1371, %v1310
        %v1373 = vpop.permute.xlu0 %1372
        %1376 = vset.pattern.permute.xlu0 0
        %1377 = vperm.xlu0 %1376, %v1311
        %v1378 = vpop.permute.xlu0 %1377
        %1381 = vset.pattern.permute.xlu0 0
        %1382 = vperm.xlu0 %1381, %v1312
        %v1383 = vpop.permute.xlu0 %1382
        %1386 = vset.pattern.permute.xlu0 0
        %1387 = vperm.xlu0 %1386, %v1313
        %v1388 = vpop.permute.xlu0 %1387
        %1391 = vset.pattern.permute.xlu0 0
        %1392 = vperm.xlu0 %1391, %v1314
        %v1393 = vpop.permute.xlu0 %1392
        %1396 = vset.pattern.permute.xlu0 0
        %1397 = vperm.xlu0 %1396, %v1315
        %v1398 = vpop.permute.xlu0 %1397
        %1401 = vset.pattern.permute.xlu0 0
        %1402 = vperm.xlu0 %1401, %v1316
        %v1403 = vpop.permute.xlu0 %1402
        %1406 = vset.pattern.permute.xlu0 0
        %1407 = vperm.xlu0 %1406, %v1317
        %v1408 = vpop.permute.xlu0 %1407
        %1411 = vset.pattern.permute.xlu0 0
        %1412 = vperm.xlu0 %1411, %v1318
        %v1413 = vpop.permute.xlu0 %1412
        %v1415 = vmul.f32 %v1319, %v1338
        %v1416 = vmul.f32 %v1320, %v1343
        %v1417 = vmul.f32 %v1321, %v1348
        %v1418 = vmul.f32 %v1322, %v1353
        %v1419 = vmul.f32 %v1323, %v1358
        %v1420 = vmul.f32 %v1324, %v1363
        %v1421 = vmul.f32 %v1325, %v1368
        %v1422 = vmul.f32 %v1326, %v1373
        %v1423 = vmul.f32 %v1327, %v1378
        %v1424 = vmul.f32 %v1328, %v1383
        %v1425 = vmul.f32 %v1329, %v1388
        %v1426 = vmul.f32 %v1330, %v1393
        %v1427 = vmul.f32 %v1331, %v1398
        %v1428 = vmul.f32 %v1332, %v1403
        %v1429 = vmul.f32 %v1333, %v1408
        %v1430 = vmul.f32 %v1334, %v1413
        %1431 = vst.msk [vmem:[%s287] sm:$0xff] %vm472, %v1415
        %1432 = vst.msk [vmem:[%s287 + $0x8] sm:$0xff] %vm472, %v1416
        %1433 = vst.msk [vmem:[%s287 + $0x10] sm:$0xff] %vm472, %v1417
        %1434 = vst.msk [vmem:[%s287 + $0x18] sm:$0xff] %vm472, %v1418
        %1435 = vst.msk [vmem:[%s287 + $0x20] sm:$0xff] %vm472, %v1419
        %1436 = vst.msk [vmem:[%s287 + $0x28] sm:$0xff] %vm472, %v1420
        %1437 = vst.msk [vmem:[%s287 + $0x30] sm:$0xff] %vm472, %v1421
        %1438 = vst.msk [vmem:[%s287 + $0x38] sm:$0xff] %vm472, %v1422
        %1439 = vst.msk [vmem:[%s287 + $0x40] sm:$0xff] %vm472, %v1423
        %1440 = vst.msk [vmem:[%s287 + $0x48] sm:$0xff] %vm472, %v1424
        %1441 = vst.msk [vmem:[%s287 + $0x50] sm:$0xff] %vm472, %v1425
        %1442 = vst.msk [vmem:[%s287 + $0x58] sm:$0xff] %vm472, %v1426
        %1443 = vst.msk [vmem:[%s287 + $0x60] sm:$0xff] %vm472, %v1427
        %1444 = vst.msk [vmem:[%s287 + $0x68] sm:$0xff] %vm472, %v1428
        %1445 = vst.msk [vmem:[%s287 + $0x70] sm:$0xff] %vm472, %v1429
        %1446 = vst.msk [vmem:[%s287 + $0x78] sm:$0xff] %vm472, %v1430
      $region40: #{attention_forward.4} parent=31 // pred_fallthru
        _
      %s1447 = smul.u32 16, %s20
      %p1448 = scmp.lt.s32.totalorder %s19, 15
      %s1449 = scalar_select %p1448, %s19, 15
      %p1450 = scmp.lt.s32.totalorder %s1447, 15
      %s1451 = scalar_select %p1450, %s1447, 15
      %s1452 = smul.addr %s1449, 16
      %s1453 = sadd.s32 %s1451, %s1452
      %s1454 = smul.addr %s1453, 8
      %s1455 = scalar_lea.vmem %s3, %s1454
      // Predicated region
      $region41: #{attention_forward.4} parent=31 // pred_check
        %p1456 = pneg %p137
      $region42: #{attention_forward.4} parent=31 // pred_check_branch
        %1458 = sbr.rel (%p1456) target = $region44
      $region43: #{attention_forward.4} parent=31 // pred_region
        %s1459 = smul.u32 16, %s20
      $region44: #{attention_forward.4} parent=31 // pred_fallthru
        _
    $region32: #{attention_forward.4} parent=5 // pred_fallthru
      _
    %p1460 = scmp.le.s32.totalorder 2, %s9
    // Predicated region
    $region45: #{attention_forward.4} parent=5 // pred_check
      %p1461 = pneg %p1460
    $region46: #{attention_forward.4} parent=5 // pred_check_branch
      %1463 = sbr.rel (%p1461) target = $region48
    $region47: #{attention_forward.4} parent=5 // pred_region
      %s1464 = ssub.s32 %s9, 2
      // Predicated region
      $region49: #{attention_forward.4} parent=47 // pred_check
        %p1465 = pneg %p143
      $region50: #{attention_forward.4} parent=47 // pred_check_branch
        %1467 = sbr.rel (%p1465) target = $region52
      $region51: #{attention_forward.4} parent=47 // pred_region
        %s1468 = smul.u32 16, %s23
        %p1469 = scmp.lt.s32.totalorder %s22, 15
        %s1470 = scalar_select %p1469, %s22, 15
        %p1471 = scmp.lt.s32.totalorder %s1468, 15
        %s1472 = scalar_select %p1471, %s1468, 15
        %s1473 = smul.addr %s1470, 16
        %s1474 = sadd.s32 %s1472, %s1473
        %s1475 = smul.addr %s1474, 8
        %s1476 = scalar_lea.vmem %s3, %s1475
      $region52: #{attention_forward.4} parent=47 // pred_fallthru
        _
    $region48: #{attention_forward.4} parent=5 // pred_fallthru
      _
  $region6: #{attention_forward.4} parent=0 // loop_footer
    %s13 = sadd.s32 1, %s9
  $region7: #{attention_forward.4} parent=0 // loop_footer_branch
    %8 = sbr.rel target = $region3
  $region8: #{attention_forward.4} parent=0 // loop_exit
    _

// kernel: attention_forward.5
$region0: #{attention_forward.5}
  #allocation0 [shape = 'u32[]', space=smem, size = 0x4, offset = 0x4, fixed_abs, tag = 'smem constant byte address 0x4 - core index']
  #allocation1 [shape = 'u32[144,128]{1,0:T(1,128)}', space=vmem, size = 0x12000, scoped, tag = 'internal scratch']
  #allocation2 [shape = 'f32[128,64]{1,0:T(8,128)}', space=vmem, size = 0x10000, scoped, tag = 'scratch operand']
  %s0 = inlined_call_operand.vmem [shape: bf16[256,512], index: 0, kind: input, shape index: {}]
  %s1 = inlined_call_operand.vmem [shape: bf16[512,64], index: 1, kind: input, shape index: {}]
  %s2 = inlined_call_operand.vmem [shape: f32[1,64], index: 2, kind: input, shape index: {}]
  %s3 = inlined_call_operand.vmem [shape: f32[256,64], index: 3, kind: output, shape index: {}]
  %s4 = sld [smem:[#allocation0]]
  $region91: #{attention_forward.5} parent=0
    _
  %s6 = ssub.s32 1, %s4
  %s7 = scalar_select 0, %s6, %s4
  $region1: #{attention_forward.5} parent=0
    #allocation3 [shape = 'u8[131072]{0}', space=vmem, size = 0x20000, scoped, tag = 'input window, operand 0']
    loop: start=0, step=1, limit=6
    $region2: #{attention_forward.5} parent=1 // loop_pre_header
      _
    $region3: #{attention_forward.5} parent=1 // loop_header
      %s9 = sphi 0, %s13
      %p10 = scmp.ge.s32.totalorder %s9, 6
      %s16 = sphi 0, %s35
      %s17 = sphi 0, %s31
      %s18 = sphi 0, %s27
      %s19 = sphi 0, %s16
      %s20 = sphi 0, %s17
      %s21 = sphi 0, %s18
      %s22 = sphi 0, %s19
      %s23 = sphi 0, %s20
      %s24 = sphi 0, %s21
      %s40 = sphi 0, %s42
      %s43 = sphi 0, %s40
      %s44 = sphi 0, %s43
      %s60 = sphi 0, %s44
      %s68 = sphi 0, %s70
      %s71 = sphi 0, %s68
      %s72 = sphi 0, %s71
      %s88 = sphi 0, %s72
      %s94 = sphi 0, %s96
      %s97 = sphi 0, %s94
      %s98 = sphi 0, %s97
      %s114 = sphi 0, %s98
      %s122 = sphi 0, %s124
      %s125 = sphi 0, %s122
      %s126 = sphi 0, %s125
      %s142 = sphi 0, %s126
    $region4: #{attention_forward.5} parent=1 // loop_header_branch
      %12 = sbr.rel (%p10) target = $region8
    $region5: #{attention_forward.5} parent=1 // loop_body
      %s14 = ssub.s32 %s9, 1
      %s15 = ssub.s32 %s9, 2
      %s25 = sadd.s32 1, %s18
      %p26 = scmp.ge.s32.totalorder %s25, 2
      %s27 = scalar_select %p26, 0, %s25
      %s28 = sadd.s32 1, %s17
      %s29 = scalar_select %p26, %s28, %s17
      %p30 = scmp.ge.s32.totalorder %s29, 1
      %s31 = scalar_select %p30, 0, %s29
      %s32 = sadd.s32 1, %s16
      %s33 = scalar_select %p30, %s32, %s16
      %p34 = scmp.ge.s32.totalorder %s33, 2
      %s35 = scalar_select %p34, 0, %s33
      %s36 = ssub.s32 %s16, %s35
      %s37 = ssub.s32 %s18, %s27
      %s38 = sor.u32 %s36, %s37
      %p39 = scmp.eq.s32.totalorder %s38, 0
      %s41 = sadd.s32 %s40, 1
      %s42 = scalar_select %p39, %s40, %s41
      %p45 = pneg %p39
      %p46 = scmp.eq.s32.totalorder %s9, 3
      %p47 = por %p45, %p46
      %p48 = scmp.ne.s32.totalorder %s40, %s43
      %p49 = scmp.eq.s32.totalorder %s9, 0
      %p50 = por %p48, %p49
      %p51 = scmp.ne.s32.totalorder %s40, %s43
      %p52 = scmp.eq.s32.totalorder %s14, 3
      %p53 = por %p51, %p52
      %p54 = scmp.ne.s32.totalorder %s43, %s44
      %p55 = scmp.eq.s32.totalorder %s14, 0
      %p56 = por %p54, %p55
      %p57 = scmp.ne.s32.totalorder %s43, %s44
      %p58 = scmp.eq.s32.totalorder %s15, 3
      %p59 = por %p57, %p58
      %p61 = scmp.ne.s32.totalorder %s44, %s60
      %p62 = scmp.eq.s32.totalorder %s15, 0
      %p63 = por %p61, %p62
      %s64 = ssub.s32 %s18, %s27
      %s65 = ssub.s32 %s17, %s31
      %s66 = sor.u32 %s64, %s65
      %p67 = scmp.eq.s32.totalorder %s66, 0
      %s69 = sadd.s32 %s68, 1
      %s70 = scalar_select %p67, %s68, %s69
      %p73 = pneg %p67
      %p74 = scmp.eq.s32.totalorder %s9, 3
      %p75 = por %p73, %p74
      %p76 = scmp.ne.s32.totalorder %s68, %s71
      %p77 = scmp.eq.s32.totalorder %s9, 0
      %p78 = por %p76, %p77
      %p79 = scmp.ne.s32.totalorder %s68, %s71
      %p80 = scmp.eq.s32.totalorder %s14, 3
      %p81 = por %p79, %p80
      %p82 = scmp.ne.s32.totalorder %s71, %s72
      %p83 = scmp.eq.s32.totalorder %s14, 0
      %p84 = por %p82, %p83
      %p85 = scmp.ne.s32.totalorder %s71, %s72
      %p86 = scmp.eq.s32.totalorder %s15, 3
      %p87 = por %p85, %p86
      %p89 = scmp.ne.s32.totalorder %s72, %s88
      %p90 = scmp.eq.s32.totalorder %s15, 0
      %p91 = por %p89, %p90
      %s92 = ssub.s32 %s17, %s31
      %p93 = scmp.eq.s32.totalorder %s92, 0
      %s95 = sadd.s32 %s94, 1
      %s96 = scalar_select %p93, %s94, %s95
      %p99 = pneg %p93
      %p100 = scmp.eq.s32.totalorder %s9, 3
      %p101 = por %p99, %p100
      %p102 = scmp.ne.s32.totalorder %s94, %s97
      %p103 = scmp.eq.s32.totalorder %s9, 0
      %p104 = por %p102, %p103
      %p105 = scmp.ne.s32.totalorder %s94, %s97
      %p106 = scmp.eq.s32.totalorder %s14, 3
      %p107 = por %p105, %p106
      %p108 = scmp.ne.s32.totalorder %s97, %s98
      %p109 = scmp.eq.s32.totalorder %s14, 0
      %p110 = por %p108, %p109
      %p111 = scmp.ne.s32.totalorder %s97, %s98
      %p112 = scmp.eq.s32.totalorder %s15, 3
      %p113 = por %p111, %p112
      %p115 = scmp.ne.s32.totalorder %s98, %s114
      %p116 = scmp.eq.s32.totalorder %s15, 0
      %p117 = por %p115, %p116
      %s118 = ssub.s32 %s16, %s35
      %s119 = ssub.s32 %s17, %s31
      %s120 = sor.u32 %s118, %s119
      %p121 = scmp.eq.s32.totalorder %s120, 0
      %s123 = sadd.s32 %s122, 1
      %s124 = scalar_select %p121, %s122, %s123
      %p127 = pneg %p121
      %p128 = scmp.eq.s32.totalorder %s9, 3
      %p129 = por %p127, %p128
      %p130 = scmp.ne.s32.totalorder %s122, %s125
      %p131 = scmp.eq.s32.totalorder %s9, 0
      %p132 = por %p130, %p131
      %p133 = scmp.ne.s32.totalorder %s122, %s125
      %p134 = scmp.eq.s32.totalorder %s14, 3
      %p135 = por %p133, %p134
      %p136 = scmp.ne.s32.totalorder %s125, %s126
      %p137 = scmp.eq.s32.totalorder %s14, 0
      %p138 = por %p136, %p137
      %p139 = scmp.ne.s32.totalorder %s125, %s126
      %p140 = scmp.eq.s32.totalorder %s15, 3
      %p141 = por %p139, %p140
      %p143 = scmp.ne.s32.totalorder %s126, %s142
      %p144 = scmp.eq.s32.totalorder %s15, 0
      %p145 = por %p143, %p144
      %p146 = scmp.le.s32.totalorder 1, %s9
      %p147 = scmp.lt.s32.totalorder %s9, 5
      %p148 = pnand %p146, %p147
      %p149 = pneg %p148
      // Predicated region
      $region9: #{attention_forward.5} parent=5 // pred_check
        _
      $region10: #{attention_forward.5} parent=5 // pred_check_branch
        %151 = sbr.rel (%p148) target = $region12
      $region11: #{attention_forward.5} parent=5 // pred_region
        %s152 = ssub.s32 %s9, 1
        // Predicated region
        $region13: #{attention_forward.5} parent=11 // pred_check
          %p153 = pneg %p110
        $region14: #{attention_forward.5} parent=11 // pred_check_branch
          %155 = sbr.rel (%p153) target = $region16
        $region15: #{attention_forward.5} parent=11 // pred_region
          %p156 = scmp.lt.s32.totalorder %s20, 0
          %s157 = scalar_select %p156, %s20, 0
          %s158 = scalar_lea.vmem %s2, %s157
        $region16: #{attention_forward.5} parent=11 // pred_fallthru
          _
      $region12: #{attention_forward.5} parent=5 // pred_fallthru
        _
      %p159 = scmp.lt.s32.totalorder %s9, 4
      // Predicated region
      $region17: #{attention_forward.5} parent=5 // pred_check
        %p160 = pneg %p159
      $region18: #{attention_forward.5} parent=5 // pred_check_branch
        %162 = sbr.rel (%p160) target = $region20
      $region19: #{attention_forward.5} parent=5 // pred_region
        // Predicated region
        $region21: #{attention_forward.5} parent=19 // pred_check
          %p163 = pneg %p50
        $region22: #{attention_forward.5} parent=19 // pred_check_branch
          %165 = sbr.rel (%p163) target = $region24
        $region23: #{attention_forward.5} parent=19 // pred_region
          %s166 = sand.u32 %s40, 1
          %s167 = sand.u32 %s40, 1
          %s168 = smul.addr %s167, 128
          %s169 = scalar_lea.vmem [#allocation3], %s168
          %s170 = smul.u32 16, %s16
          %s171 = smul.u32 2, %s18
          %s172 = smul.addr %s170, 4
          %s173 = sadd.s32 %s171, %s172
          %s174 = smul.addr %s173, 4
          %s175 = scalar_lea.vmem %s0, %s174
          // Predicated region
          $region25: #{attention_forward.5} parent=23 // pred_check
            _
          $region26: #{attention_forward.5} parent=23 // pred_check_branch
            %177 = sbr.rel (0) target = $region28
          $region27: #{attention_forward.5} parent=23 // pred_region
            // Predicated region
            $region29: #{attention_forward.5} parent=27 // pred_check
              _
            $region30: #{attention_forward.5} parent=27 // pred_check_branch
              %179 = sbr.rel (0) target = $region32
            $region31: #{attention_forward.5} parent=27 // pred_region
              // Predicated region
              $region44: #{attention_forward.5} parent=31 // pred_check
                _
              $region45: #{attention_forward.5} parent=31 // pred_check_branch
                %224 = sbr.rel (0) target = $region47
              $region46: #{attention_forward.5} parent=31 // pred_region
                loop: start=0, step=1, limit=1
                $region48: #{attention_forward.5} parent=46 // loop_pre_header
                  _
                $region49: #{attention_forward.5} parent=46 // loop_header
                  %s226 = sphi 0, %s230
                  %p227 = scmp.ge.s32.totalorder %s226, 1
                  %s231 = sphi %s175, %s175
                  %s232 = sphi %s169, %s169
                $region50: #{attention_forward.5} parent=46 // loop_header_branch
                  %229 = sbr.rel (%p227) target = $region54
                $region51: #{attention_forward.5} parent=46 // loop_body
                  %v233 = vld [vmem:[%s231] sm:$0xff]
                  %234 = vst [vmem:[%s232] sm:$0xff] %v233
                  %v235 = vld [vmem:[%s231 + $0x10] sm:$0xff]
                  %236 = vst [vmem:[%s232 + $0x8] sm:$0xff] %v235
                  %v237 = vld [vmem:[%s231 + $0x20] sm:$0xff]
                  %238 = vst [vmem:[%s232 + $0x10] sm:$0xff] %v237
                  %v239 = vld [vmem:[%s231 + $0x30] sm:$0xff]
                  %240 = vst [vmem:[%s232 + $0x18] sm:$0xff] %v239
                  %v241 = vld [vmem:[%s231 + $0x40] sm:$0xff]
                  %242 = vst [vmem:[%s232 + $0x20] sm:$0xff] %v241
                  %v243 = vld [vmem:[%s231 + $0x50] sm:$0xff]
                  %244 = vst [vmem:[%s232 + $0x28] sm:$0xff] %v243
                  %v245 = vld [vmem:[%s231 + $0x60] sm:$0xff]
                  %246 = vst [vmem:[%s232 + $0x30] sm:$0xff] %v245
                  %v247 = vld [vmem:[%s231 + $0x70] sm:$0xff]
                  %248 = vst [vmem:[%s232 + $0x38] sm:$0xff] %v247
                  %v249 = vld [vmem:[%s231 + $0x80] sm:$0xff]
                  %250 = vst [vmem:[%s232 + $0x40] sm:$0xff] %v249
                  %v251 = vld [vmem:[%s231 + $0x90] sm:$0xff]
                  %252 = vst [vmem:[%s232 + $0x48] sm:$0xff] %v251
                  %v253 = vld [vmem:[%s231 + $0xa0] sm:$0xff]
                  %254 = vst [vmem:[%s232 + $0x50] sm:$0xff] %v253
                  %v255 = vld [vmem:[%s231 + $0xb0] sm:$0xff]
                  %256 = vst [vmem:[%s232 + $0x58] sm:$0xff] %v255
                  %v257 = vld [vmem:[%s231 + $0xc0] sm:$0xff]
                  %258 = vst [vmem:[%s232 + $0x60] sm:$0xff] %v257
                  %v259 = vld [vmem:[%s231 + $0xd0] sm:$0xff]
                  %260 = vst [vmem:[%s232 + $0x68] sm:$0xff] %v259
                  %v261 = vld [vmem:[%s231 + $0xe0] sm:$0xff]
                  %262 = vst [vmem:[%s232 + $0x70] sm:$0xff] %v261
                  %v263 = vld [vmem:[%s231 + $0xf0] sm:$0xff]
                  %264 = vst [vmem:[%s232 + $0x78] sm:$0xff] %v263
                $region52: #{attention_forward.5} parent=46 // loop_footer
                  %s230 = sadd.s32 1, %s226
                $region53: #{attention_forward.5} parent=46 // loop_footer_branch
                  %225 = sbr.rel target = $region49
                $region54: #{attention_forward.5} parent=46 // loop_exit
                  _
              $region47: #{attention_forward.5} parent=31 // pred_fallthru
                _
              // Predicated region
              $region55: #{attention_forward.5} parent=31 // pred_check
                _
              $region56: #{attention_forward.5} parent=31 // pred_check_branch
                %266 = sbr.rel target = $region58
              $region57: #{attention_forward.5} parent=31 // pred_region
                _
              $region58: #{attention_forward.5} parent=31 // pred_fallthru
                _
            $region32: #{attention_forward.5} parent=27 // pred_fallthru
              _
            // Predicated region
            $region33: #{attention_forward.5} parent=27 // pred_check
              _
            $region34: #{attention_forward.5} parent=27 // pred_check_branch
              %181 = sbr.rel target = $region36
            $region35: #{attention_forward.5} parent=27 // pred_region
              loop: start=0, step=1, limit=1
              $region37: #{attention_forward.5} parent=35 // loop_pre_header
                _
              $region38: #{attention_forward.5} parent=35 // loop_header
                %s184 = sphi 0, %s188
                %p185 = scmp.ge.s32.totalorder %s184, 1
                %s189 = sphi %s175, %s175
                %s190 = sphi %s169, %s169
              $region39: #{attention_forward.5} parent=35 // loop_header_branch
                %187 = sbr.rel (%p185) target = $region43
              $region40: #{attention_forward.5} parent=35 // loop_body
                %v191 = vld [vmem:[%s189] sm:$0xff]
                %192 = vst [vmem:[%s190] sm:$0xff] %v191
                %v193 = vld [vmem:[%s189 + $0x10] sm:$0xff]
                %194 = vst [vmem:[%s190 + $0x8] sm:$0xff] %v193
                %v195 = vld [vmem:[%s189 + $0x20] sm:$0xff]
                %196 = vst [vmem:[%s190 + $0x10] sm:$0xff] %v195
                %v197 = vld [vmem:[%s189 + $0x30] sm:$0xff]
                %198 = vst [vmem:[%s190 + $0x18] sm:$0xff] %v197
                %v199 = vld [vmem:[%s189 + $0x40] sm:$0xff]
                %200 = vst [vmem:[%s190 + $0x20] sm:$0xff] %v199
                %v201 = vld [vmem:[%s189 + $0x50] sm:$0xff]
                %202 = vst [vmem:[%s190 + $0x28] sm:$0xff] %v201
                %v203 = vld [vmem:[%s189 + $0x60] sm:$0xff]
                %204 = vst [vmem:[%s190 + $0x30] sm:$0xff] %v203
                %v205 = vld [vmem:[%s189 + $0x70] sm:$0xff]
                %206 = vst [vmem:[%s190 + $0x38] sm:$0xff] %v205
                %v207 = vld [vmem:[%s189 + $0x80] sm:$0xff]
                %208 = vst [vmem:[%s190 + $0x40] sm:$0xff] %v207
                %v209 = vld [vmem:[%s189 + $0x90] sm:$0xff]
                %210 = vst [vmem:[%s190 + $0x48] sm:$0xff] %v209
                %v211 = vld [vmem:[%s189 + $0xa0] sm:$0xff]
                %212 = vst [vmem:[%s190 + $0x50] sm:$0xff] %v211
                %v213 = vld [vmem:[%s189 + $0xb0] sm:$0xff]
                %214 = vst [vmem:[%s190 + $0x58] sm:$0xff] %v213
                %v215 = vld [vmem:[%s189 + $0xc0] sm:$0xff]
                %216 = vst [vmem:[%s190 + $0x60] sm:$0xff] %v215
                %v217 = vld [vmem:[%s189 + $0xd0] sm:$0xff]
                %218 = vst [vmem:[%s190 + $0x68] sm:$0xff] %v217
                %v219 = vld [vmem:[%s189 + $0xe0] sm:$0xff]
                %220 = vst [vmem:[%s190 + $0x70] sm:$0xff] %v219
                %v221 = vld [vmem:[%s189 + $0xf0] sm:$0xff]
                %222 = vst [vmem:[%s190 + $0x78] sm:$0xff] %v221
              $region41: #{attention_forward.5} parent=35 // loop_footer
                %s188 = sadd.s32 1, %s184
              $region42: #{attention_forward.5} parent=35 // loop_footer_branch
                %183 = sbr.rel target = $region38
              $region43: #{attention_forward.5} parent=35 // loop_exit
                _
            $region36: #{attention_forward.5} parent=27 // pred_fallthru
              _
          $region28: #{attention_forward.5} parent=23 // pred_fallthru
            _
          %267 = vnop
        $region24: #{attention_forward.5} parent=19 // pred_fallthru
          _
        // Predicated region
        $region59: #{attention_forward.5} parent=19 // pred_check
          %p268 = pneg %p78
        $region60: #{attention_forward.5} parent=19 // pred_check_branch
          %270 = sbr.rel (%p268) target = $region62
        $region61: #{attention_forward.5} parent=19 // pred_region
          %s271 = smul.u32 32, %s18
          %p272 = scmp.lt.s32.totalorder %s271, 63
          %s273 = scalar_select %p272, %s271, 63
          %p274 = scmp.lt.s32.totalorder %s17, 0
          %s275 = scalar_select %p274, %s17, 0
          %s276 = sadd.s32 %s275, %s273
          %s277 = smul.addr %s276, 4
          %s278 = scalar_lea.vmem %s1, %s277
          %s279 = smul.u32 32, %s18
        $region62: #{attention_forward.5} parent=19 // pred_fallthru
          _
      $region20: #{attention_forward.5} parent=5 // pred_fallthru
        _
      %p280 = scmp.le.s32.totalorder 1, %s9
      %p281 = scmp.lt.s32.totalorder %s9, 5
      %p282 = pnand %p280, %p281
      %p283 = pneg %p282
      // Predicated region
      $region63: #{attention_forward.5} parent=5 // pred_check
        _
      $region64: #{attention_forward.5} parent=5 // pred_check_branch
        %285 = sbr.rel (%p282) target = $region66
      $region65: #{attention_forward.5} parent=5 // pred_region
        %s286 = ssub.s32 %s9, 1
        %s287 = sand.u32 %s43, 1
        %s288 = sand.u32 %s43, 1
        %s289 = smul.addr %s288, 128
        %s290 = scalar_lea.vmem [#allocation3], %s289
        // Predicated region
        $region67: #{attention_forward.5} parent=65 // pred_check
          %p291 = pneg %p56
        $region68: #{attention_forward.5} parent=65 // pred_check_branch
          %293 = sbr.rel (%p291) target = $region70
        $region69: #{attention_forward.5} parent=65 // pred_region
          _
        $region70: #{attention_forward.5} parent=65 // pred_fallthru
          _
        %s294 = sand.u32 %s43, 1
        %s295 = sand.u32 %s43, 1
        %s296 = smul.addr %s295, 128
        %s297 = scalar_lea.vmem [#allocation3], %s296
        %p298 = pneg %p56
        %p299 = pneg %p53
        %s300 = smul.u32 32, %s21
        %p301 = scmp.lt.s32.totalorder %s300, 63
        %s302 = scalar_select %p301, %s300, 63
        %p303 = scmp.lt.s32.totalorder %s20, 0
        %s304 = scalar_select %p303, %s20, 0
        %s305 = sadd.s32 %s304, %s302
        %s306 = smul.addr %s305, 4
        %s307 = scalar_lea.vmem %s1, %s306
        %p308 = pneg %p84
        %p309 = pneg %p81
        %p310 = scmp.lt.s32.totalorder %s20, 0
        %s311 = scalar_select %p310, %s20, 0
        %s312 = scalar_lea.vmem %s2, %s311
        %p313 = pneg %p110
        %p314 = pneg %p107
        %p315 = pneg %p138
        %p316 = pneg %p135
        %s317 = smul.u32 16, %s19
        %p318 = scmp.lt.s32.totalorder %s317, 31
        %s319 = scalar_select %p318, %s317, 31
        %p320 = scmp.lt.s32.totalorder %s20, 0
        %s321 = scalar_select %p320, %s20, 0
        %s322 = sadd.s32 %s321, %s319
        %s323 = smul.addr %s322, 8
        %s324 = scalar_lea.vmem %s3, %s323
        %s325 = smul.u32 16, %s19
        %s326 = smul.u32 2, %s21
        %s327 = smul.u32 32, %s21
        %p328 = scmp.lt.s32.totalorder %s327, 63
        %s329 = scalar_select %p328, %s327, 63
        %p330 = scmp.lt.s32.totalorder %s20, 0
        %s331 = scalar_select %p330, %s20, 0
        %s332 = sadd.s32 %s331, %s329
        %s333 = smul.addr %s332, 4
        %s334 = scalar_lea.vmem %s1, %s333
        %s335 = smul.u32 32, %s21
        %p336 = scmp.lt.s32.totalorder %s20, 0
        %s337 = scalar_select %p336, %s20, 0
        %s338 = scalar_lea.vmem %s2, %s337
        %s339 = smul.u32 16, %s19
        %p340 = scmp.lt.s32.totalorder %s339, 31
        %s341 = scalar_select %p340, %s339, 31
        %p342 = scmp.lt.s32.totalorder %s20, 0
        %s343 = scalar_select %p342, %s20, 0
        %s344 = sadd.s32 %s343, %s341
        %s345 = smul.addr %s344, 8
        %s346 = scalar_lea.vmem %s3, %s345
        %s347 = smul.u32 16, %s19
        %p349 = scmp.eq.s32.totalorder %s21, 0
        // Predicated region
        $region71: #{attention_forward.5} parent=65 // pred_check
          %p350 = pneg %p349
        $region72: #{attention_forward.5} parent=65 // pred_check_branch
          %352 = sbr.rel (%p350) target = $region74
        $region73: #{attention_forward.5} parent=65 // pred_region
          %vm353 = vcmask 523264
          %354 = vst.msk [vmem:[#allocation2] sm:$0xff] %vm353, 0.0
          %355 = vst.msk [vmem:[#allocation2 + $0x8] sm:$0xff] %vm353, 0.0
          %356 = vst.msk [vmem:[#allocation2 + $0x10] sm:$0xff] %vm353, 0.0
          %357 = vst.msk [vmem:[#allocation2 + $0x18] sm:$0xff] %vm353, 0.0
          %358 = vst.msk [vmem:[#allocation2 + $0x20] sm:$0xff] %vm353, 0.0
          %359 = vst.msk [vmem:[#allocation2 + $0x28] sm:$0xff] %vm353, 0.0
          %360 = vst.msk [vmem:[#allocation2 + $0x30] sm:$0xff] %vm353, 0.0
          %361 = vst.msk [vmem:[#allocation2 + $0x38] sm:$0xff] %vm353, 0.0
          %362 = vst.msk [vmem:[#allocation2 + $0x40] sm:$0xff] %vm353, 0.0
          %363 = vst.msk [vmem:[#allocation2 + $0x48] sm:$0xff] %vm353, 0.0
          %364 = vst.msk [vmem:[#allocation2 + $0x50] sm:$0xff] %vm353, 0.0
          %365 = vst.msk [vmem:[#allocation2 + $0x58] sm:$0xff] %vm353, 0.0
          %366 = vst.msk [vmem:[#allocation2 + $0x60] sm:$0xff] %vm353, 0.0
          %367 = vst.msk [vmem:[#allocation2 + $0x68] sm:$0xff] %vm353, 0.0
          %368 = vst.msk [vmem:[#allocation2 + $0x70] sm:$0xff] %vm353, 0.0
          %369 = vst.msk [vmem:[#allocation2 + $0x78] sm:$0xff] %vm353, 0.0
        $region74: #{attention_forward.5} parent=65 // pred_fallthru
          _
        %v370 = vld [vmem:[#allocation2] sm:$0xff]
        %v371 = vld [vmem:[#allocation2 + $0x8] sm:$0xff]
        %v372 = vld [vmem:[#allocation2 + $0x10] sm:$0xff]
        %v373 = vld [vmem:[#allocation2 + $0x18] sm:$0xff]
        %v374 = vld [vmem:[#allocation2 + $0x20] sm:$0xff]
        %v375 = vld [vmem:[#allocation2 + $0x28] sm:$0xff]
        %v376 = vld [vmem:[#allocation2 + $0x30] sm:$0xff]
        %v377 = vld [vmem:[#allocation2 + $0x38] sm:$0xff]
        %v378 = vld [vmem:[#allocation2 + $0x40] sm:$0xff]
        %v379 = vld [vmem:[#allocation2 + $0x48] sm:$0xff]
        %v380 = vld [vmem:[#allocation2 + $0x50] sm:$0xff]
        %v381 = vld [vmem:[#allocation2 + $0x58] sm:$0xff]
        %v382 = vld [vmem:[#allocation2 + $0x60] sm:$0xff]
        %v383 = vld [vmem:[#allocation2 + $0x68] sm:$0xff]
        %v384 = vld [vmem:[#allocation2 + $0x70] sm:$0xff]
        %v385 = vld [vmem:[#allocation2 + $0x78] sm:$0xff]
        %v386 = vld [vmem:[%s290] sm:$0xff]
        %v387 = vld [vmem:[%s290 + $0x8] sm:$0xff]
        %v388 = vld [vmem:[%s290 + $0x10] sm:$0xff]
        %v389 = vld [vmem:[%s290 + $0x18] sm:$0xff]
        %v390 = vld [vmem:[%s290 + $0x20] sm:$0xff]
        %v391 = vld [vmem:[%s290 + $0x28] sm:$0xff]
        %v392 = vld [vmem:[%s290 + $0x30] sm:$0xff]
        %v393 = vld [vmem:[%s290 + $0x38] sm:$0xff]
        %v394 = vld [vmem:[%s290 + $0x40] sm:$0xff]
        %v395 = vld [vmem:[%s290 + $0x48] sm:$0xff]
        %v396 = vld [vmem:[%s290 + $0x50] sm:$0xff]
        %v397 = vld [vmem:[%s290 + $0x58] sm:$0xff]
        %v398 = vld [vmem:[%s290 + $0x60] sm:$0xff]
        %v399 = vld [vmem:[%s290 + $0x68] sm:$0xff]
        %v400 = vld [vmem:[%s290 + $0x70] sm:$0xff]
        %v401 = vld [vmem:[%s290 + $0x78] sm:$0xff]
        %v402 = vld [vmem:[%s334] sm:$0xf]
        %v403 = vld [vmem:[%s334 + $0x4] sm:$0xf]
        %v404 = vld [vmem:[%s334 + $0x8] sm:$0xf]
        %v405 = vld [vmem:[%s334 + $0xc] sm:$0xf]
        %v406 = vld [vmem:[%s334 + $0x10] sm:$0xf]
        %v407 = vld [vmem:[%s334 + $0x14] sm:$0xf]
        %v408 = vld [vmem:[%s334 + $0x18] sm:$0xf]
        %v409 = vld [vmem:[%s334 + $0x1c] sm:$0xf]
        %v410 = vld [vmem:[%s334 + $0x20] sm:$0xf]
        %v411 = vld [vmem:[%s334 + $0x24] sm:$0xf]
        %v412 = vld [vmem:[%s334 + $0x28] sm:$0xf]
        %v413 = vld [vmem:[%s334 + $0x2c] sm:$0xf]
        %v414 = vld [vmem:[%s334 + $0x30] sm:$0xf]
        %v415 = vld [vmem:[%s334 + $0x34] sm:$0xf]
        %v416 = vld [vmem:[%s334 + $0x38] sm:$0xf]
        %v417 = vld [vmem:[%s334 + $0x3c] sm:$0xf]
        %v418 = vld [vmem:[%s334 + $0x40] sm:$0xf]
        %v419 = vld [vmem:[%s334 + $0x44] sm:$0xf]
        %v420 = vld [vmem:[%s334 + $0x48] sm:$0xf]
        %v421 = vld [vmem:[%s334 + $0x4c] sm:$0xf]
        %v422 = vld [vmem:[%s334 + $0x50] sm:$0xf]
        %v423 = vld [vmem:[%s334 + $0x54] sm:$0xf]
        %v424 = vld [vmem:[%s334 + $0x58] sm:$0xf]
        %v425 = vld [vmem:[%s334 + $0x5c] sm:$0xf]
        %v426 = vld [vmem:[%s334 + $0x60] sm:$0xf]
        %v427 = vld [vmem:[%s334 + $0x64] sm:$0xf]
        %v428 = vld [vmem:[%s334 + $0x68] sm:$0xf]
        %v429 = vld [vmem:[%s334 + $0x6c] sm:$0xf]
        %v430 = vld [vmem:[%s334 + $0x70] sm:$0xf]
        %v431 = vld [vmem:[%s334 + $0x74] sm:$0xf]
        %v432 = vld [vmem:[%s334 + $0x78] sm:$0xf]
        %v433 = vld [vmem:[%s334 + $0x7c] sm:$0xf]
        %v450 = vunpack.c.l.b16 %v386
        %v451 = vunpack.c.h.b16 %v386
        %v452 = vunpack.c.l.b16 %v387
        %v453 = vunpack.c.h.b16 %v387
        %v454 = vunpack.c.l.b16 %v388
        %v455 = vunpack.c.h.b16 %v388
        %v456 = vunpack.c.l.b16 %v389
        %v457 = vunpack.c.h.b16 %v389
        %v458 = vunpack.c.l.b16 %v390
        %v459 = vunpack.c.h.b16 %v390
        %v460 = vunpack.c.l.b16 %v391
        %v461 = vunpack.c.h.b16 %v391
        %v462 = vunpack.c.l.b16 %v392
        %v463 = vunpack.c.h.b16 %v392
        %v464 = vunpack.c.l.b16 %v393
        %v465 = vunpack.c.h.b16 %v393
        %v466 = vunpack.c.l.b16 %v394
        %v467 = vunpack.c.h.b16 %v394
        %v468 = vunpack.c.l.b16 %v395
        %v469 = vunpack.c.h.b16 %v395
        %v470 = vunpack.c.l.b16 %v396
        %v471 = vunpack.c.h.b16 %v396
        %v472 = vunpack.c.l.b16 %v397
        %v473 = vunpack.c.h.b16 %v397
        %v474 = vunpack.c.l.b16 %v398
        %v475 = vunpack.c.h.b16 %v398
        %v476 = vunpack.c.l.b16 %v399
        %v477 = vunpack.c.h.b16 %v399
        %v478 = vunpack.c.l.b16 %v400
        %v479 = vunpack.c.h.b16 %v400
        %v480 = vunpack.c.l.b16 %v401
        %v481 = vunpack.c.h.b16 %v401
        %v482 = vpack.c.b16 %v452, %v450
        %v483 = vpack.c.b16 %v453, %v451
        %v484 = vpack.c.b16 %v456, %v454
        %v485 = vpack.c.b16 %v457, %v455
        %v486 = vpack.c.b16 %v460, %v458
        %v487 = vpack.c.b16 %v461, %v459
        %v488 = vpack.c.b16 %v464, %v462
        %v489 = vpack.c.b16 %v465, %v463
        %v490 = vpack.c.b16 %v468, %v466
        %v491 = vpack.c.b16 %v469, %v467
        %v492 = vpack.c.b16 %v472, %v470
        %v493 = vpack.c.b16 %v473, %v471
        %v494 = vpack.c.b16 %v476, %v474
        %v495 = vpack.c.b16 %v477, %v475
        %v496 = vpack.c.b16 %v480, %v478
        %v497 = vpack.c.b16 %v481, %v479
        %v546 = vunpack.c.l.b16 %v402
        %v547 = vunpack.c.l.b16 %v403
        %v548 = vunpack.c.l.b16 %v404
        %v549 = vunpack.c.l.b16 %v405
        %v550 = vunpack.c.l.b16 %v406
        %v551 = vunpack.c.l.b16 %v407
        %v552 = vunpack.c.l.b16 %v408
        %v553 = vunpack.c.l.b16 %v409
        %v554 = vunpack.c.l.b16 %v410
        %v555 = vunpack.c.l.b16 %v411
        %v556 = vunpack.c.l.b16 %v412
        %v557 = vunpack.c.l.b16 %v413
        %v558 = vunpack.c.l.b16 %v414
        %v559 = vunpack.c.l.b16 %v415
        %v560 = vunpack.c.l.b16 %v416
        %v561 = vunpack.c.l.b16 %v417
        %v562 = vunpack.c.l.b16 %v418
        %v563 = vunpack.c.l.b16 %v419
        %v564 = vunpack.c.l.b16 %v420
        %v565 = vunpack.c.l.b16 %v421
        %v566 = vunpack.c.l.b16 %v422
        %v567 = vunpack.c.l.b16 %v423
        %v568 = vunpack.c.l.b16 %v424
        %v569 = vunpack.c.l.b16 %v425
        %v570 = vunpack.c.l.b16 %v426
        %v571 = vunpack.c.l.b16 %v427
        %v572 = vunpack.c.l.b16 %v428
        %v573 = vunpack.c.l.b16 %v429
        %v574 = vunpack.c.l.b16 %v430
        %v575 = vunpack.c.l.b16 %v431
        %v576 = vunpack.c.l.b16 %v432
        %v577 = vunpack.c.l.b16 %v433
        %v578 = vpack.c.b16 %v547, %v546
        %v579 = vpack.c.b16 %v549, %v548
        %v580 = vpack.c.b16 %v551, %v550
        %v581 = vpack.c.b16 %v553, %v552
        %v582 = vpack.c.b16 %v555, %v554
        %v583 = vpack.c.b16 %v557, %v556
        %v584 = vpack.c.b16 %v559, %v558
        %v585 = vpack.c.b16 %v561, %v560
        %v586 = vpack.c.b16 %v563, %v562
        %v587 = vpack.c.b16 %v565, %v564
        %v588 = vpack.c.b16 %v567, %v566
        %v589 = vpack.c.b16 %v569, %v568
        %v590 = vpack.c.b16 %v571, %v570
        %v591 = vpack.c.b16 %v573, %v572
        %v592 = vpack.c.b16 %v575, %v574
        %v593 = vpack.c.b16 %v577, %v576
        %610 = vmatprep.subr.bf16.mxu0 0
        %611 = vmatpush1.bf16.msra.mxu0 %v578
        %612 = vmatprep.subr.bf16.mxu0 0
        %613 = vmatpush1.bf16.msra.mxu0 %v579
        %614 = vmatprep.subr.bf16.mxu0 0
        %615 = vmatpush1.bf16.msra.mxu0 %v580
        %616 = vmatprep.subr.bf16.mxu0 0
        %617 = vmatpush1.bf16.msra.mxu0 %v581
        %618 = vmatprep.subr.bf16.mxu0 0
        %619 = vmatpush1.bf16.msra.mxu0 %v582
        %620 = vmatprep.subr.bf16.mxu0 0
        %621 = vmatpush1.bf16.msra.mxu0 %v583
        %622 = vmatprep.subr.bf16.mxu0 0
        %623 = vmatpush1.bf16.msra.mxu0 %v584
        %624 = vmatprep.subr.bf16.mxu0 0
        %625 = vmatpush1.bf16.msra.mxu0 %v585
        %626 = vmatprep.subr.bf16.mxu0 0
        %627 = vmatpush1.bf16.msra.mxu0 %v586
        %628 = vmatprep.subr.bf16.mxu0 0
        %629 = vmatpush1.bf16.msra.mxu0 %v587
        %630 = vmatprep.subr.bf16.mxu0 0
        %631 = vmatpush1.bf16.msra.mxu0 %v588
        %632 = vmatprep.subr.bf16.mxu0 0
        %633 = vmatpush1.bf16.msra.mxu0 %v589
        %634 = vmatprep.subr.bf16.mxu0 0
        %635 = vmatpush1.bf16.msra.mxu0 %v590
        %636 = vmatprep.subr.bf16.mxu0 0
        %637 = vmatpush1.bf16.msra.mxu0 %v591
        %638 = vmatprep.subr.bf16.mxu0 0
        %639 = vmatpush1.bf16.msra.mxu0 %v592
        %640 = vmatprep.subr.bf16.mxu0 0
        %641 = vmatpush1.bf16.msra.mxu0 %v593
        %642 = vmatprep.mubr.bf16.mxu0 %v483
        %643 = vmatmul.mubr.bf16.gmra.mrb[0].mxu0 %v482
        %v644 = vpop.f32.mrb[0].mxu0
        %v645 = vadd.f32 0.0, %v644
        %v646 = vpop.f32.mrb[0].mxu0
        %v647 = vpop.f32.mrb[0].mxu0
        %v648 = vadd.f32 0.0, %v647
        %v649 = vpop.f32.mrb[0].mxu0
        %650 = vmatprep.mubr.bf16.mxu0 %v485
        %651 = vmatmul.mubr.bf16.gmra.mrb[0].mxu0 %v484
        %v652 = vpop.f32.mrb[0].mxu0
        %v653 = vadd.f32 0.0, %v652
        %v654 = vpop.f32.mrb[0].mxu0
        %v655 = vpop.f32.mrb[0].mxu0
        %v656 = vadd.f32 0.0, %v655
        %v657 = vpop.f32.mrb[0].mxu0
        %658 = vmatprep.mubr.bf16.mxu0 %v487
        %659 = vmatmul.mubr.bf16.gmra.mrb[0].mxu0 %v486
        %v660 = vpop.f32.mrb[0].mxu0
        %v661 = vadd.f32 0.0, %v660
        %v662 = vpop.f32.mrb[0].mxu0
        %v663 = vpop.f32.mrb[0].mxu0
        %v664 = vadd.f32 0.0, %v663
        %v665 = vpop.f32.mrb[0].mxu0
        %666 = vmatprep.mubr.bf16.mxu0 %v489
        %667 = vmatmul.mubr.bf16.gmra.mrb[0].mxu0 %v488
        %v668 = vpop.f32.mrb[0].mxu0
        %v669 = vadd.f32 0.0, %v668
        %v670 = vpop.f32.mrb[0].mxu0
        %v671 = vpop.f32.mrb[0].mxu0
        %v672 = vadd.f32 0.0, %v671
        %v673 = vpop.f32.mrb[0].mxu0
        %674 = vmatprep.mubr.bf16.mxu0 %v491
        %675 = vmatmul.mubr.bf16.gmra.mrb[0].mxu0 %v490
        %v676 = vpop.f32.mrb[0].mxu0
        %v677 = vadd.f32 0.0, %v676
        %v678 = vpop.f32.mrb[0].mxu0
        %v679 = vpop.f32.mrb[0].mxu0
        %v680 = vadd.f32 0.0, %v679
        %v681 = vpop.f32.mrb[0].mxu0
        %682 = vmatprep.mubr.bf16.mxu0 %v493
        %683 = vmatmul.mubr.bf16.gmra.mrb[0].mxu0 %v492
        %v684 = vpop.f32.mrb[0].mxu0
        %v685 = vadd.f32 0.0, %v684
        %v686 = vpop.f32.mrb[0].mxu0
        %v687 = vpop.f32.mrb[0].mxu0
        %v688 = vadd.f32 0.0, %v687
        %v689 = vpop.f32.mrb[0].mxu0
        %690 = vmatprep.mubr.bf16.mxu0 %v495
        %691 = vmatmul.mubr.bf16.gmra.mrb[0].mxu0 %v494
        %v692 = vpop.f32.mrb[0].mxu0
        %v693 = vadd.f32 0.0, %v692
        %v694 = vpop.f32.mrb[0].mxu0
        %v695 = vpop.f32.mrb[0].mxu0
        %v696 = vadd.f32 0.0, %v695
        %v697 = vpop.f32.mrb[0].mxu0
        %698 = vmatprep.mubr.bf16.mxu0 %v497
        %699 = vmatmul.mubr.bf16.gmra.mrb[0].mxu0 %v496
        %v700 = vpop.f32.mrb[0].mxu0
        %v701 = vadd.f32 0.0, %v700
        %v702 = vpop.f32.mrb[0].mxu0
        %v703 = vpop.f32.mrb[0].mxu0
        %v704 = vadd.f32 0.0, %v703
        %v705 = vpop.f32.mrb[0].mxu0
        %706 = vdwg.mxu0
        %v707 = vadd.f32 %v370, %v645
        %v708 = vadd.f32 %v371, %v648
        %v709 = vadd.f32 %v372, %v653
        %v710 = vadd.f32 %v373, %v656
        %v711 = vadd.f32 %v374, %v661
        %v712 = vadd.f32 %v375, %v664
        %v713 = vadd.f32 %v376, %v669
        %v714 = vadd.f32 %v377, %v672
        %v715 = vadd.f32 %v378, %v677
        %v716 = vadd.f32 %v379, %v680
        %v717 = vadd.f32 %v380, %v685
        %v718 = vadd.f32 %v381, %v688
        %v719 = vadd.f32 %v382, %v693
        %v720 = vadd.f32 %v383, %v696
        %v721 = vadd.f32 %v384, %v701
        %v722 = vadd.f32 %v385, %v704
        %vm723 = vcmask 523264
        %724 = vst.msk [vmem:[#allocation2] sm:$0xff] %vm723, %v707
        %725 = vst.msk [vmem:[#allocation2 + $0x8] sm:$0xff] %vm723, %v708
        %726 = vst.msk [vmem:[#allocation2 + $0x10] sm:$0xff] %vm723, %v709
        %727 = vst.msk [vmem:[#allocation2 + $0x18] sm:$0xff] %vm723, %v710
        %728 = vst.msk [vmem:[#allocation2 + $0x20] sm:$0xff] %vm723, %v711
        %729 = vst.msk [vmem:[#allocation2 + $0x28] sm:$0xff] %vm723, %v712
        %730 = vst.msk [vmem:[#allocation2 + $0x30] sm:$0xff] %vm723, %v713
        %731 = vst.msk [vmem:[#allocation2 + $0x38] sm:$0xff] %vm723, %v714
        %732 = vst.msk [vmem:[#allocation2 + $0x40] sm:$0xff] %vm723, %v715
        %733 = vst.msk [vmem:[#allocation2 + $0x48] sm:$0xff] %vm723, %v716
        %734 = vst.msk [vmem:[#allocation2 + $0x50] sm:$0xff] %vm723, %v717
        %735 = vst.msk [vmem:[#allocation2 + $0x58] sm:$0xff] %vm723, %v718
        %736 = vst.msk [vmem:[#allocation2 + $0x60] sm:$0xff] %vm723, %v719
        %737 = vst.msk [vmem:[#allocation2 + $0x68] sm:$0xff] %vm723, %v720
        %738 = vst.msk [vmem:[#allocation2 + $0x70] sm:$0xff] %vm723, %v721
        %739 = vst.msk [vmem:[#allocation2 + $0x78] sm:$0xff] %vm723, %v722
        %p740 = scmp.eq.s32.totalorder %s21, 1
        // Predicated region
        $region75: #{attention_forward.5} parent=65 // pred_check
          %p741 = pneg %p740
        $region76: #{attention_forward.5} parent=65 // pred_check_branch
          %743 = sbr.rel (%p741) target = $region78
        $region77: #{attention_forward.5} parent=65 // pred_region
          %v744 = vld [vmem:[#allocation2] sm:$0xff]
          %v745 = vld [vmem:[#allocation2 + $0x8] sm:$0xff]
          %v746 = vld [vmem:[#allocation2 + $0x10] sm:$0xff]
          %v747 = vld [vmem:[#allocation2 + $0x18] sm:$0xff]
          %v748 = vld [vmem:[#allocation2 + $0x20] sm:$0xff]
          %v749 = vld [vmem:[#allocation2 + $0x28] sm:$0xff]
          %v750 = vld [vmem:[#allocation2 + $0x30] sm:$0xff]
          %v751 = vld [vmem:[#allocation2 + $0x38] sm:$0xff]
          %v752 = vld [vmem:[#allocation2 + $0x40] sm:$0xff]
          %v753 = vld [vmem:[#allocation2 + $0x48] sm:$0xff]
          %v754 = vld [vmem:[#allocation2 + $0x50] sm:$0xff]
          %v755 = vld [vmem:[#allocation2 + $0x58] sm:$0xff]
          %v756 = vld [vmem:[#allocation2 + $0x60] sm:$0xff]
          %v757 = vld [vmem:[#allocation2 + $0x68] sm:$0xff]
          %v758 = vld [vmem:[#allocation2 + $0x70] sm:$0xff]
          %v759 = vld [vmem:[#allocation2 + $0x78] sm:$0xff]
          %v760 = vld [vmem:[%s338] sm:$0x1]
          %v762 = vlaneseq
          %v763 = vshrl.u32 %v762, 7
          %v764 = vsub.s32 0, %v763
          %v765 = vrot.slane %v760, %v764
          %v767 = vadd.f32 %v744, %v765
          %v768 = vadd.f32 %v745, %v765
          %v769 = vadd.f32 %v746, %v765
          %v770 = vadd.f32 %v747, %v765
          %v771 = vadd.f32 %v748, %v765
          %v772 = vadd.f32 %v749, %v765
          %v773 = vadd.f32 %v750, %v765
          %v774 = vadd.f32 %v751, %v765
          %v775 = vadd.f32 %v752, %v765
          %v776 = vadd.f32 %v753, %v765
          %v777 = vadd.f32 %v754, %v765
          %v778 = vadd.f32 %v755, %v765
          %v779 = vadd.f32 %v756, %v765
          %v780 = vadd.f32 %v757, %v765
          %v781 = vadd.f32 %v758, %v765
          %v782 = vadd.f32 %v759, %v765
          %783 = vst.msk [vmem:[%s346] sm:$0xff] %vm723, %v767
          %784 = vst.msk [vmem:[%s346 + $0x8] sm:$0xff] %vm723, %v768
          %785 = vst.msk [vmem:[%s346 + $0x10] sm:$0xff] %vm723, %v769
          %786 = vst.msk [vmem:[%s346 + $0x18] sm:$0xff] %vm723, %v770
          %787 = vst.msk [vmem:[%s346 + $0x20] sm:$0xff] %vm723, %v771
          %788 = vst.msk [vmem:[%s346 + $0x28] sm:$0xff] %vm723, %v772
          %789 = vst.msk [vmem:[%s346 + $0x30] sm:$0xff] %vm723, %v773
          %790 = vst.msk [vmem:[%s346 + $0x38] sm:$0xff] %vm723, %v774
          %791 = vst.msk [vmem:[%s346 + $0x40] sm:$0xff] %vm723, %v775
          %792 = vst.msk [vmem:[%s346 + $0x48] sm:$0xff] %vm723, %v776
          %793 = vst.msk [vmem:[%s346 + $0x50] sm:$0xff] %vm723, %v777
          %794 = vst.msk [vmem:[%s346 + $0x58] sm:$0xff] %vm723, %v778
          %795 = vst.msk [vmem:[%s346 + $0x60] sm:$0xff] %vm723, %v779
          %796 = vst.msk [vmem:[%s346 + $0x68] sm:$0xff] %vm723, %v780
          %797 = vst.msk [vmem:[%s346 + $0x70] sm:$0xff] %vm723, %v781
          %798 = vst.msk [vmem:[%s346 + $0x78] sm:$0xff] %vm723, %v782
        $region78: #{attention_forward.5} parent=65 // pred_fallthru
          _
        %s799 = smul.u32 16, %s19
        %p800 = scmp.lt.s32.totalorder %s799, 31
        %s801 = scalar_select %p800, %s799, 31
        %p802 = scmp.lt.s32.totalorder %s20, 0
        %s803 = scalar_select %p802, %s20, 0
        %s804 = sadd.s32 %s803, %s801
        %s805 = smul.addr %s804, 8
        %s806 = scalar_lea.vmem %s3, %s805
        // Predicated region
        $region79: #{attention_forward.5} parent=65 // pred_check
          %p807 = pneg %p135
        $region80: #{attention_forward.5} parent=65 // pred_check_branch
          %809 = sbr.rel (%p807) target = $region82
        $region81: #{attention_forward.5} parent=65 // pred_region
          %s810 = smul.u32 16, %s19
        $region82: #{attention_forward.5} parent=65 // pred_fallthru
          _
      $region66: #{attention_forward.5} parent=5 // pred_fallthru
        _
      %p811 = scmp.le.s32.totalorder 2, %s9
      // Predicated region
      $region83: #{attention_forward.5} parent=5 // pred_check
        %p812 = pneg %p811
      $region84: #{attention_forward.5} parent=5 // pred_check_branch
        %814 = sbr.rel (%p812) target = $region86
      $region85: #{attention_forward.5} parent=5 // pred_region
        %s815 = ssub.s32 %s9, 2
        // Predicated region
        $region87: #{attention_forward.5} parent=85 // pred_check
          %p816 = pneg %p141
        $region88: #{attention_forward.5} parent=85 // pred_check_branch
          %818 = sbr.rel (%p816) target = $region90
        $region89: #{attention_forward.5} parent=85 // pred_region
          %s819 = smul.u32 16, %s22
          %p820 = scmp.lt.s32.totalorder %s819, 31
          %s821 = scalar_select %p820, %s819, 31
          %p822 = scmp.lt.s32.totalorder %s23, 0
          %s823 = scalar_select %p822, %s23, 0
          %s824 = sadd.s32 %s823, %s821
          %s825 = smul.addr %s824, 8
          %s826 = scalar_lea.vmem %s3, %s825
        $region90: #{attention_forward.5} parent=85 // pred_fallthru
          _
      $region86: #{attention_forward.5} parent=5 // pred_fallthru
        _
    $region6: #{attention_forward.5} parent=1 // loop_footer
      %s13 = sadd.s32 1, %s9
    $region7: #{attention_forward.5} parent=1 // loop_footer_branch
      %8 = sbr.rel target = $region3
    $region8: #{attention_forward.5} parent=1 // loop_exit
      _

</llo_original>
